<compile_context>
chip_gen: v6e
topology: v6e:2x2x1
jax: 0.10.0
libtpu: 0.0.40
codegen_flags: <defaults>
</compile_context>

<pallas_src>
import functools
import math

import numpy as np

import jax
import jax.numpy as jnp
from jax.experimental import pallas as pl
from jax.experimental.pallas import tpu as pltpu


def _pe_kernel(x_ref, freq_ref, phase_ref, o_ref, *, reps):
    # x_ref: (TB, D) samples; freq_ref/phase_ref: (1, 2F*D) constant rows;
    # o_ref: (TB, 2F*D) = sin(x * freq + phase), p-major / f / d-inner.
    x = x_ref[...].astype(jnp.float32)            # in-register cast (no-op for f32)
    xd = jnp.concatenate([x] * reps, axis=-1)     # single lane-dense replication pass
    # One dense VPU multiply + one dense add against constant row vectors,
    # one transcendental pass, one full-width dense store.
    o_ref[...] = jnp.sin(xd * freq_ref[...] + phase_ref[...])


def _round8_up(n: int) -> int:
    return ((n + 7) // 8) * 8


def _pick_tile(batch: int, out_width: int) -> int:
    """Batch tile: bandwidth-sized output block, but always >= 4 grid steps so
    the pipeline double-buffers and v7x's two TensorCores both get work."""
    if batch <= 8:
        return batch                      # single block == full dim (always legal)
    try:
        vmem_cap = pltpu.get_tpu_info().vmem_capacity_bytes
    except Exception:
        vmem_cap = 64 << 20               # assume the most restrictive (v7x)
    # ~4 MiB f32 output block on 128-MiB-VMEM chips (v5e/v6e), ~2 MiB on v7x.
    out_target = (4 << 20) if vmem_cap >= (96 << 20) else (2 << 20)
    rows_bw = max(8, (out_target // (4 * out_width)) // 8 * 8)
    # Cap so the grid has >= 4 steps (>= 2 per TensorCore on v7x).
    rows_split = max(8, _round8_up(pl.cdiv(batch, 4)))
    return min(rows_bw, rows_split)


def positional_encoding(samples: jax.Array, num_octaves: int, *,
                        block_rows: int | None = None) -> jax.Array:
    """Pallas implementation of PositionalEncoding.forward -> (B, D*2*num_octaves)."""
    B, D = samples.shape
    two_pi = 2.0 * math.pi

    # torch.arange(2*pi, 2*num_octaves*pi, num_octaves)
    n_f = int(math.ceil((2.0 * num_octaves * math.pi - two_pi) / num_octaves))
    assert n_f == num_octaves, (
        "reference module's broadcast only works when the arange length equals "
        "num_octaves (e.g. num_octaves=6)")
    # f32 arithmetic so the constants match the reference's f32 construction.
    base = np.float32(two_pi) + np.float32(num_octaves) * np.arange(n_f, dtype=np.float32)

    W = 2 * n_f * D  # flattened output width (p-major, then frequency, D inner)
    # column c = p*F*D + f*D + d  ->  sin(x[:, d] * base[f] + (0 if p == 0 else pi/2))
    freq_row = np.repeat(np.concatenate([base, base]), D).reshape(1, W).astype(np.float32)
    phase_row = np.repeat(
        np.concatenate([np.zeros((n_f,), np.float32),
                        np.full((n_f,), np.float32(math.pi / 2.0), np.float32)]),
        D).reshape(1, W).astype(np.float32)

    tb = int(block_rows) if block_rows is not None else _pick_tile(B, W)
    grid = (pl.cdiv(B, tb),)

    # VMEM budget: lane-padded, double-buffered blocks.  The (tb, D) input block
    # is stored as tb x 128 lanes; the (tb, W) output pads W up to a multiple of
    # 128 lanes.  The two constant rows are negligible but counted anyway.
    in_lanes = ((max(D, 1) + 127) // 128) * 128
    out_lanes = ((W + 127) // 128) * 128
    needed = 2 * tb * 4 * (in_lanes + out_lanes) + 2 * 2 * 4 * out_lanes
    vmem_limit = int(min(max(needed + (4 << 20), 16 << 20), 48 << 20))

    kernel = functools.partial(_pe_kernel, reps=2 * n_f)
    return pl.pallas_call(
        kernel,
        out_shape=jax.ShapeDtypeStruct((B, W), jnp.float32),
        grid=grid,
        in_specs=[
            pl.BlockSpec((tb, D), lambda i: (i, 0)),   # samples (kept in input dtype)
            pl.BlockSpec((1, W), lambda i: (0, 0)),    # frequency row (constant block)
            pl.BlockSpec((1, W), lambda i: (0, 0)),    # phase row (constant block)
        ],
        out_specs=pl.BlockSpec((tb, W), lambda i: (i, 0)),
        compiler_params=pltpu.CompilerParams(
            dimension_semantics=("parallel",),          # megacore sharding on v7x
            vmem_limit_bytes=vmem_limit,
        ),
    )(samples, jnp.asarray(freq_row), jnp.asarray(phase_row))


def positional_encoding_ref(samples: jax.Array, num_octaves: int) -> jax.Array:
    """Pure-JAX reference mirroring the PyTorch code, for verification."""
    B, D = samples.shape
    two_pi = 2.0 * math.pi
    n_f = int(math.ceil((2.0 * num_octaves * math.pi - two_pi) / num_octaves))
    freqs = jnp.float32(two_pi) + jnp.float32(num_octaves) * jnp.arange(n_f, dtype=jnp.float32)
    frequencies = jnp.tile(freqs, (2, 1))                                   # (2, F)
    phases = jnp.stack([jnp.zeros((num_octaves,), jnp.float32),
                        jnp.full((num_octaves,), math.pi / 2.0, jnp.float32)])
    pe = jnp.sin(jnp.einsum("bi,pf->bpfi", samples.astype(jnp.float32), frequencies)
                 + phases[..., None])
    return pe.reshape(B, -1)


if __name__ == "__main__":
    num_octaves = 6   # only value for which the reference broadcast is valid
    B, D = 512, 16

    key0, key1 = jax.random.split(jax.random.PRNGKey(0))
    x = jax.random.uniform(key0, (B, D), dtype=jnp.float32)
    ref = positional_encoding_ref(x, num_octaves)

    # Default (auto tile-size) path: grid of 4 tiles of 128 rows.
    out_auto = jax.block_until_ready(positional_encoding(x, num_octaves))
    assert out_auto.shape == (B, D * 2 * num_octaves), out_auto.shape
    assert jnp.allclose(out_auto, ref, atol=1e-5, rtol=1e-5)

    # Explicit tile-size path.
    out_tiled = jax.block_until_ready(
        positional_encoding(x, num_octaves, block_rows=128))
    assert jnp.allclose(out_tiled, ref, atol=1e-5, rtol=1e-5)

    # Ragged batch (B not a multiple of the tile) exercises the masked last block.
    x2 = jax.random.uniform(key1, (200, D), dtype=jnp.float32)
    out2 = jax.block_until_ready(positional_encoding(x2, num_octaves))
    assert jnp.allclose(out2, positional_encoding_ref(x2, num_octaves),
                        atol=1e-5, rtol=1e-5)

    print("KERNEL_OK")
</pallas_src>

<mosaic_0001>
module attributes {stable_mosaic.version = 11 : i64} {
  func.func @_pe_kernel(%arg0: i32, %arg1: memref<128x16xf32, #tpu.memory_space<vmem>>, %arg2: memref<1x192xf32, #tpu.memory_space<vmem>>, %arg3: memref<1x192xf32, #tpu.memory_space<vmem>>, %arg4: memref<128x192xf32, #tpu.memory_space<vmem>>) attributes {dimension_semantics = [#tpu.dimension_semantics<parallel>], iteration_bounds = array<i64: 4>, scalar_prefetch = 0 : i64, scratch_operands = 0 : i64, tpu.core_type = #tpu.core_type<tc>, window_params = [{transform_indices = @transform_0, window_bounds = array<i64: 128, 16>}, {pipeline_mode = #tpu.pipeline_mode<synchronous>, transform_indices = @transform_1, window_bounds = array<i64: 1, 192>}, {pipeline_mode = #tpu.pipeline_mode<synchronous>, transform_indices = @transform_2, window_bounds = array<i64: 1, 192>}, {transform_indices = @transform_3, window_bounds = array<i64: 128, 192>}]} {
    %c0 = arith.constant 0 : index
    %c0_0 = arith.constant 0 : index
    %0 = vector.load %arg1[%c0, %c0_0] : memref<128x16xf32, #tpu.memory_space<vmem>>, vector<128x16xf32>
    %1 = tpu.concatenate %0, %0, %0, %0, %0, %0, %0, %0, %0, %0, %0, %0 in 1 : vector<128x16xf32>, vector<128x16xf32>, vector<128x16xf32>, vector<128x16xf32>, vector<128x16xf32>, vector<128x16xf32>, vector<128x16xf32>, vector<128x16xf32>, vector<128x16xf32>, vector<128x16xf32>, vector<128x16xf32>, vector<128x16xf32> -> vector<128x192xf32>
    %c0_1 = arith.constant 0 : index
    %c0_2 = arith.constant 0 : index
    %2 = vector.load %arg2[%c0_1, %c0_2] : memref<1x192xf32, #tpu.memory_space<vmem>>, vector<1x192xf32>
    %3 = vector.broadcast %2 : vector<1x192xf32> to vector<128x192xf32>
    %4 = arith.mulf %1, %3 : vector<128x192xf32>
    %c0_3 = arith.constant 0 : index
    %c0_4 = arith.constant 0 : index
    %5 = vector.load %arg3[%c0_3, %c0_4] : memref<1x192xf32, #tpu.memory_space<vmem>>, vector<1x192xf32>
    %6 = vector.broadcast %5 : vector<1x192xf32> to vector<128x192xf32>
    %7 = arith.addf %4, %6 : vector<128x192xf32>
    %8 = math.sin %7 : vector<128x192xf32>
    %c0_5 = arith.constant 0 : index
    %c0_6 = arith.constant 0 : index
    %9 = vector.load %arg4[%c0_5, %c0_6] : memref<128x192xf32, #tpu.memory_space<vmem>>, vector<128x192xf32>
    tpu.vector_store %arg4[%c0_5, %c0_6], %8 {strides = array<i32>} : memref<128x192xf32, #tpu.memory_space<vmem>>, vector<128x192xf32>,
    return
  }
  func.func @transform_0(%arg0: i32) -> (i32, i32) {
    %c0_i32 = arith.constant 0 : i32
    %c0_i32_0 = arith.constant 0 : i32
    return %arg0, %c0_i32 : i32, i32
  }
  func.func @transform_1(%arg0: i32) -> (i32, i32) {
    %c0_i32 = arith.constant 0 : i32
    %c0_i32_0 = arith.constant 0 : i32
    %c0_i32_1 = arith.constant 0 : i32
    return %c0_i32, %c0_i32_0 : i32, i32
  }
  func.func @transform_2(%arg0: i32) -> (i32, i32) {
    %c0_i32 = arith.constant 0 : i32
    %c0_i32_0 = arith.constant 0 : i32
    %c0_i32_1 = arith.constant 0 : i32
    return %c0_i32, %c0_i32_0 : i32, i32
  }
  func.func @transform_3(%arg0: i32) -> (i32, i32) {
    %c0_i32 = arith.constant 0 : i32
    %c0_i32_0 = arith.constant 0 : i32
    return %arg0, %c0_i32 : i32, i32
  }
}

</mosaic_0001>

<llo_original>
// kernel: tpu_custom_call.1
$region0: #{tpu_custom_call.1}
  #allocation0 [shape = 'u32[]', space=smem, size = 0x4, offset = 0x4, fixed_abs, tag = 'smem constant byte address 0x4 - core index']
  #allocation1 [shape = 'u32[144,128]{1,0:T(1,128)}', space=vmem, size = 0x12000, scoped, tag = 'internal scratch']
  %s0 = inlined_call_operand.vmem [shape: f32[512,16], index: 0, kind: input, shape index: {}]
  %s1 = inlined_call_operand.vmem [shape: f32[1,192], index: 1, kind: input, shape index: {}]
  %s2 = inlined_call_operand.vmem [shape: f32[1,192], index: 2, kind: input, shape index: {}]
  %s3 = inlined_call_operand.vmem [shape: f32[512,192], index: 3, kind: output, shape index: {}]
  %s4 = sld [smem:[#allocation0]]
  $region45: #{tpu_custom_call.1} parent=0
    _
  %s6 = ssub.s32 1, %s4
  %s7 = scalar_select 0, %s6, %s4
  loop: start=0, step=1, limit=6
  $region2: #{tpu_custom_call.1} parent=0 // loop_pre_header
    _
  $region3: #{tpu_custom_call.1} parent=0 // loop_header
    %s9 = sphi 0, %s13
    %p10 = scmp.ge.s32.totalorder %s9, 6
    %s19 = sphi 0, %s21
    %s22 = sphi 0, %s19
    %s23 = sphi 0, %s22
    %s39 = sphi 0, %s23
    %s43 = sphi 0, %s43
    %s45 = sphi 0, %s43
    %s46 = sphi 0, %s45
    %s60 = sphi 0, %s46
    %s64 = sphi 0, %s64
    %s66 = sphi 0, %s64
    %s67 = sphi 0, %s66
    %s81 = sphi 0, %s67
    %s87 = sphi 0, %s89
    %s90 = sphi 0, %s87
    %s91 = sphi 0, %s90
    %s107 = sphi 0, %s91
  $region4: #{tpu_custom_call.1} parent=0 // loop_header_branch
    %12 = sbr.rel (%p10) target = $region8
  $region5: #{tpu_custom_call.1} parent=0 // loop_body
    %s14 = ssub.s32 %s9, 1
    %s15 = ssub.s32 %s9, 2
    %s16 = sadd.s32 %s9, 1
    %s17 = ssub.s32 %s9, %s16
    %p18 = scmp.eq.s32.totalorder %s17, 0
    %s20 = sadd.s32 %s19, 1
    %s21 = scalar_select %p18, %s19, %s20
    %p24 = pneg %p18
    %p25 = scmp.eq.s32.totalorder %s9, 3
    %p26 = por %p24, %p25
    %p27 = scmp.ne.s32.totalorder %s19, %s22
    %p28 = scmp.eq.s32.totalorder %s9, 0
    %p29 = por %p27, %p28
    %p30 = scmp.ne.s32.totalorder %s19, %s22
    %p31 = scmp.eq.s32.totalorder %s14, 3
    %p32 = por %p30, %p31
    %p33 = scmp.ne.s32.totalorder %s22, %s23
    %p34 = scmp.eq.s32.totalorder %s14, 0
    %p35 = por %p33, %p34
    %p36 = scmp.ne.s32.totalorder %s22, %s23
    %p37 = scmp.eq.s32.totalorder %s15, 3
    %p38 = por %p36, %p37
    %p40 = scmp.ne.s32.totalorder %s23, %s39
    %p41 = scmp.eq.s32.totalorder %s15, 0
    %p42 = por %p40, %p41
    %s44 = sadd.s32 %s43, 1
    %p47 = scmp.eq.s32.totalorder %s9, 3
    %p48 = scmp.ne.s32.totalorder %s43, %s45
    %p49 = scmp.eq.s32.totalorder %s9, 0
    %p50 = por %p48, %p49
    %p51 = scmp.ne.s32.totalorder %s43, %s45
    %p52 = scmp.eq.s32.totalorder %s14, 3
    %p53 = por %p51, %p52
    %p54 = scmp.ne.s32.totalorder %s45, %s46
    %p55 = scmp.eq.s32.totalorder %s14, 0
    %p56 = por %p54, %p55
    %p57 = scmp.ne.s32.totalorder %s45, %s46
    %p58 = scmp.eq.s32.totalorder %s15, 3
    %p59 = por %p57, %p58
    %p61 = scmp.ne.s32.totalorder %s46, %s60
    %p62 = scmp.eq.s32.totalorder %s15, 0
    %p63 = por %p61, %p62
    %s65 = sadd.s32 %s64, 1
    %p68 = scmp.eq.s32.totalorder %s9, 3
    %p69 = scmp.ne.s32.totalorder %s64, %s66
    %p70 = scmp.eq.s32.totalorder %s9, 0
    %p71 = por %p69, %p70
    %p72 = scmp.ne.s32.totalorder %s64, %s66
    %p73 = scmp.eq.s32.totalorder %s14, 3
    %p74 = por %p72, %p73
    %p75 = scmp.ne.s32.totalorder %s66, %s67
    %p76 = scmp.eq.s32.totalorder %s14, 0
    %p77 = por %p75, %p76
    %p78 = scmp.ne.s32.totalorder %s66, %s67
    %p79 = scmp.eq.s32.totalorder %s15, 3
    %p80 = por %p78, %p79
    %p82 = scmp.ne.s32.totalorder %s67, %s81
    %p83 = scmp.eq.s32.totalorder %s15, 0
    %p84 = por %p82, %p83
    %s85 = ssub.s32 %s9, %s16
    %p86 = scmp.eq.s32.totalorder %s85, 0
    %s88 = sadd.s32 %s87, 1
    %s89 = scalar_select %p86, %s87, %s88
    %p92 = pneg %p86
    %p93 = scmp.eq.s32.totalorder %s9, 3
    %p94 = por %p92, %p93
    %p95 = scmp.ne.s32.totalorder %s87, %s90
    %p96 = scmp.eq.s32.totalorder %s9, 0
    %p97 = por %p95, %p96
    %p98 = scmp.ne.s32.totalorder %s87, %s90
    %p99 = scmp.eq.s32.totalorder %s14, 3
    %p100 = por %p98, %p99
    %p101 = scmp.ne.s32.totalorder %s90, %s91
    %p102 = scmp.eq.s32.totalorder %s14, 0
    %p103 = por %p101, %p102
    %p104 = scmp.ne.s32.totalorder %s90, %s91
    %p105 = scmp.eq.s32.totalorder %s15, 3
    %p106 = por %p104, %p105
    %p108 = scmp.ne.s32.totalorder %s91, %s107
    %p109 = scmp.eq.s32.totalorder %s15, 0
    %p110 = por %p108, %p109
    %p111 = scmp.le.s32.totalorder 1, %s9
    %p112 = scmp.lt.s32.totalorder %s9, 5
    %p113 = pnand %p111, %p112
    %p114 = pneg %p113
    // Predicated region
    $region9: #{tpu_custom_call.1} parent=5 // pred_check
      _
    $region10: #{tpu_custom_call.1} parent=5 // pred_check_branch
      %116 = sbr.rel (%p113) target = $region12
    $region11: #{tpu_custom_call.1} parent=5 // pred_region
      %s117 = ssub.s32 %s9, 1
      // Predicated region
      $region13: #{tpu_custom_call.1} parent=11 // pred_check
        %p118 = pneg %p56
      $region14: #{tpu_custom_call.1} parent=11 // pred_check_branch
        %120 = sbr.rel (%p118) target = $region16
      $region15: #{tpu_custom_call.1} parent=11 // pred_region
        _
      $region16: #{tpu_custom_call.1} parent=11 // pred_fallthru
        _
      // Predicated region
      $region17: #{tpu_custom_call.1} parent=11 // pred_check
        %p121 = pneg %p77
      $region18: #{tpu_custom_call.1} parent=11 // pred_check_branch
        %123 = sbr.rel (%p121) target = $region20
      $region19: #{tpu_custom_call.1} parent=11 // pred_region
        _
      $region20: #{tpu_custom_call.1} parent=11 // pred_fallthru
        _
    $region12: #{tpu_custom_call.1} parent=5 // pred_fallthru
      _
    %p124 = scmp.lt.s32.totalorder %s9, 4
    // Predicated region
    $region21: #{tpu_custom_call.1} parent=5 // pred_check
      %p125 = pneg %p124
    $region22: #{tpu_custom_call.1} parent=5 // pred_check_branch
      %127 = sbr.rel (%p125) target = $region24
    $region23: #{tpu_custom_call.1} parent=5 // pred_region
      // Predicated region
      $region25: #{tpu_custom_call.1} parent=23 // pred_check
        %p128 = pneg %p29
      $region26: #{tpu_custom_call.1} parent=23 // pred_check_branch
        %130 = sbr.rel (%p128) target = $region28
      $region27: #{tpu_custom_call.1} parent=23 // pred_region
        %s131 = smul.u32 16, %s9
        %p132 = scmp.lt.s32.totalorder %s131, 63
        %s133 = scalar_select %p132, %s131, 63
        %s134 = smul.addr %s133, 8
        %s135 = scalar_lea.vmem %s0, %s134
        %s136 = smul.u32 16, %s9
      $region28: #{tpu_custom_call.1} parent=23 // pred_fallthru
        _
    $region24: #{tpu_custom_call.1} parent=5 // pred_fallthru
      _
    %p137 = scmp.le.s32.totalorder 1, %s9
    %p138 = scmp.lt.s32.totalorder %s9, 5
    %p139 = pnand %p137, %p138
    %p140 = pneg %p139
    // Predicated region
    $region29: #{tpu_custom_call.1} parent=5 // pred_check
      _
    $region30: #{tpu_custom_call.1} parent=5 // pred_check_branch
      %142 = sbr.rel (%p139) target = $region32
    $region31: #{tpu_custom_call.1} parent=5 // pred_region
      %s143 = ssub.s32 %s9, 1
      %s144 = smul.u32 16, %s14
      %p145 = scmp.lt.s32.totalorder %s144, 63
      %s146 = scalar_select %p145, %s144, 63
      %s147 = smul.addr %s146, 8
      %s148 = scalar_lea.vmem %s0, %s147
      %p149 = pneg %p35
      %p150 = pneg %p32
      %p151 = pneg %p56
      %p152 = pneg %p53
      %p153 = pneg %p77
      %p154 = pneg %p74
      %p155 = pneg %p103
      %p156 = pneg %p100
      %s157 = smul.u32 16, %s14
      %p158 = scmp.lt.s32.totalorder %s157, 63
      %s159 = scalar_select %p158, %s157, 63
      %s160 = smul.addr %s159, 2
      %s161 = smul.addr %s160, 8
      %s162 = scalar_lea.vmem %s3, %s161
      %s163 = smul.u32 16, %s14
      %p164 = scmp.lt.s32.totalorder %s163, 63
      %s165 = scalar_select %p164, %s163, 63
      %s166 = smul.addr %s165, 8
      %s167 = scalar_lea.vmem %s0, %s166
      %s168 = smul.u32 16, %s14
      %s169 = smul.u32 16, %s14
      %p170 = scmp.lt.s32.totalorder %s169, 63
      %s171 = scalar_select %p170, %s169, 63
      %s172 = smul.addr %s171, 2
      %s173 = smul.addr %s172, 8
      %s174 = scalar_lea.vmem %s3, %s173
      %s175 = smul.u32 16, %s14
      %v176 = vld [vmem:[%s167] sm:$0xff]
      %v177 = vld [vmem:[%s167 + $0x8] sm:$0xff]
      %v178 = vld [vmem:[%s167 + $0x10] sm:$0xff]
      %v179 = vld [vmem:[%s167 + $0x18] sm:$0xff]
      %v180 = vld [vmem:[%s167 + $0x20] sm:$0xff]
      %v181 = vld [vmem:[%s167 + $0x28] sm:$0xff]
      %v182 = vld [vmem:[%s167 + $0x30] sm:$0xff]
      %v183 = vld [vmem:[%s167 + $0x38] sm:$0xff]
      %v184 = vld [vmem:[%s167 + $0x40] sm:$0xff]
      %v185 = vld [vmem:[%s167 + $0x48] sm:$0xff]
      %v186 = vld [vmem:[%s167 + $0x50] sm:$0xff]
      %v187 = vld [vmem:[%s167 + $0x58] sm:$0xff]
      %v188 = vld [vmem:[%s167 + $0x60] sm:$0xff]
      %v189 = vld [vmem:[%s167 + $0x68] sm:$0xff]
      %v190 = vld [vmem:[%s167 + $0x70] sm:$0xff]
      %v191 = vld [vmem:[%s167 + $0x78] sm:$0xff]
      %208 = vrot.lane.b32.xlu0 %v176, 16
      %v209 = vpop.permute.xlu0 %208
      %210 = vrot.lane.b32.xlu0 %v177, 16
      %v211 = vpop.permute.xlu0 %210
      %212 = vrot.lane.b32.xlu0 %v178, 16
      %v213 = vpop.permute.xlu0 %212
      %214 = vrot.lane.b32.xlu0 %v179, 16
      %v215 = vpop.permute.xlu0 %214
      %216 = vrot.lane.b32.xlu0 %v180, 16
      %v217 = vpop.permute.xlu0 %216
      %218 = vrot.lane.b32.xlu0 %v181, 16
      %v219 = vpop.permute.xlu0 %218
      %220 = vrot.lane.b32.xlu0 %v182, 16
      %v221 = vpop.permute.xlu0 %220
      %222 = vrot.lane.b32.xlu0 %v183, 16
      %v223 = vpop.permute.xlu0 %222
      %224 = vrot.lane.b32.xlu0 %v184, 16
      %v225 = vpop.permute.xlu0 %224
      %226 = vrot.lane.b32.xlu0 %v185, 16
      %v227 = vpop.permute.xlu0 %226
      %228 = vrot.lane.b32.xlu0 %v186, 16
      %v229 = vpop.permute.xlu0 %228
      %230 = vrot.lane.b32.xlu0 %v187, 16
      %v231 = vpop.permute.xlu0 %230
      %232 = vrot.lane.b32.xlu0 %v188, 16
      %v233 = vpop.permute.xlu0 %232
      %234 = vrot.lane.b32.xlu0 %v189, 16
      %v235 = vpop.permute.xlu0 %234
      %236 = vrot.lane.b32.xlu0 %v190, 16
      %v237 = vpop.permute.xlu0 %236
      %238 = vrot.lane.b32.xlu0 %v191, 16
      %v239 = vpop.permute.xlu0 %238
      %256 = vrot.lane.b32.xlu0 %v176, 32
      %v257 = vpop.permute.xlu0 %256
      %258 = vrot.lane.b32.xlu0 %v177, 32
      %v259 = vpop.permute.xlu0 %258
      %260 = vrot.lane.b32.xlu0 %v178, 32
      %v261 = vpop.permute.xlu0 %260
      %262 = vrot.lane.b32.xlu0 %v179, 32
      %v263 = vpop.permute.xlu0 %262
      %264 = vrot.lane.b32.xlu0 %v180, 32
      %v265 = vpop.permute.xlu0 %264
      %266 = vrot.lane.b32.xlu0 %v181, 32
      %v267 = vpop.permute.xlu0 %266
      %268 = vrot.lane.b32.xlu0 %v182, 32
      %v269 = vpop.permute.xlu0 %268
      %270 = vrot.lane.b32.xlu0 %v183, 32
      %v271 = vpop.permute.xlu0 %270
      %272 = vrot.lane.b32.xlu0 %v184, 32
      %v273 = vpop.permute.xlu0 %272
      %274 = vrot.lane.b32.xlu0 %v185, 32
      %v275 = vpop.permute.xlu0 %274
      %276 = vrot.lane.b32.xlu0 %v186, 32
      %v277 = vpop.permute.xlu0 %276
      %278 = vrot.lane.b32.xlu0 %v187, 32
      %v279 = vpop.permute.xlu0 %278
      %280 = vrot.lane.b32.xlu0 %v188, 32
      %v281 = vpop.permute.xlu0 %280
      %282 = vrot.lane.b32.xlu0 %v189, 32
      %v283 = vpop.permute.xlu0 %282
      %284 = vrot.lane.b32.xlu0 %v190, 32
      %v285 = vpop.permute.xlu0 %284
      %286 = vrot.lane.b32.xlu0 %v191, 32
      %v287 = vpop.permute.xlu0 %286
      %304 = vrot.lane.b32.xlu0 %v176, 48
      %v305 = vpop.permute.xlu0 %304
      %306 = vrot.lane.b32.xlu0 %v177, 48
      %v307 = vpop.permute.xlu0 %306
      %308 = vrot.lane.b32.xlu0 %v178, 48
      %v309 = vpop.permute.xlu0 %308
      %310 = vrot.lane.b32.xlu0 %v179, 48
      %v311 = vpop.permute.xlu0 %310
      %312 = vrot.lane.b32.xlu0 %v180, 48
      %v313 = vpop.permute.xlu0 %312
      %314 = vrot.lane.b32.xlu0 %v181, 48
      %v315 = vpop.permute.xlu0 %314
      %316 = vrot.lane.b32.xlu0 %v182, 48
      %v317 = vpop.permute.xlu0 %316
      %318 = vrot.lane.b32.xlu0 %v183, 48
      %v319 = vpop.permute.xlu0 %318
      %320 = vrot.lane.b32.xlu0 %v184, 48
      %v321 = vpop.permute.xlu0 %320
      %322 = vrot.lane.b32.xlu0 %v185, 48
      %v323 = vpop.permute.xlu0 %322
      %324 = vrot.lane.b32.xlu0 %v186, 48
      %v325 = vpop.permute.xlu0 %324
      %326 = vrot.lane.b32.xlu0 %v187, 48
      %v327 = vpop.permute.xlu0 %326
      %328 = vrot.lane.b32.xlu0 %v188, 48
      %v329 = vpop.permute.xlu0 %328
      %330 = vrot.lane.b32.xlu0 %v189, 48
      %v331 = vpop.permute.xlu0 %330
      %332 = vrot.lane.b32.xlu0 %v190, 48
      %v333 = vpop.permute.xlu0 %332
      %334 = vrot.lane.b32.xlu0 %v191, 48
      %v335 = vpop.permute.xlu0 %334
      %352 = vrot.lane.b32.xlu0 %v176, 64
      %v353 = vpop.permute.xlu0 %352
      %354 = vrot.lane.b32.xlu0 %v177, 64
      %v355 = vpop.permute.xlu0 %354
      %356 = vrot.lane.b32.xlu0 %v178, 64
      %v357 = vpop.permute.xlu0 %356
      %358 = vrot.lane.b32.xlu0 %v179, 64
      %v359 = vpop.permute.xlu0 %358
      %360 = vrot.lane.b32.xlu0 %v180, 64
      %v361 = vpop.permute.xlu0 %360
      %362 = vrot.lane.b32.xlu0 %v181, 64
      %v363 = vpop.permute.xlu0 %362
      %364 = vrot.lane.b32.xlu0 %v182, 64
      %v365 = vpop.permute.xlu0 %364
      %366 = vrot.lane.b32.xlu0 %v183, 64
      %v367 = vpop.permute.xlu0 %366
      %368 = vrot.lane.b32.xlu0 %v184, 64
      %v369 = vpop.permute.xlu0 %368
      %370 = vrot.lane.b32.xlu0 %v185, 64
      %v371 = vpop.permute.xlu0 %370
      %372 = vrot.lane.b32.xlu0 %v186, 64
      %v373 = vpop.permute.xlu0 %372
      %374 = vrot.lane.b32.xlu0 %v187, 64
      %v375 = vpop.permute.xlu0 %374
      %376 = vrot.lane.b32.xlu0 %v188, 64
      %v377 = vpop.permute.xlu0 %376
      %378 = vrot.lane.b32.xlu0 %v189, 64
      %v379 = vpop.permute.xlu0 %378
      %380 = vrot.lane.b32.xlu0 %v190, 64
      %v381 = vpop.permute.xlu0 %380
      %382 = vrot.lane.b32.xlu0 %v191, 64
      %v383 = vpop.permute.xlu0 %382
      %400 = vrot.lane.b32.xlu0 %v176, 80
      %v401 = vpop.permute.xlu0 %400
      %402 = vrot.lane.b32.xlu0 %v177, 80
      %v403 = vpop.permute.xlu0 %402
      %404 = vrot.lane.b32.xlu0 %v178, 80
      %v405 = vpop.permute.xlu0 %404
      %406 = vrot.lane.b32.xlu0 %v179, 80
      %v407 = vpop.permute.xlu0 %406
      %408 = vrot.lane.b32.xlu0 %v180, 80
      %v409 = vpop.permute.xlu0 %408
      %410 = vrot.lane.b32.xlu0 %v181, 80
      %v411 = vpop.permute.xlu0 %410
      %412 = vrot.lane.b32.xlu0 %v182, 80
      %v413 = vpop.permute.xlu0 %412
      %414 = vrot.lane.b32.xlu0 %v183, 80
      %v415 = vpop.permute.xlu0 %414
      %416 = vrot.lane.b32.xlu0 %v184, 80
      %v417 = vpop.permute.xlu0 %416
      %418 = vrot.lane.b32.xlu0 %v185, 80
      %v419 = vpop.permute.xlu0 %418
      %420 = vrot.lane.b32.xlu0 %v186, 80
      %v421 = vpop.permute.xlu0 %420
      %422 = vrot.lane.b32.xlu0 %v187, 80
      %v423 = vpop.permute.xlu0 %422
      %424 = vrot.lane.b32.xlu0 %v188, 80
      %v425 = vpop.permute.xlu0 %424
      %426 = vrot.lane.b32.xlu0 %v189, 80
      %v427 = vpop.permute.xlu0 %426
      %428 = vrot.lane.b32.xlu0 %v190, 80
      %v429 = vpop.permute.xlu0 %428
      %430 = vrot.lane.b32.xlu0 %v191, 80
      %v431 = vpop.permute.xlu0 %430
      %448 = vrot.lane.b32.xlu0 %v176, 96
      %v449 = vpop.permute.xlu0 %448
      %450 = vrot.lane.b32.xlu0 %v177, 96
      %v451 = vpop.permute.xlu0 %450
      %452 = vrot.lane.b32.xlu0 %v178, 96
      %v453 = vpop.permute.xlu0 %452
      %454 = vrot.lane.b32.xlu0 %v179, 96
      %v455 = vpop.permute.xlu0 %454
      %456 = vrot.lane.b32.xlu0 %v180, 96
      %v457 = vpop.permute.xlu0 %456
      %458 = vrot.lane.b32.xlu0 %v181, 96
      %v459 = vpop.permute.xlu0 %458
      %460 = vrot.lane.b32.xlu0 %v182, 96
      %v461 = vpop.permute.xlu0 %460
      %462 = vrot.lane.b32.xlu0 %v183, 96
      %v463 = vpop.permute.xlu0 %462
      %464 = vrot.lane.b32.xlu0 %v184, 96
      %v465 = vpop.permute.xlu0 %464
      %466 = vrot.lane.b32.xlu0 %v185, 96
      %v467 = vpop.permute.xlu0 %466
      %468 = vrot.lane.b32.xlu0 %v186, 96
      %v469 = vpop.permute.xlu0 %468
      %470 = vrot.lane.b32.xlu0 %v187, 96
      %v471 = vpop.permute.xlu0 %470
      %472 = vrot.lane.b32.xlu0 %v188, 96
      %v473 = vpop.permute.xlu0 %472
      %474 = vrot.lane.b32.xlu0 %v189, 96
      %v475 = vpop.permute.xlu0 %474
      %476 = vrot.lane.b32.xlu0 %v190, 96
      %v477 = vpop.permute.xlu0 %476
      %478 = vrot.lane.b32.xlu0 %v191, 96
      %v479 = vpop.permute.xlu0 %478
      %496 = vrot.lane.b32.xlu0 %v176, 112
      %v497 = vpop.permute.xlu0 %496
      %498 = vrot.lane.b32.xlu0 %v177, 112
      %v499 = vpop.permute.xlu0 %498
      %500 = vrot.lane.b32.xlu0 %v178, 112
      %v501 = vpop.permute.xlu0 %500
      %502 = vrot.lane.b32.xlu0 %v179, 112
      %v503 = vpop.permute.xlu0 %502
      %504 = vrot.lane.b32.xlu0 %v180, 112
      %v505 = vpop.permute.xlu0 %504
      %506 = vrot.lane.b32.xlu0 %v181, 112
      %v507 = vpop.permute.xlu0 %506
      %508 = vrot.lane.b32.xlu0 %v182, 112
      %v509 = vpop.permute.xlu0 %508
      %510 = vrot.lane.b32.xlu0 %v183, 112
      %v511 = vpop.permute.xlu0 %510
      %512 = vrot.lane.b32.xlu0 %v184, 112
      %v513 = vpop.permute.xlu0 %512
      %514 = vrot.lane.b32.xlu0 %v185, 112
      %v515 = vpop.permute.xlu0 %514
      %516 = vrot.lane.b32.xlu0 %v186, 112
      %v517 = vpop.permute.xlu0 %516
      %518 = vrot.lane.b32.xlu0 %v187, 112
      %v519 = vpop.permute.xlu0 %518
      %520 = vrot.lane.b32.xlu0 %v188, 112
      %v521 = vpop.permute.xlu0 %520
      %522 = vrot.lane.b32.xlu0 %v189, 112
      %v523 = vpop.permute.xlu0 %522
      %524 = vrot.lane.b32.xlu0 %v190, 112
      %v525 = vpop.permute.xlu0 %524
      %526 = vrot.lane.b32.xlu0 %v191, 112
      %v527 = vpop.permute.xlu0 %526
      %vm544 = vcmask 130048
      %v545 = vsel %vm544, %v176, %v209
      %v546 = vsel %vm544, %v177, %v211
      %v547 = vsel %vm544, %v178, %v213
      %v548 = vsel %vm544, %v179, %v215
      %v549 = vsel %vm544, %v180, %v217
      %v550 = vsel %vm544, %v181, %v219
      %v551 = vsel %vm544, %v182, %v221
      %v552 = vsel %vm544, %v183, %v223
      %v553 = vsel %vm544, %v184, %v225
      %v554 = vsel %vm544, %v185, %v227
      %v555 = vsel %vm544, %v186, %v229
      %v556 = vsel %vm544, %v187, %v231
      %v557 = vsel %vm544, %v188, %v233
      %v558 = vsel %vm544, %v189, %v235
      %v559 = vsel %vm544, %v190, %v237
      %v560 = vsel %vm544, %v191, %v239
      %vm561 = vcmask 261120
      %v562 = vsel %vm561, %v545, %v257
      %v563 = vsel %vm561, %v546, %v259
      %v564 = vsel %vm561, %v547, %v261
      %v565 = vsel %vm561, %v548, %v263
      %v566 = vsel %vm561, %v549, %v265
      %v567 = vsel %vm561, %v550, %v267
      %v568 = vsel %vm561, %v551, %v269
      %v569 = vsel %vm561, %v552, %v271
      %v570 = vsel %vm561, %v553, %v273
      %v571 = vsel %vm561, %v554, %v275
      %v572 = vsel %vm561, %v555, %v277
      %v573 = vsel %vm561, %v556, %v279
      %v574 = vsel %vm561, %v557, %v281
      %v575 = vsel %vm561, %v558, %v283
      %v576 = vsel %vm561, %v559, %v285
      %v577 = vsel %vm561, %v560, %v287
      %vm578 = vcmask 392192
      %v579 = vsel %vm578, %v562, %v305
      %v580 = vsel %vm578, %v563, %v307
      %v581 = vsel %vm578, %v564, %v309
      %v582 = vsel %vm578, %v565, %v311
      %v583 = vsel %vm578, %v566, %v313
      %v584 = vsel %vm578, %v567, %v315
      %v585 = vsel %vm578, %v568, %v317
      %v586 = vsel %vm578, %v569, %v319
      %v587 = vsel %vm578, %v570, %v321
      %v588 = vsel %vm578, %v571, %v323
      %v589 = vsel %vm578, %v572, %v325
      %v590 = vsel %vm578, %v573, %v327
      %v591 = vsel %vm578, %v574, %v329
      %v592 = vsel %vm578, %v575, %v331
      %v593 = vsel %vm578, %v576, %v333
      %v594 = vsel %vm578, %v577, %v335
      %vm595 = vcmask 523264
      %v596 = vsel %vm595, %v579, %v353
      %v597 = vsel %vm595, %v580, %v355
      %v598 = vsel %vm595, %v581, %v357
      %v599 = vsel %vm595, %v582, %v359
      %v600 = vsel %vm595, %v583, %v361
      %v601 = vsel %vm595, %v584, %v363
      %v602 = vsel %vm595, %v585, %v365
      %v603 = vsel %vm595, %v586, %v367
      %v604 = vsel %vm595, %v587, %v369
      %v605 = vsel %vm595, %v588, %v371
      %v606 = vsel %vm595, %v589, %v373
      %v607 = vsel %vm595, %v590, %v375
      %v608 = vsel %vm595, %v591, %v377
      %v609 = vsel %vm595, %v592, %v379
      %v610 = vsel %vm595, %v593, %v381
      %v611 = vsel %vm595, %v594, %v383
      %vm612 = vcmask 654336
      %v613 = vsel %vm612, %v596, %v401
      %v614 = vsel %vm612, %v597, %v403
      %v615 = vsel %vm612, %v598, %v405
      %v616 = vsel %vm612, %v599, %v407
      %v617 = vsel %vm612, %v600, %v409
      %v618 = vsel %vm612, %v601, %v411
      %v619 = vsel %vm612, %v602, %v413
      %v620 = vsel %vm612, %v603, %v415
      %v621 = vsel %vm612, %v604, %v417
      %v622 = vsel %vm612, %v605, %v419
      %v623 = vsel %vm612, %v606, %v421
      %v624 = vsel %vm612, %v607, %v423
      %v625 = vsel %vm612, %v608, %v425
      %v626 = vsel %vm612, %v609, %v427
      %v627 = vsel %vm612, %v610, %v429
      %v628 = vsel %vm612, %v611, %v431
      %vm629 = vcmask 785408
      %v630 = vsel %vm629, %v613, %v449
      %v631 = vsel %vm629, %v614, %v451
      %v632 = vsel %vm629, %v615, %v453
      %v633 = vsel %vm629, %v616, %v455
      %v634 = vsel %vm629, %v617, %v457
      %v635 = vsel %vm629, %v618, %v459
      %v636 = vsel %vm629, %v619, %v461
      %v637 = vsel %vm629, %v620, %v463
      %v638 = vsel %vm629, %v621, %v465
      %v639 = vsel %vm629, %v622, %v467
      %v640 = vsel %vm629, %v623, %v469
      %v641 = vsel %vm629, %v624, %v471
      %v642 = vsel %vm629, %v625, %v473
      %v643 = vsel %vm629, %v626, %v475
      %v644 = vsel %vm629, %v627, %v477
      %v645 = vsel %vm629, %v628, %v479
      %vm646 = vcmask 916480
      %v647 = vsel %vm646, %v630, %v497
      %v648 = vsel %vm646, %v631, %v499
      %v649 = vsel %vm646, %v632, %v501
      %v650 = vsel %vm646, %v633, %v503
      %v651 = vsel %vm646, %v634, %v505
      %v652 = vsel %vm646, %v635, %v507
      %v653 = vsel %vm646, %v636, %v509
      %v654 = vsel %vm646, %v637, %v511
      %v655 = vsel %vm646, %v638, %v513
      %v656 = vsel %vm646, %v639, %v515
      %v657 = vsel %vm646, %v640, %v517
      %v658 = vsel %vm646, %v641, %v519
      %v659 = vsel %vm646, %v642, %v521
      %v660 = vsel %vm646, %v643, %v523
      %v661 = vsel %vm646, %v644, %v525
      %v662 = vsel %vm646, %v645, %v527
      %v663 = vld [vmem:[%s1] sm:$0x3]
      %v665 = vlaneseq
      %v666 = vshrl.u32 %v665, 7
      %v667 = vsub.s32 0, %v666
      %v668 = vrot.slane %v663, %v667
      %v669 = vlaneseq
      %v670 = vshrl.u32 %v669, 7
      %v671 = vsub.s32 1, %v670
      %v672 = vrot.slane %v663, %v671
      %v675 = vmul.f32 %v647, %v668
      %v676 = vmul.f32 %v579, %v672
      %v677 = vmul.f32 %v648, %v668
      %v678 = vmul.f32 %v580, %v672
      %v679 = vmul.f32 %v649, %v668
      %v680 = vmul.f32 %v581, %v672
      %v681 = vmul.f32 %v650, %v668
      %v682 = vmul.f32 %v582, %v672
      %v683 = vmul.f32 %v651, %v668
      %v684 = vmul.f32 %v583, %v672
      %v685 = vmul.f32 %v652, %v668
      %v686 = vmul.f32 %v584, %v672
      %v687 = vmul.f32 %v653, %v668
      %v688 = vmul.f32 %v585, %v672
      %v689 = vmul.f32 %v654, %v668
      %v690 = vmul.f32 %v586, %v672
      %v691 = vmul.f32 %v655, %v668
      %v692 = vmul.f32 %v587, %v672
      %v693 = vmul.f32 %v656, %v668
      %v694 = vmul.f32 %v588, %v672
      %v695 = vmul.f32 %v657, %v668
      %v696 = vmul.f32 %v589, %v672
      %v697 = vmul.f32 %v658, %v668
      %v698 = vmul.f32 %v590, %v672
      %v699 = vmul.f32 %v659, %v668
      %v700 = vmul.f32 %v591, %v672
      %v701 = vmul.f32 %v660, %v668
      %v702 = vmul.f32 %v592, %v672
      %v703 = vmul.f32 %v661, %v668
      %v704 = vmul.f32 %v593, %v672
      %v705 = vmul.f32 %v662, %v668
      %v706 = vmul.f32 %v594, %v672
      %v707 = vld [vmem:[%s2] sm:$0x3]
      %v709 = vlaneseq
      %v710 = vshrl.u32 %v709, 7
      %v711 = vsub.s32 0, %v710
      %v712 = vrot.slane %v707, %v711
      %v713 = vlaneseq
      %v714 = vshrl.u32 %v713, 7
      %v715 = vsub.s32 1, %v714
      %v716 = vrot.slane %v707, %v715
      %v719 = vadd.f32 %v675, %v712
      %v720 = vadd.f32 %v676, %v716
      %v721 = vadd.f32 %v677, %v712
      %v722 = vadd.f32 %v678, %v716
      %v723 = vadd.f32 %v679, %v712
      %v724 = vadd.f32 %v680, %v716
      %v725 = vadd.f32 %v681, %v712
      %v726 = vadd.f32 %v682, %v716
      %v727 = vadd.f32 %v683, %v712
      %v728 = vadd.f32 %v684, %v716
      %v729 = vadd.f32 %v685, %v712
      %v730 = vadd.f32 %v686, %v716
      %v731 = vadd.f32 %v687, %v712
      %v732 = vadd.f32 %v688, %v716
      %v733 = vadd.f32 %v689, %v712
      %v734 = vadd.f32 %v690, %v716
      %v735 = vadd.f32 %v691, %v712
      %v736 = vadd.f32 %v692, %v716
      %v737 = vadd.f32 %v693, %v712
      %v738 = vadd.f32 %v694, %v716
      %v739 = vadd.f32 %v695, %v712
      %v740 = vadd.f32 %v696, %v716
      %v741 = vadd.f32 %v697, %v712
      %v742 = vadd.f32 %v698, %v716
      %v743 = vadd.f32 %v699, %v712
      %v744 = vadd.f32 %v700, %v716
      %v745 = vadd.f32 %v701, %v712
      %v746 = vadd.f32 %v702, %v716
      %v747 = vadd.f32 %v703, %v712
      %v748 = vadd.f32 %v704, %v716
      %v749 = vadd.f32 %v705, %v712
      %v750 = vadd.f32 %v706, %v716
      %v751 = vand.u32 2147483647, %v719
      %vm752 = vcmp.le.f32.partialorder %v751, 0.7853982
      %vm753 = vcmp.lt.s32.totalorder %v719, 0
      %v754 = vand.u32 %v719, 2139095040
      %v755 = vshrl.u32 %v754, 23
      %v756 = vsub.s32 %v755, 127
      %v757 = vand.u32 2147483647, %v719
      %v758 = vand.u32 %v757, 8388607
      %v759 = vor.u32 %v758, 8388608
      %v760 = vsub.s32 0, %v759
      %v761 = vadd.s32 %v756, 1
      %vm762 = vcmp.gt.s32.totalorder %v761, 0
      %v763 = vsel %vm762, %v761, 0
      %v764 = vshrl.u32 %v763, 5
      %v765 = vand.u32 %v763, 31
      %v766 = vsub.s32 32, %v765
      %v767 = vshrl.u32 683565275, %v766
      %v768 = vshll.u32 683565275, %v765
      %v769 = vshrl.u32 2475754826, %v766
      %v770 = vor.u32 %v768, %v769
      %v771 = vshll.u32 2475754826, %v765
      %v772 = vshrl.u32 2131351028, %v766
      %v773 = vor.u32 %v771, %v772
      %v774 = vshll.u32 2131351028, %v765
      %v775 = vshrl.u32 2102212464, %v766
      %v776 = vor.u32 %v774, %v775
      %v777 = vshll.u32 2102212464, %v765
      %v778 = vshrl.u32 920167782, %v766
      %v779 = vor.u32 %v777, %v778
      %v780 = vshll.u32 920167782, %v765
      %v781 = vshrl.u32 1326507024, %v766
      %v782 = vor.u32 %v780, %v781
      %vm783 = vcmp.lt.s32.totalorder %v764, 1
      %vm784 = vcmp.lt.s32.totalorder %v764, 2
      %vm785 = vcmp.lt.s32.totalorder %v764, 3
      %vm786 = vcmp.lt.s32.totalorder %v764, 4
      %v787 = vsel %vm783, %v767, %v770
      %v788 = vsel %vm786, %v776, 2102212464
      %v789 = vsel %vm785, %v773, %v788
      %v790 = vsel %vm784, %v787, %v789
      %v791 = vsel %vm783, %v770, %v773
      %v792 = vsel %vm786, %v779, 920167782
      %v793 = vsel %vm785, %v776, %v792
      %v794 = vsel %vm784, %v791, %v793
      %v795 = vsel %vm783, %v773, %v776
      %v796 = vsel %vm786, %v782, 1326507024
      %v797 = vsel %vm785, %v779, %v796
      %v798 = vsel %vm784, %v795, %v797
      %v799 = vshll.u32 %v759, 8
      %v800 = vmul.u32.u64.compose %v799, %v798
      %v801 = vextract.low.u32 %v800
      %v802 = vextract.high.u32 %v800
      %v803 = vmul.u32.u64.compose %v799, %v794
      %v804 = vextract.low.u32 %v803
      %v805 = vextract.high.u32 %v803
      %v806 = vmul.u32 %v799, %v790
      %v807 = vadd.s32 %v802, %v804
      %vm808 = vc.u32 %v802, %v804
      %v809 = vadd.s32 %v805, 1
      %v810 = vsel %vm808, %v809, %v805
      %v811 = vadd.s32 %v806, %v810
      %v812 = vadd.s32 %v811, 536870912
      %v813 = vshrl.u32 %v812, 30
      %v814 = vshll.u32 %v813, 30
      %v815 = vsub.s32 %v811, %v814
      %vm816 = vcmp.lt.s32.totalorder %v815, 0
      %v817 = vsub.s32 0, %v815
      %v818 = vsel %vm816, %v817, %v815
      %v819 = vclz %v818
      %v820 = vsub.s32 %v819, 2
      %vm821 = vcmp.gt.s32.totalorder 0, %v820
      %v822 = vsel %vm821, 0, %v820
      %v823 = vsub.s32 32, %v822
      %v824 = vshll.u32 %v815, %v822
      %v825 = vshrl.u32 %v807, %v823
      %v826 = vor.u32 %v824, %v825
      %v827 = vsub.s32 4294967266, %v822
      %v828 = vadd.s32 %v827, 127
      %v829 = vshll.u32 %v828, 23
      %v830 = vor.u32 4788187, %v829
      %v831 = vand.u32 2147483647, %v830
      %v833 = vcvt.s32.f32 %v826
      %v834 = vmul.f32 %v833, %v831
      %v835 = vxor.u32 %v834, 2147483648
      %v836 = vsel %vm753, %v835, %v834
      %v837 = vsub.s32 4, %v813
      %v838 = vsel %vm753, %v837, %v813
      %v839 = vsel %vm752, %v719, %v836
      %v840 = vsel %vm752, 0, %v838
      %v841 = vcosq.f32.pop %v839
      %v842 = vsinq.f32.pop %v839
      %vm843 = vweird.f32 %v719
      %v844 = vadd.s32 %v840, 3
      %v845 = vand.u32 %v844, 3
      %vm846 = vcmp.lt.s32.totalorder %v845, 2
      %vm847 = vcmp.eq.s32.totalorder %v845, 0
      %v848 = vxor.u32 %v842, 2147483648
      %v849 = vsel %vm847, %v841, %v848
      %vm850 = vcmp.eq.s32.totalorder %v845, 2
      %v851 = vxor.u32 %v841, 2147483648
      %v852 = vsel %vm850, %v851, %v842
      %v853 = vsel %vm846, %v849, %v852
      %v854 = vsel %vm843, nan, %v853
      %v855 = vand.u32 2147483647, %v720
      %vm856 = vcmp.le.f32.partialorder %v855, 0.7853982
      %vm857 = vcmp.lt.s32.totalorder %v720, 0
      %v858 = vand.u32 %v720, 2139095040
      %v859 = vshrl.u32 %v858, 23
      %v860 = vsub.s32 %v859, 127
      %v861 = vand.u32 2147483647, %v720
      %v862 = vand.u32 %v861, 8388607
      %v863 = vor.u32 %v862, 8388608
      %v864 = vsub.s32 0, %v863
      %v865 = vadd.s32 %v860, 1
      %vm866 = vcmp.gt.s32.totalorder %v865, 0
      %v867 = vsel %vm866, %v865, 0
      %v868 = vshrl.u32 %v867, 5
      %v869 = vand.u32 %v867, 31
      %v870 = vsub.s32 32, %v869
      %v871 = vshrl.u32 683565275, %v870
      %v872 = vshll.u32 683565275, %v869
      %v873 = vshrl.u32 2475754826, %v870
      %v874 = vor.u32 %v872, %v873
      %v875 = vshll.u32 2475754826, %v869
      %v876 = vshrl.u32 2131351028, %v870
      %v877 = vor.u32 %v875, %v876
      %v878 = vshll.u32 2131351028, %v869
      %v879 = vshrl.u32 2102212464, %v870
      %v880 = vor.u32 %v878, %v879
      %v881 = vshll.u32 2102212464, %v869
      %v882 = vshrl.u32 920167782, %v870
      %v883 = vor.u32 %v881, %v882
      %v884 = vshll.u32 920167782, %v869
      %v885 = vshrl.u32 1326507024, %v870
      %v886 = vor.u32 %v884, %v885
      %vm887 = vcmp.lt.s32.totalorder %v868, 1
      %vm888 = vcmp.lt.s32.totalorder %v868, 2
      %vm889 = vcmp.lt.s32.totalorder %v868, 3
      %vm890 = vcmp.lt.s32.totalorder %v868, 4
      %v891 = vsel %vm887, %v871, %v874
      %v892 = vsel %vm890, %v880, 2102212464
      %v893 = vsel %vm889, %v877, %v892
      %v894 = vsel %vm888, %v891, %v893
      %v895 = vsel %vm887, %v874, %v877
      %v896 = vsel %vm890, %v883, 920167782
      %v897 = vsel %vm889, %v880, %v896
      %v898 = vsel %vm888, %v895, %v897
      %v899 = vsel %vm887, %v877, %v880
      %v900 = vsel %vm890, %v886, 1326507024
      %v901 = vsel %vm889, %v883, %v900
      %v902 = vsel %vm888, %v899, %v901
      %v903 = vshll.u32 %v863, 8
      %v904 = vmul.u32.u64.compose %v903, %v902
      %v905 = vextract.low.u32 %v904
      %v906 = vextract.high.u32 %v904
      %v907 = vmul.u32.u64.compose %v903, %v898
      %v908 = vextract.low.u32 %v907
      %v909 = vextract.high.u32 %v907
      %v910 = vmul.u32 %v903, %v894
      %v911 = vadd.s32 %v906, %v908
      %vm912 = vc.u32 %v906, %v908
      %v913 = vadd.s32 %v909, 1
      %v914 = vsel %vm912, %v913, %v909
      %v915 = vadd.s32 %v910, %v914
      %v916 = vadd.s32 %v915, 536870912
      %v917 = vshrl.u32 %v916, 30
      %v918 = vshll.u32 %v917, 30
      %v919 = vsub.s32 %v915, %v918
      %vm920 = vcmp.lt.s32.totalorder %v919, 0
      %v921 = vsub.s32 0, %v919
      %v922 = vsel %vm920, %v921, %v919
      %v923 = vclz %v922
      %v924 = vsub.s32 %v923, 2
      %vm925 = vcmp.gt.s32.totalorder 0, %v924
      %v926 = vsel %vm925, 0, %v924
      %v927 = vsub.s32 32, %v926
      %v928 = vshll.u32 %v919, %v926
      %v929 = vshrl.u32 %v911, %v927
      %v930 = vor.u32 %v928, %v929
      %v931 = vsub.s32 4294967266, %v926
      %v932 = vadd.s32 %v931, 127
      %v933 = vshll.u32 %v932, 23
      %v934 = vor.u32 4788187, %v933
      %v935 = vand.u32 2147483647, %v934
      %v937 = vcvt.s32.f32 %v930
      %v938 = vmul.f32 %v937, %v935
      %v939 = vxor.u32 %v938, 2147483648
      %v940 = vsel %vm857, %v939, %v938
      %v941 = vsub.s32 4, %v917
      %v942 = vsel %vm857, %v941, %v917
      %v943 = vsel %vm856, %v720, %v940
      %v944 = vsel %vm856, 0, %v942
      %v945 = vcosq.f32.pop %v943
      %v946 = vsinq.f32.pop %v943
      %vm947 = vweird.f32 %v720
      %v948 = vadd.s32 %v944, 3
      %v949 = vand.u32 %v948, 3
      %vm950 = vcmp.lt.s32.totalorder %v949, 2
      %vm951 = vcmp.eq.s32.totalorder %v949, 0
      %v952 = vxor.u32 %v946, 2147483648
      %v953 = vsel %vm951, %v945, %v952
      %vm954 = vcmp.eq.s32.totalorder %v949, 2
      %v955 = vxor.u32 %v945, 2147483648
      %v956 = vsel %vm954, %v955, %v946
      %v957 = vsel %vm950, %v953, %v956
      %v958 = vsel %vm947, nan, %v957
      %v959 = vand.u32 2147483647, %v721
      %vm960 = vcmp.le.f32.partialorder %v959, 0.7853982
      %vm961 = vcmp.lt.s32.totalorder %v721, 0
      %v962 = vand.u32 %v721, 2139095040
      %v963 = vshrl.u32 %v962, 23
      %v964 = vsub.s32 %v963, 127
      %v965 = vand.u32 2147483647, %v721
      %v966 = vand.u32 %v965, 8388607
      %v967 = vor.u32 %v966, 8388608
      %v968 = vsub.s32 0, %v967
      %v969 = vadd.s32 %v964, 1
      %vm970 = vcmp.gt.s32.totalorder %v969, 0
      %v971 = vsel %vm970, %v969, 0
      %v972 = vshrl.u32 %v971, 5
      %v973 = vand.u32 %v971, 31
      %v974 = vsub.s32 32, %v973
      %v975 = vshrl.u32 683565275, %v974
      %v976 = vshll.u32 683565275, %v973
      %v977 = vshrl.u32 2475754826, %v974
      %v978 = vor.u32 %v976, %v977
      %v979 = vshll.u32 2475754826, %v973
      %v980 = vshrl.u32 2131351028, %v974
      %v981 = vor.u32 %v979, %v980
      %v982 = vshll.u32 2131351028, %v973
      %v983 = vshrl.u32 2102212464, %v974
      %v984 = vor.u32 %v982, %v983
      %v985 = vshll.u32 2102212464, %v973
      %v986 = vshrl.u32 920167782, %v974
      %v987 = vor.u32 %v985, %v986
      %v988 = vshll.u32 920167782, %v973
      %v989 = vshrl.u32 1326507024, %v974
      %v990 = vor.u32 %v988, %v989
      %vm991 = vcmp.lt.s32.totalorder %v972, 1
      %vm992 = vcmp.lt.s32.totalorder %v972, 2
      %vm993 = vcmp.lt.s32.totalorder %v972, 3
      %vm994 = vcmp.lt.s32.totalorder %v972, 4
      %v995 = vsel %vm991, %v975, %v978
      %v996 = vsel %vm994, %v984, 2102212464
      %v997 = vsel %vm993, %v981, %v996
      %v998 = vsel %vm992, %v995, %v997
      %v999 = vsel %vm991, %v978, %v981
      %v1000 = vsel %vm994, %v987, 920167782
      %v1001 = vsel %vm993, %v984, %v1000
      %v1002 = vsel %vm992, %v999, %v1001
      %v1003 = vsel %vm991, %v981, %v984
      %v1004 = vsel %vm994, %v990, 1326507024
      %v1005 = vsel %vm993, %v987, %v1004
      %v1006 = vsel %vm992, %v1003, %v1005
      %v1007 = vshll.u32 %v967, 8
      %v1008 = vmul.u32.u64.compose %v1007, %v1006
      %v1009 = vextract.low.u32 %v1008
      %v1010 = vextract.high.u32 %v1008
      %v1011 = vmul.u32.u64.compose %v1007, %v1002
      %v1012 = vextract.low.u32 %v1011
      %v1013 = vextract.high.u32 %v1011
      %v1014 = vmul.u32 %v1007, %v998
      %v1015 = vadd.s32 %v1010, %v1012
      %vm1016 = vc.u32 %v1010, %v1012
      %v1017 = vadd.s32 %v1013, 1
      %v1018 = vsel %vm1016, %v1017, %v1013
      %v1019 = vadd.s32 %v1014, %v1018
      %v1020 = vadd.s32 %v1019, 536870912
      %v1021 = vshrl.u32 %v1020, 30
      %v1022 = vshll.u32 %v1021, 30
      %v1023 = vsub.s32 %v1019, %v1022
      %vm1024 = vcmp.lt.s32.totalorder %v1023, 0
      %v1025 = vsub.s32 0, %v1023
      %v1026 = vsel %vm1024, %v1025, %v1023
      %v1027 = vclz %v1026
      %v1028 = vsub.s32 %v1027, 2
      %vm1029 = vcmp.gt.s32.totalorder 0, %v1028
      %v1030 = vsel %vm1029, 0, %v1028
      %v1031 = vsub.s32 32, %v1030
      %v1032 = vshll.u32 %v1023, %v1030
      %v1033 = vshrl.u32 %v1015, %v1031
      %v1034 = vor.u32 %v1032, %v1033
      %v1035 = vsub.s32 4294967266, %v1030
      %v1036 = vadd.s32 %v1035, 127
      %v1037 = vshll.u32 %v1036, 23
      %v1038 = vor.u32 4788187, %v1037
      %v1039 = vand.u32 2147483647, %v1038
      %v1041 = vcvt.s32.f32 %v1034
      %v1042 = vmul.f32 %v1041, %v1039
      %v1043 = vxor.u32 %v1042, 2147483648
      %v1044 = vsel %vm961, %v1043, %v1042
      %v1045 = vsub.s32 4, %v1021
      %v1046 = vsel %vm961, %v1045, %v1021
      %v1047 = vsel %vm960, %v721, %v1044
      %v1048 = vsel %vm960, 0, %v1046
      %v1049 = vcosq.f32.pop %v1047
      %v1050 = vsinq.f32.pop %v1047
      %vm1051 = vweird.f32 %v721
      %v1052 = vadd.s32 %v1048, 3
      %v1053 = vand.u32 %v1052, 3
      %vm1054 = vcmp.lt.s32.totalorder %v1053, 2
      %vm1055 = vcmp.eq.s32.totalorder %v1053, 0
      %v1056 = vxor.u32 %v1050, 2147483648
      %v1057 = vsel %vm1055, %v1049, %v1056
      %vm1058 = vcmp.eq.s32.totalorder %v1053, 2
      %v1059 = vxor.u32 %v1049, 2147483648
      %v1060 = vsel %vm1058, %v1059, %v1050
      %v1061 = vsel %vm1054, %v1057, %v1060
      %v1062 = vsel %vm1051, nan, %v1061
      %v1063 = vand.u32 2147483647, %v722
      %vm1064 = vcmp.le.f32.partialorder %v1063, 0.7853982
      %vm1065 = vcmp.lt.s32.totalorder %v722, 0
      %v1066 = vand.u32 %v722, 2139095040
      %v1067 = vshrl.u32 %v1066, 23
      %v1068 = vsub.s32 %v1067, 127
      %v1069 = vand.u32 2147483647, %v722
      %v1070 = vand.u32 %v1069, 8388607
      %v1071 = vor.u32 %v1070, 8388608
      %v1072 = vsub.s32 0, %v1071
      %v1073 = vadd.s32 %v1068, 1
      %vm1074 = vcmp.gt.s32.totalorder %v1073, 0
      %v1075 = vsel %vm1074, %v1073, 0
      %v1076 = vshrl.u32 %v1075, 5
      %v1077 = vand.u32 %v1075, 31
      %v1078 = vsub.s32 32, %v1077
      %v1079 = vshrl.u32 683565275, %v1078
      %v1080 = vshll.u32 683565275, %v1077
      %v1081 = vshrl.u32 2475754826, %v1078
      %v1082 = vor.u32 %v1080, %v1081
      %v1083 = vshll.u32 2475754826, %v1077
      %v1084 = vshrl.u32 2131351028, %v1078
      %v1085 = vor.u32 %v1083, %v1084
      %v1086 = vshll.u32 2131351028, %v1077
      %v1087 = vshrl.u32 2102212464, %v1078
      %v1088 = vor.u32 %v1086, %v1087
      %v1089 = vshll.u32 2102212464, %v1077
      %v1090 = vshrl.u32 920167782, %v1078
      %v1091 = vor.u32 %v1089, %v1090
      %v1092 = vshll.u32 920167782, %v1077
      %v1093 = vshrl.u32 1326507024, %v1078
      %v1094 = vor.u32 %v1092, %v1093
      %vm1095 = vcmp.lt.s32.totalorder %v1076, 1
      %vm1096 = vcmp.lt.s32.totalorder %v1076, 2
      %vm1097 = vcmp.lt.s32.totalorder %v1076, 3
      %vm1098 = vcmp.lt.s32.totalorder %v1076, 4
      %v1099 = vsel %vm1095, %v1079, %v1082
      %v1100 = vsel %vm1098, %v1088, 2102212464
      %v1101 = vsel %vm1097, %v1085, %v1100
      %v1102 = vsel %vm1096, %v1099, %v1101
      %v1103 = vsel %vm1095, %v1082, %v1085
      %v1104 = vsel %vm1098, %v1091, 920167782
      %v1105 = vsel %vm1097, %v1088, %v1104
      %v1106 = vsel %vm1096, %v1103, %v1105
      %v1107 = vsel %vm1095, %v1085, %v1088
      %v1108 = vsel %vm1098, %v1094, 1326507024
      %v1109 = vsel %vm1097, %v1091, %v1108
      %v1110 = vsel %vm1096, %v1107, %v1109
      %v1111 = vshll.u32 %v1071, 8
      %v1112 = vmul.u32.u64.compose %v1111, %v1110
      %v1113 = vextract.low.u32 %v1112
      %v1114 = vextract.high.u32 %v1112
      %v1115 = vmul.u32.u64.compose %v1111, %v1106
      %v1116 = vextract.low.u32 %v1115
      %v1117 = vextract.high.u32 %v1115
      %v1118 = vmul.u32 %v1111, %v1102
      %v1119 = vadd.s32 %v1114, %v1116
      %vm1120 = vc.u32 %v1114, %v1116
      %v1121 = vadd.s32 %v1117, 1
      %v1122 = vsel %vm1120, %v1121, %v1117
      %v1123 = vadd.s32 %v1118, %v1122
      %v1124 = vadd.s32 %v1123, 536870912
      %v1125 = vshrl.u32 %v1124, 30
      %v1126 = vshll.u32 %v1125, 30
      %v1127 = vsub.s32 %v1123, %v1126
      %vm1128 = vcmp.lt.s32.totalorder %v1127, 0
      %v1129 = vsub.s32 0, %v1127
      %v1130 = vsel %vm1128, %v1129, %v1127
      %v1131 = vclz %v1130
      %v1132 = vsub.s32 %v1131, 2
      %vm1133 = vcmp.gt.s32.totalorder 0, %v1132
      %v1134 = vsel %vm1133, 0, %v1132
      %v1135 = vsub.s32 32, %v1134
      %v1136 = vshll.u32 %v1127, %v1134
      %v1137 = vshrl.u32 %v1119, %v1135
      %v1138 = vor.u32 %v1136, %v1137
      %v1139 = vsub.s32 4294967266, %v1134
      %v1140 = vadd.s32 %v1139, 127
      %v1141 = vshll.u32 %v1140, 23
      %v1142 = vor.u32 4788187, %v1141
      %v1143 = vand.u32 2147483647, %v1142
      %v1145 = vcvt.s32.f32 %v1138
      %v1146 = vmul.f32 %v1145, %v1143
      %v1147 = vxor.u32 %v1146, 2147483648
      %v1148 = vsel %vm1065, %v1147, %v1146
      %v1149 = vsub.s32 4, %v1125
      %v1150 = vsel %vm1065, %v1149, %v1125
      %v1151 = vsel %vm1064, %v722, %v1148
      %v1152 = vsel %vm1064, 0, %v1150
      %v1153 = vcosq.f32.pop %v1151
      %v1154 = vsinq.f32.pop %v1151
      %vm1155 = vweird.f32 %v722
      %v1156 = vadd.s32 %v1152, 3
      %v1157 = vand.u32 %v1156, 3
      %vm1158 = vcmp.lt.s32.totalorder %v1157, 2
      %vm1159 = vcmp.eq.s32.totalorder %v1157, 0
      %v1160 = vxor.u32 %v1154, 2147483648
      %v1161 = vsel %vm1159, %v1153, %v1160
      %vm1162 = vcmp.eq.s32.totalorder %v1157, 2
      %v1163 = vxor.u32 %v1153, 2147483648
      %v1164 = vsel %vm1162, %v1163, %v1154
      %v1165 = vsel %vm1158, %v1161, %v1164
      %v1166 = vsel %vm1155, nan, %v1165
      %v1167 = vand.u32 2147483647, %v723
      %vm1168 = vcmp.le.f32.partialorder %v1167, 0.7853982
      %vm1169 = vcmp.lt.s32.totalorder %v723, 0
      %v1170 = vand.u32 %v723, 2139095040
      %v1171 = vshrl.u32 %v1170, 23
      %v1172 = vsub.s32 %v1171, 127
      %v1173 = vand.u32 2147483647, %v723
      %v1174 = vand.u32 %v1173, 8388607
      %v1175 = vor.u32 %v1174, 8388608
      %v1176 = vsub.s32 0, %v1175
      %v1177 = vadd.s32 %v1172, 1
      %vm1178 = vcmp.gt.s32.totalorder %v1177, 0
      %v1179 = vsel %vm1178, %v1177, 0
      %v1180 = vshrl.u32 %v1179, 5
      %v1181 = vand.u32 %v1179, 31
      %v1182 = vsub.s32 32, %v1181
      %v1183 = vshrl.u32 683565275, %v1182
      %v1184 = vshll.u32 683565275, %v1181
      %v1185 = vshrl.u32 2475754826, %v1182
      %v1186 = vor.u32 %v1184, %v1185
      %v1187 = vshll.u32 2475754826, %v1181
      %v1188 = vshrl.u32 2131351028, %v1182
      %v1189 = vor.u32 %v1187, %v1188
      %v1190 = vshll.u32 2131351028, %v1181
      %v1191 = vshrl.u32 2102212464, %v1182
      %v1192 = vor.u32 %v1190, %v1191
      %v1193 = vshll.u32 2102212464, %v1181
      %v1194 = vshrl.u32 920167782, %v1182
      %v1195 = vor.u32 %v1193, %v1194
      %v1196 = vshll.u32 920167782, %v1181
      %v1197 = vshrl.u32 1326507024, %v1182
      %v1198 = vor.u32 %v1196, %v1197
      %vm1199 = vcmp.lt.s32.totalorder %v1180, 1
      %vm1200 = vcmp.lt.s32.totalorder %v1180, 2
      %vm1201 = vcmp.lt.s32.totalorder %v1180, 3
      %vm1202 = vcmp.lt.s32.totalorder %v1180, 4
      %v1203 = vsel %vm1199, %v1183, %v1186
      %v1204 = vsel %vm1202, %v1192, 2102212464
      %v1205 = vsel %vm1201, %v1189, %v1204
      %v1206 = vsel %vm1200, %v1203, %v1205
      %v1207 = vsel %vm1199, %v1186, %v1189
      %v1208 = vsel %vm1202, %v1195, 920167782
      %v1209 = vsel %vm1201, %v1192, %v1208
      %v1210 = vsel %vm1200, %v1207, %v1209
      %v1211 = vsel %vm1199, %v1189, %v1192
      %v1212 = vsel %vm1202, %v1198, 1326507024
      %v1213 = vsel %vm1201, %v1195, %v1212
      %v1214 = vsel %vm1200, %v1211, %v1213
      %v1215 = vshll.u32 %v1175, 8
      %v1216 = vmul.u32.u64.compose %v1215, %v1214
      %v1217 = vextract.low.u32 %v1216
      %v1218 = vextract.high.u32 %v1216
      %v1219 = vmul.u32.u64.compose %v1215, %v1210
      %v1220 = vextract.low.u32 %v1219
      %v1221 = vextract.high.u32 %v1219
      %v1222 = vmul.u32 %v1215, %v1206
      %v1223 = vadd.s32 %v1218, %v1220
      %vm1224 = vc.u32 %v1218, %v1220
      %v1225 = vadd.s32 %v1221, 1
      %v1226 = vsel %vm1224, %v1225, %v1221
      %v1227 = vadd.s32 %v1222, %v1226
      %v1228 = vadd.s32 %v1227, 536870912
      %v1229 = vshrl.u32 %v1228, 30
      %v1230 = vshll.u32 %v1229, 30
      %v1231 = vsub.s32 %v1227, %v1230
      %vm1232 = vcmp.lt.s32.totalorder %v1231, 0
      %v1233 = vsub.s32 0, %v1231
      %v1234 = vsel %vm1232, %v1233, %v1231
      %v1235 = vclz %v1234
      %v1236 = vsub.s32 %v1235, 2
      %vm1237 = vcmp.gt.s32.totalorder 0, %v1236
      %v1238 = vsel %vm1237, 0, %v1236
      %v1239 = vsub.s32 32, %v1238
      %v1240 = vshll.u32 %v1231, %v1238
      %v1241 = vshrl.u32 %v1223, %v1239
      %v1242 = vor.u32 %v1240, %v1241
      %v1243 = vsub.s32 4294967266, %v1238
      %v1244 = vadd.s32 %v1243, 127
      %v1245 = vshll.u32 %v1244, 23
      %v1246 = vor.u32 4788187, %v1245
      %v1247 = vand.u32 2147483647, %v1246
      %v1249 = vcvt.s32.f32 %v1242
      %v1250 = vmul.f32 %v1249, %v1247
      %v1251 = vxor.u32 %v1250, 2147483648
      %v1252 = vsel %vm1169, %v1251, %v1250
      %v1253 = vsub.s32 4, %v1229
      %v1254 = vsel %vm1169, %v1253, %v1229
      %v1255 = vsel %vm1168, %v723, %v1252
      %v1256 = vsel %vm1168, 0, %v1254
      %v1257 = vcosq.f32.pop %v1255
      %v1258 = vsinq.f32.pop %v1255
      %vm1259 = vweird.f32 %v723
      %v1260 = vadd.s32 %v1256, 3
      %v1261 = vand.u32 %v1260, 3
      %vm1262 = vcmp.lt.s32.totalorder %v1261, 2
      %vm1263 = vcmp.eq.s32.totalorder %v1261, 0
      %v1264 = vxor.u32 %v1258, 2147483648
      %v1265 = vsel %vm1263, %v1257, %v1264
      %vm1266 = vcmp.eq.s32.totalorder %v1261, 2
      %v1267 = vxor.u32 %v1257, 2147483648
      %v1268 = vsel %vm1266, %v1267, %v1258
      %v1269 = vsel %vm1262, %v1265, %v1268
      %v1270 = vsel %vm1259, nan, %v1269
      %v1271 = vand.u32 2147483647, %v724
      %vm1272 = vcmp.le.f32.partialorder %v1271, 0.7853982
      %vm1273 = vcmp.lt.s32.totalorder %v724, 0
      %v1274 = vand.u32 %v724, 2139095040
      %v1275 = vshrl.u32 %v1274, 23
      %v1276 = vsub.s32 %v1275, 127
      %v1277 = vand.u32 2147483647, %v724
      %v1278 = vand.u32 %v1277, 8388607
      %v1279 = vor.u32 %v1278, 8388608
      %v1280 = vsub.s32 0, %v1279
      %v1281 = vadd.s32 %v1276, 1
      %vm1282 = vcmp.gt.s32.totalorder %v1281, 0
      %v1283 = vsel %vm1282, %v1281, 0
      %v1284 = vshrl.u32 %v1283, 5
      %v1285 = vand.u32 %v1283, 31
      %v1286 = vsub.s32 32, %v1285
      %v1287 = vshrl.u32 683565275, %v1286
      %v1288 = vshll.u32 683565275, %v1285
      %v1289 = vshrl.u32 2475754826, %v1286
      %v1290 = vor.u32 %v1288, %v1289
      %v1291 = vshll.u32 2475754826, %v1285
      %v1292 = vshrl.u32 2131351028, %v1286
      %v1293 = vor.u32 %v1291, %v1292
      %v1294 = vshll.u32 2131351028, %v1285
      %v1295 = vshrl.u32 2102212464, %v1286
      %v1296 = vor.u32 %v1294, %v1295
      %v1297 = vshll.u32 2102212464, %v1285
      %v1298 = vshrl.u32 920167782, %v1286
      %v1299 = vor.u32 %v1297, %v1298
      %v1300 = vshll.u32 920167782, %v1285
      %v1301 = vshrl.u32 1326507024, %v1286
      %v1302 = vor.u32 %v1300, %v1301
      %vm1303 = vcmp.lt.s32.totalorder %v1284, 1
      %vm1304 = vcmp.lt.s32.totalorder %v1284, 2
      %vm1305 = vcmp.lt.s32.totalorder %v1284, 3
      %vm1306 = vcmp.lt.s32.totalorder %v1284, 4
      %v1307 = vsel %vm1303, %v1287, %v1290
      %v1308 = vsel %vm1306, %v1296, 2102212464
      %v1309 = vsel %vm1305, %v1293, %v1308
      %v1310 = vsel %vm1304, %v1307, %v1309
      %v1311 = vsel %vm1303, %v1290, %v1293
      %v1312 = vsel %vm1306, %v1299, 920167782
      %v1313 = vsel %vm1305, %v1296, %v1312
      %v1314 = vsel %vm1304, %v1311, %v1313
      %v1315 = vsel %vm1303, %v1293, %v1296
      %v1316 = vsel %vm1306, %v1302, 1326507024
      %v1317 = vsel %vm1305, %v1299, %v1316
      %v1318 = vsel %vm1304, %v1315, %v1317
      %v1319 = vshll.u32 %v1279, 8
      %v1320 = vmul.u32.u64.compose %v1319, %v1318
      %v1321 = vextract.low.u32 %v1320
      %v1322 = vextract.high.u32 %v1320
      %v1323 = vmul.u32.u64.compose %v1319, %v1314
      %v1324 = vextract.low.u32 %v1323
      %v1325 = vextract.high.u32 %v1323
      %v1326 = vmul.u32 %v1319, %v1310
      %v1327 = vadd.s32 %v1322, %v1324
      %vm1328 = vc.u32 %v1322, %v1324
      %v1329 = vadd.s32 %v1325, 1
      %v1330 = vsel %vm1328, %v1329, %v1325
      %v1331 = vadd.s32 %v1326, %v1330
      %v1332 = vadd.s32 %v1331, 536870912
      %v1333 = vshrl.u32 %v1332, 30
      %v1334 = vshll.u32 %v1333, 30
      %v1335 = vsub.s32 %v1331, %v1334
      %vm1336 = vcmp.lt.s32.totalorder %v1335, 0
      %v1337 = vsub.s32 0, %v1335
      %v1338 = vsel %vm1336, %v1337, %v1335
      %v1339 = vclz %v1338
      %v1340 = vsub.s32 %v1339, 2
      %vm1341 = vcmp.gt.s32.totalorder 0, %v1340
      %v1342 = vsel %vm1341, 0, %v1340
      %v1343 = vsub.s32 32, %v1342
      %v1344 = vshll.u32 %v1335, %v1342
      %v1345 = vshrl.u32 %v1327, %v1343
      %v1346 = vor.u32 %v1344, %v1345
      %v1347 = vsub.s32 4294967266, %v1342
      %v1348 = vadd.s32 %v1347, 127
      %v1349 = vshll.u32 %v1348, 23
      %v1350 = vor.u32 4788187, %v1349
      %v1351 = vand.u32 2147483647, %v1350
      %v1353 = vcvt.s32.f32 %v1346
      %v1354 = vmul.f32 %v1353, %v1351
      %v1355 = vxor.u32 %v1354, 2147483648
      %v1356 = vsel %vm1273, %v1355, %v1354
      %v1357 = vsub.s32 4, %v1333
      %v1358 = vsel %vm1273, %v1357, %v1333
      %v1359 = vsel %vm1272, %v724, %v1356
      %v1360 = vsel %vm1272, 0, %v1358
      %v1361 = vcosq.f32.pop %v1359
      %v1362 = vsinq.f32.pop %v1359
      %vm1363 = vweird.f32 %v724
      %v1364 = vadd.s32 %v1360, 3
      %v1365 = vand.u32 %v1364, 3
      %vm1366 = vcmp.lt.s32.totalorder %v1365, 2
      %vm1367 = vcmp.eq.s32.totalorder %v1365, 0
      %v1368 = vxor.u32 %v1362, 2147483648
      %v1369 = vsel %vm1367, %v1361, %v1368
      %vm1370 = vcmp.eq.s32.totalorder %v1365, 2
      %v1371 = vxor.u32 %v1361, 2147483648
      %v1372 = vsel %vm1370, %v1371, %v1362
      %v1373 = vsel %vm1366, %v1369, %v1372
      %v1374 = vsel %vm1363, nan, %v1373
      %v1375 = vand.u32 2147483647, %v725
      %vm1376 = vcmp.le.f32.partialorder %v1375, 0.7853982
      %vm1377 = vcmp.lt.s32.totalorder %v725, 0
      %v1378 = vand.u32 %v725, 2139095040
      %v1379 = vshrl.u32 %v1378, 23
      %v1380 = vsub.s32 %v1379, 127
      %v1381 = vand.u32 2147483647, %v725
      %v1382 = vand.u32 %v1381, 8388607
      %v1383 = vor.u32 %v1382, 8388608
      %v1384 = vsub.s32 0, %v1383
      %v1385 = vadd.s32 %v1380, 1
      %vm1386 = vcmp.gt.s32.totalorder %v1385, 0
      %v1387 = vsel %vm1386, %v1385, 0
      %v1388 = vshrl.u32 %v1387, 5
      %v1389 = vand.u32 %v1387, 31
      %v1390 = vsub.s32 32, %v1389
      %v1391 = vshrl.u32 683565275, %v1390
      %v1392 = vshll.u32 683565275, %v1389
      %v1393 = vshrl.u32 2475754826, %v1390
      %v1394 = vor.u32 %v1392, %v1393
      %v1395 = vshll.u32 2475754826, %v1389
      %v1396 = vshrl.u32 2131351028, %v1390
      %v1397 = vor.u32 %v1395, %v1396
      %v1398 = vshll.u32 2131351028, %v1389
      %v1399 = vshrl.u32 2102212464, %v1390
      %v1400 = vor.u32 %v1398, %v1399
      %v1401 = vshll.u32 2102212464, %v1389
      %v1402 = vshrl.u32 920167782, %v1390
      %v1403 = vor.u32 %v1401, %v1402
      %v1404 = vshll.u32 920167782, %v1389
      %v1405 = vshrl.u32 1326507024, %v1390
      %v1406 = vor.u32 %v1404, %v1405
      %vm1407 = vcmp.lt.s32.totalorder %v1388, 1
      %vm1408 = vcmp.lt.s32.totalorder %v1388, 2
      %vm1409 = vcmp.lt.s32.totalorder %v1388, 3
      %vm1410 = vcmp.lt.s32.totalorder %v1388, 4
      %v1411 = vsel %vm1407, %v1391, %v1394
      %v1412 = vsel %vm1410, %v1400, 2102212464
      %v1413 = vsel %vm1409, %v1397, %v1412
      %v1414 = vsel %vm1408, %v1411, %v1413
      %v1415 = vsel %vm1407, %v1394, %v1397
      %v1416 = vsel %vm1410, %v1403, 920167782
      %v1417 = vsel %vm1409, %v1400, %v1416
      %v1418 = vsel %vm1408, %v1415, %v1417
      %v1419 = vsel %vm1407, %v1397, %v1400
      %v1420 = vsel %vm1410, %v1406, 1326507024
      %v1421 = vsel %vm1409, %v1403, %v1420
      %v1422 = vsel %vm1408, %v1419, %v1421
      %v1423 = vshll.u32 %v1383, 8
      %v1424 = vmul.u32.u64.compose %v1423, %v1422
      %v1425 = vextract.low.u32 %v1424
      %v1426 = vextract.high.u32 %v1424
      %v1427 = vmul.u32.u64.compose %v1423, %v1418
      %v1428 = vextract.low.u32 %v1427
      %v1429 = vextract.high.u32 %v1427
      %v1430 = vmul.u32 %v1423, %v1414
      %v1431 = vadd.s32 %v1426, %v1428
      %vm1432 = vc.u32 %v1426, %v1428
      %v1433 = vadd.s32 %v1429, 1
      %v1434 = vsel %vm1432, %v1433, %v1429
      %v1435 = vadd.s32 %v1430, %v1434
      %v1436 = vadd.s32 %v1435, 536870912
      %v1437 = vshrl.u32 %v1436, 30
      %v1438 = vshll.u32 %v1437, 30
      %v1439 = vsub.s32 %v1435, %v1438
      %vm1440 = vcmp.lt.s32.totalorder %v1439, 0
      %v1441 = vsub.s32 0, %v1439
      %v1442 = vsel %vm1440, %v1441, %v1439
      %v1443 = vclz %v1442
      %v1444 = vsub.s32 %v1443, 2
      %vm1445 = vcmp.gt.s32.totalorder 0, %v1444
      %v1446 = vsel %vm1445, 0, %v1444
      %v1447 = vsub.s32 32, %v1446
      %v1448 = vshll.u32 %v1439, %v1446
      %v1449 = vshrl.u32 %v1431, %v1447
      %v1450 = vor.u32 %v1448, %v1449
      %v1451 = vsub.s32 4294967266, %v1446
      %v1452 = vadd.s32 %v1451, 127
      %v1453 = vshll.u32 %v1452, 23
      %v1454 = vor.u32 4788187, %v1453
      %v1455 = vand.u32 2147483647, %v1454
      %v1457 = vcvt.s32.f32 %v1450
      %v1458 = vmul.f32 %v1457, %v1455
      %v1459 = vxor.u32 %v1458, 2147483648
      %v1460 = vsel %vm1377, %v1459, %v1458
      %v1461 = vsub.s32 4, %v1437
      %v1462 = vsel %vm1377, %v1461, %v1437
      %v1463 = vsel %vm1376, %v725, %v1460
      %v1464 = vsel %vm1376, 0, %v1462
      %v1465 = vcosq.f32.pop %v1463
      %v1466 = vsinq.f32.pop %v1463
      %vm1467 = vweird.f32 %v725
      %v1468 = vadd.s32 %v1464, 3
      %v1469 = vand.u32 %v1468, 3
      %vm1470 = vcmp.lt.s32.totalorder %v1469, 2
      %vm1471 = vcmp.eq.s32.totalorder %v1469, 0
      %v1472 = vxor.u32 %v1466, 2147483648
      %v1473 = vsel %vm1471, %v1465, %v1472
      %vm1474 = vcmp.eq.s32.totalorder %v1469, 2
      %v1475 = vxor.u32 %v1465, 2147483648
      %v1476 = vsel %vm1474, %v1475, %v1466
      %v1477 = vsel %vm1470, %v1473, %v1476
      %v1478 = vsel %vm1467, nan, %v1477
      %v1479 = vand.u32 2147483647, %v726
      %vm1480 = vcmp.le.f32.partialorder %v1479, 0.7853982
      %vm1481 = vcmp.lt.s32.totalorder %v726, 0
      %v1482 = vand.u32 %v726, 2139095040
      %v1483 = vshrl.u32 %v1482, 23
      %v1484 = vsub.s32 %v1483, 127
      %v1485 = vand.u32 2147483647, %v726
      %v1486 = vand.u32 %v1485, 8388607
      %v1487 = vor.u32 %v1486, 8388608
      %v1488 = vsub.s32 0, %v1487
      %v1489 = vadd.s32 %v1484, 1
      %vm1490 = vcmp.gt.s32.totalorder %v1489, 0
      %v1491 = vsel %vm1490, %v1489, 0
      %v1492 = vshrl.u32 %v1491, 5
      %v1493 = vand.u32 %v1491, 31
      %v1494 = vsub.s32 32, %v1493
      %v1495 = vshrl.u32 683565275, %v1494
      %v1496 = vshll.u32 683565275, %v1493
      %v1497 = vshrl.u32 2475754826, %v1494
      %v1498 = vor.u32 %v1496, %v1497
      %v1499 = vshll.u32 2475754826, %v1493
      %v1500 = vshrl.u32 2131351028, %v1494
      %v1501 = vor.u32 %v1499, %v1500
      %v1502 = vshll.u32 2131351028, %v1493
      %v1503 = vshrl.u32 2102212464, %v1494
      %v1504 = vor.u32 %v1502, %v1503
      %v1505 = vshll.u32 2102212464, %v1493
      %v1506 = vshrl.u32 920167782, %v1494
      %v1507 = vor.u32 %v1505, %v1506
      %v1508 = vshll.u32 920167782, %v1493
      %v1509 = vshrl.u32 1326507024, %v1494
      %v1510 = vor.u32 %v1508, %v1509
      %vm1511 = vcmp.lt.s32.totalorder %v1492, 1
      %vm1512 = vcmp.lt.s32.totalorder %v1492, 2
      %vm1513 = vcmp.lt.s32.totalorder %v1492, 3
      %vm1514 = vcmp.lt.s32.totalorder %v1492, 4
      %v1515 = vsel %vm1511, %v1495, %v1498
      %v1516 = vsel %vm1514, %v1504, 2102212464
      %v1517 = vsel %vm1513, %v1501, %v1516
      %v1518 = vsel %vm1512, %v1515, %v1517
      %v1519 = vsel %vm1511, %v1498, %v1501
      %v1520 = vsel %vm1514, %v1507, 920167782
      %v1521 = vsel %vm1513, %v1504, %v1520
      %v1522 = vsel %vm1512, %v1519, %v1521
      %v1523 = vsel %vm1511, %v1501, %v1504
      %v1524 = vsel %vm1514, %v1510, 1326507024
      %v1525 = vsel %vm1513, %v1507, %v1524
      %v1526 = vsel %vm1512, %v1523, %v1525
      %v1527 = vshll.u32 %v1487, 8
      %v1528 = vmul.u32.u64.compose %v1527, %v1526
      %v1529 = vextract.low.u32 %v1528
      %v1530 = vextract.high.u32 %v1528
      %v1531 = vmul.u32.u64.compose %v1527, %v1522
      %v1532 = vextract.low.u32 %v1531
      %v1533 = vextract.high.u32 %v1531
      %v1534 = vmul.u32 %v1527, %v1518
      %v1535 = vadd.s32 %v1530, %v1532
      %vm1536 = vc.u32 %v1530, %v1532
      %v1537 = vadd.s32 %v1533, 1
      %v1538 = vsel %vm1536, %v1537, %v1533
      %v1539 = vadd.s32 %v1534, %v1538
      %v1540 = vadd.s32 %v1539, 536870912
      %v1541 = vshrl.u32 %v1540, 30
      %v1542 = vshll.u32 %v1541, 30
      %v1543 = vsub.s32 %v1539, %v1542
      %vm1544 = vcmp.lt.s32.totalorder %v1543, 0
      %v1545 = vsub.s32 0, %v1543
      %v1546 = vsel %vm1544, %v1545, %v1543
      %v1547 = vclz %v1546
      %v1548 = vsub.s32 %v1547, 2
      %vm1549 = vcmp.gt.s32.totalorder 0, %v1548
      %v1550 = vsel %vm1549, 0, %v1548
      %v1551 = vsub.s32 32, %v1550
      %v1552 = vshll.u32 %v1543, %v1550
      %v1553 = vshrl.u32 %v1535, %v1551
      %v1554 = vor.u32 %v1552, %v1553
      %v1555 = vsub.s32 4294967266, %v1550
      %v1556 = vadd.s32 %v1555, 127
      %v1557 = vshll.u32 %v1556, 23
      %v1558 = vor.u32 4788187, %v1557
      %v1559 = vand.u32 2147483647, %v1558
      %v1561 = vcvt.s32.f32 %v1554
      %v1562 = vmul.f32 %v1561, %v1559
      %v1563 = vxor.u32 %v1562, 2147483648
      %v1564 = vsel %vm1481, %v1563, %v1562
      %v1565 = vsub.s32 4, %v1541
      %v1566 = vsel %vm1481, %v1565, %v1541
      %v1567 = vsel %vm1480, %v726, %v1564
      %v1568 = vsel %vm1480, 0, %v1566
      %v1569 = vcosq.f32.pop %v1567
      %v1570 = vsinq.f32.pop %v1567
      %vm1571 = vweird.f32 %v726
      %v1572 = vadd.s32 %v1568, 3
      %v1573 = vand.u32 %v1572, 3
      %vm1574 = vcmp.lt.s32.totalorder %v1573, 2
      %vm1575 = vcmp.eq.s32.totalorder %v1573, 0
      %v1576 = vxor.u32 %v1570, 2147483648
      %v1577 = vsel %vm1575, %v1569, %v1576
      %vm1578 = vcmp.eq.s32.totalorder %v1573, 2
      %v1579 = vxor.u32 %v1569, 2147483648
      %v1580 = vsel %vm1578, %v1579, %v1570
      %v1581 = vsel %vm1574, %v1577, %v1580
      %v1582 = vsel %vm1571, nan, %v1581
      %v1583 = vand.u32 2147483647, %v727
      %vm1584 = vcmp.le.f32.partialorder %v1583, 0.7853982
      %vm1585 = vcmp.lt.s32.totalorder %v727, 0
      %v1586 = vand.u32 %v727, 2139095040
      %v1587 = vshrl.u32 %v1586, 23
      %v1588 = vsub.s32 %v1587, 127
      %v1589 = vand.u32 2147483647, %v727
      %v1590 = vand.u32 %v1589, 8388607
      %v1591 = vor.u32 %v1590, 8388608
      %v1592 = vsub.s32 0, %v1591
      %v1593 = vadd.s32 %v1588, 1
      %vm1594 = vcmp.gt.s32.totalorder %v1593, 0
      %v1595 = vsel %vm1594, %v1593, 0
      %v1596 = vshrl.u32 %v1595, 5
      %v1597 = vand.u32 %v1595, 31
      %v1598 = vsub.s32 32, %v1597
      %v1599 = vshrl.u32 683565275, %v1598
      %v1600 = vshll.u32 683565275, %v1597
      %v1601 = vshrl.u32 2475754826, %v1598
      %v1602 = vor.u32 %v1600, %v1601
      %v1603 = vshll.u32 2475754826, %v1597
      %v1604 = vshrl.u32 2131351028, %v1598
      %v1605 = vor.u32 %v1603, %v1604
      %v1606 = vshll.u32 2131351028, %v1597
      %v1607 = vshrl.u32 2102212464, %v1598
      %v1608 = vor.u32 %v1606, %v1607
      %v1609 = vshll.u32 2102212464, %v1597
      %v1610 = vshrl.u32 920167782, %v1598
      %v1611 = vor.u32 %v1609, %v1610
      %v1612 = vshll.u32 920167782, %v1597
      %v1613 = vshrl.u32 1326507024, %v1598
      %v1614 = vor.u32 %v1612, %v1613
      %vm1615 = vcmp.lt.s32.totalorder %v1596, 1
      %vm1616 = vcmp.lt.s32.totalorder %v1596, 2
      %vm1617 = vcmp.lt.s32.totalorder %v1596, 3
      %vm1618 = vcmp.lt.s32.totalorder %v1596, 4
      %v1619 = vsel %vm1615, %v1599, %v1602
      %v1620 = vsel %vm1618, %v1608, 2102212464
      %v1621 = vsel %vm1617, %v1605, %v1620
      %v1622 = vsel %vm1616, %v1619, %v1621
      %v1623 = vsel %vm1615, %v1602, %v1605
      %v1624 = vsel %vm1618, %v1611, 920167782
      %v1625 = vsel %vm1617, %v1608, %v1624
      %v1626 = vsel %vm1616, %v1623, %v1625
      %v1627 = vsel %vm1615, %v1605, %v1608
      %v1628 = vsel %vm1618, %v1614, 1326507024
      %v1629 = vsel %vm1617, %v1611, %v1628
      %v1630 = vsel %vm1616, %v1627, %v1629
      %v1631 = vshll.u32 %v1591, 8
      %v1632 = vmul.u32.u64.compose %v1631, %v1630
      %v1633 = vextract.low.u32 %v1632
      %v1634 = vextract.high.u32 %v1632
      %v1635 = vmul.u32.u64.compose %v1631, %v1626
      %v1636 = vextract.low.u32 %v1635
      %v1637 = vextract.high.u32 %v1635
      %v1638 = vmul.u32 %v1631, %v1622
      %v1639 = vadd.s32 %v1634, %v1636
      %vm1640 = vc.u32 %v1634, %v1636
      %v1641 = vadd.s32 %v1637, 1
      %v1642 = vsel %vm1640, %v1641, %v1637
      %v1643 = vadd.s32 %v1638, %v1642
      %v1644 = vadd.s32 %v1643, 536870912
      %v1645 = vshrl.u32 %v1644, 30
      %v1646 = vshll.u32 %v1645, 30
      %v1647 = vsub.s32 %v1643, %v1646
      %vm1648 = vcmp.lt.s32.totalorder %v1647, 0
      %v1649 = vsub.s32 0, %v1647
      %v1650 = vsel %vm1648, %v1649, %v1647
      %v1651 = vclz %v1650
      %v1652 = vsub.s32 %v1651, 2
      %vm1653 = vcmp.gt.s32.totalorder 0, %v1652
      %v1654 = vsel %vm1653, 0, %v1652
      %v1655 = vsub.s32 32, %v1654
      %v1656 = vshll.u32 %v1647, %v1654
      %v1657 = vshrl.u32 %v1639, %v1655
      %v1658 = vor.u32 %v1656, %v1657
      %v1659 = vsub.s32 4294967266, %v1654
      %v1660 = vadd.s32 %v1659, 127
      %v1661 = vshll.u32 %v1660, 23
      %v1662 = vor.u32 4788187, %v1661
      %v1663 = vand.u32 2147483647, %v1662
      %v1665 = vcvt.s32.f32 %v1658
      %v1666 = vmul.f32 %v1665, %v1663
      %v1667 = vxor.u32 %v1666, 2147483648
      %v1668 = vsel %vm1585, %v1667, %v1666
      %v1669 = vsub.s32 4, %v1645
      %v1670 = vsel %vm1585, %v1669, %v1645
      %v1671 = vsel %vm1584, %v727, %v1668
      %v1672 = vsel %vm1584, 0, %v1670
      %v1673 = vcosq.f32.pop %v1671
      %v1674 = vsinq.f32.pop %v1671
      %vm1675 = vweird.f32 %v727
      %v1676 = vadd.s32 %v1672, 3
      %v1677 = vand.u32 %v1676, 3
      %vm1678 = vcmp.lt.s32.totalorder %v1677, 2
      %vm1679 = vcmp.eq.s32.totalorder %v1677, 0
      %v1680 = vxor.u32 %v1674, 2147483648
      %v1681 = vsel %vm1679, %v1673, %v1680
      %vm1682 = vcmp.eq.s32.totalorder %v1677, 2
      %v1683 = vxor.u32 %v1673, 2147483648
      %v1684 = vsel %vm1682, %v1683, %v1674
      %v1685 = vsel %vm1678, %v1681, %v1684
      %v1686 = vsel %vm1675, nan, %v1685
      %v1687 = vand.u32 2147483647, %v728
      %vm1688 = vcmp.le.f32.partialorder %v1687, 0.7853982
      %vm1689 = vcmp.lt.s32.totalorder %v728, 0
      %v1690 = vand.u32 %v728, 2139095040
      %v1691 = vshrl.u32 %v1690, 23
      %v1692 = vsub.s32 %v1691, 127
      %v1693 = vand.u32 2147483647, %v728
      %v1694 = vand.u32 %v1693, 8388607
      %v1695 = vor.u32 %v1694, 8388608
      %v1696 = vsub.s32 0, %v1695
      %v1697 = vadd.s32 %v1692, 1
      %vm1698 = vcmp.gt.s32.totalorder %v1697, 0
      %v1699 = vsel %vm1698, %v1697, 0
      %v1700 = vshrl.u32 %v1699, 5
      %v1701 = vand.u32 %v1699, 31
      %v1702 = vsub.s32 32, %v1701
      %v1703 = vshrl.u32 683565275, %v1702
      %v1704 = vshll.u32 683565275, %v1701
      %v1705 = vshrl.u32 2475754826, %v1702
      %v1706 = vor.u32 %v1704, %v1705
      %v1707 = vshll.u32 2475754826, %v1701
      %v1708 = vshrl.u32 2131351028, %v1702
      %v1709 = vor.u32 %v1707, %v1708
      %v1710 = vshll.u32 2131351028, %v1701
      %v1711 = vshrl.u32 2102212464, %v1702
      %v1712 = vor.u32 %v1710, %v1711
      %v1713 = vshll.u32 2102212464, %v1701
      %v1714 = vshrl.u32 920167782, %v1702
      %v1715 = vor.u32 %v1713, %v1714
      %v1716 = vshll.u32 920167782, %v1701
      %v1717 = vshrl.u32 1326507024, %v1702
      %v1718 = vor.u32 %v1716, %v1717
      %vm1719 = vcmp.lt.s32.totalorder %v1700, 1
      %vm1720 = vcmp.lt.s32.totalorder %v1700, 2
      %vm1721 = vcmp.lt.s32.totalorder %v1700, 3
      %vm1722 = vcmp.lt.s32.totalorder %v1700, 4
      %v1723 = vsel %vm1719, %v1703, %v1706
      %v1724 = vsel %vm1722, %v1712, 2102212464
      %v1725 = vsel %vm1721, %v1709, %v1724
      %v1726 = vsel %vm1720, %v1723, %v1725
      %v1727 = vsel %vm1719, %v1706, %v1709
      %v1728 = vsel %vm1722, %v1715, 920167782
      %v1729 = vsel %vm1721, %v1712, %v1728
      %v1730 = vsel %vm1720, %v1727, %v1729
      %v1731 = vsel %vm1719, %v1709, %v1712
      %v1732 = vsel %vm1722, %v1718, 1326507024
      %v1733 = vsel %vm1721, %v1715, %v1732
      %v1734 = vsel %vm1720, %v1731, %v1733
      %v1735 = vshll.u32 %v1695, 8
      %v1736 = vmul.u32.u64.compose %v1735, %v1734
      %v1737 = vextract.low.u32 %v1736
      %v1738 = vextract.high.u32 %v1736
      %v1739 = vmul.u32.u64.compose %v1735, %v1730
      %v1740 = vextract.low.u32 %v1739
      %v1741 = vextract.high.u32 %v1739
      %v1742 = vmul.u32 %v1735, %v1726
      %v1743 = vadd.s32 %v1738, %v1740
      %vm1744 = vc.u32 %v1738, %v1740
      %v1745 = vadd.s32 %v1741, 1
      %v1746 = vsel %vm1744, %v1745, %v1741
      %v1747 = vadd.s32 %v1742, %v1746
      %v1748 = vadd.s32 %v1747, 536870912
      %v1749 = vshrl.u32 %v1748, 30
      %v1750 = vshll.u32 %v1749, 30
      %v1751 = vsub.s32 %v1747, %v1750
      %vm1752 = vcmp.lt.s32.totalorder %v1751, 0
      %v1753 = vsub.s32 0, %v1751
      %v1754 = vsel %vm1752, %v1753, %v1751
      %v1755 = vclz %v1754
      %v1756 = vsub.s32 %v1755, 2
      %vm1757 = vcmp.gt.s32.totalorder 0, %v1756
      %v1758 = vsel %vm1757, 0, %v1756
      %v1759 = vsub.s32 32, %v1758
      %v1760 = vshll.u32 %v1751, %v1758
      %v1761 = vshrl.u32 %v1743, %v1759
      %v1762 = vor.u32 %v1760, %v1761
      %v1763 = vsub.s32 4294967266, %v1758
      %v1764 = vadd.s32 %v1763, 127
      %v1765 = vshll.u32 %v1764, 23
      %v1766 = vor.u32 4788187, %v1765
      %v1767 = vand.u32 2147483647, %v1766
      %v1769 = vcvt.s32.f32 %v1762
      %v1770 = vmul.f32 %v1769, %v1767
      %v1771 = vxor.u32 %v1770, 2147483648
      %v1772 = vsel %vm1689, %v1771, %v1770
      %v1773 = vsub.s32 4, %v1749
      %v1774 = vsel %vm1689, %v1773, %v1749
      %v1775 = vsel %vm1688, %v728, %v1772
      %v1776 = vsel %vm1688, 0, %v1774
      %v1777 = vcosq.f32.pop %v1775
      %v1778 = vsinq.f32.pop %v1775
      %vm1779 = vweird.f32 %v728
      %v1780 = vadd.s32 %v1776, 3
      %v1781 = vand.u32 %v1780, 3
      %vm1782 = vcmp.lt.s32.totalorder %v1781, 2
      %vm1783 = vcmp.eq.s32.totalorder %v1781, 0
      %v1784 = vxor.u32 %v1778, 2147483648
      %v1785 = vsel %vm1783, %v1777, %v1784
      %vm1786 = vcmp.eq.s32.totalorder %v1781, 2
      %v1787 = vxor.u32 %v1777, 2147483648
      %v1788 = vsel %vm1786, %v1787, %v1778
      %v1789 = vsel %vm1782, %v1785, %v1788
      %v1790 = vsel %vm1779, nan, %v1789
      %v1791 = vand.u32 2147483647, %v729
      %vm1792 = vcmp.le.f32.partialorder %v1791, 0.7853982
      %vm1793 = vcmp.lt.s32.totalorder %v729, 0
      %v1794 = vand.u32 %v729, 2139095040
      %v1795 = vshrl.u32 %v1794, 23
      %v1796 = vsub.s32 %v1795, 127
      %v1797 = vand.u32 2147483647, %v729
      %v1798 = vand.u32 %v1797, 8388607
      %v1799 = vor.u32 %v1798, 8388608
      %v1800 = vsub.s32 0, %v1799
      %v1801 = vadd.s32 %v1796, 1
      %vm1802 = vcmp.gt.s32.totalorder %v1801, 0
      %v1803 = vsel %vm1802, %v1801, 0
      %v1804 = vshrl.u32 %v1803, 5
      %v1805 = vand.u32 %v1803, 31
      %v1806 = vsub.s32 32, %v1805
      %v1807 = vshrl.u32 683565275, %v1806
      %v1808 = vshll.u32 683565275, %v1805
      %v1809 = vshrl.u32 2475754826, %v1806
      %v1810 = vor.u32 %v1808, %v1809
      %v1811 = vshll.u32 2475754826, %v1805
      %v1812 = vshrl.u32 2131351028, %v1806
      %v1813 = vor.u32 %v1811, %v1812
      %v1814 = vshll.u32 2131351028, %v1805
      %v1815 = vshrl.u32 2102212464, %v1806
      %v1816 = vor.u32 %v1814, %v1815
      %v1817 = vshll.u32 2102212464, %v1805
      %v1818 = vshrl.u32 920167782, %v1806
      %v1819 = vor.u32 %v1817, %v1818
      %v1820 = vshll.u32 920167782, %v1805
      %v1821 = vshrl.u32 1326507024, %v1806
      %v1822 = vor.u32 %v1820, %v1821
      %vm1823 = vcmp.lt.s32.totalorder %v1804, 1
      %vm1824 = vcmp.lt.s32.totalorder %v1804, 2
      %vm1825 = vcmp.lt.s32.totalorder %v1804, 3
      %vm1826 = vcmp.lt.s32.totalorder %v1804, 4
      %v1827 = vsel %vm1823, %v1807, %v1810
      %v1828 = vsel %vm1826, %v1816, 2102212464
      %v1829 = vsel %vm1825, %v1813, %v1828
      %v1830 = vsel %vm1824, %v1827, %v1829
      %v1831 = vsel %vm1823, %v1810, %v1813
      %v1832 = vsel %vm1826, %v1819, 920167782
      %v1833 = vsel %vm1825, %v1816, %v1832
      %v1834 = vsel %vm1824, %v1831, %v1833
      %v1835 = vsel %vm1823, %v1813, %v1816
      %v1836 = vsel %vm1826, %v1822, 1326507024
      %v1837 = vsel %vm1825, %v1819, %v1836
      %v1838 = vsel %vm1824, %v1835, %v1837
      %v1839 = vshll.u32 %v1799, 8
      %v1840 = vmul.u32.u64.compose %v1839, %v1838
      %v1841 = vextract.low.u32 %v1840
      %v1842 = vextract.high.u32 %v1840
      %v1843 = vmul.u32.u64.compose %v1839, %v1834
      %v1844 = vextract.low.u32 %v1843
      %v1845 = vextract.high.u32 %v1843
      %v1846 = vmul.u32 %v1839, %v1830
      %v1847 = vadd.s32 %v1842, %v1844
      %vm1848 = vc.u32 %v1842, %v1844
      %v1849 = vadd.s32 %v1845, 1
      %v1850 = vsel %vm1848, %v1849, %v1845
      %v1851 = vadd.s32 %v1846, %v1850
      %v1852 = vadd.s32 %v1851, 536870912
      %v1853 = vshrl.u32 %v1852, 30
      %v1854 = vshll.u32 %v1853, 30
      %v1855 = vsub.s32 %v1851, %v1854
      %vm1856 = vcmp.lt.s32.totalorder %v1855, 0
      %v1857 = vsub.s32 0, %v1855
      %v1858 = vsel %vm1856, %v1857, %v1855
      %v1859 = vclz %v1858
      %v1860 = vsub.s32 %v1859, 2
      %vm1861 = vcmp.gt.s32.totalorder 0, %v1860
      %v1862 = vsel %vm1861, 0, %v1860
      %v1863 = vsub.s32 32, %v1862
      %v1864 = vshll.u32 %v1855, %v1862
      %v1865 = vshrl.u32 %v1847, %v1863
      %v1866 = vor.u32 %v1864, %v1865
      %v1867 = vsub.s32 4294967266, %v1862
      %v1868 = vadd.s32 %v1867, 127
      %v1869 = vshll.u32 %v1868, 23
      %v1870 = vor.u32 4788187, %v1869
      %v1871 = vand.u32 2147483647, %v1870
      %v1873 = vcvt.s32.f32 %v1866
      %v1874 = vmul.f32 %v1873, %v1871
      %v1875 = vxor.u32 %v1874, 2147483648
      %v1876 = vsel %vm1793, %v1875, %v1874
      %v1877 = vsub.s32 4, %v1853
      %v1878 = vsel %vm1793, %v1877, %v1853
      %v1879 = vsel %vm1792, %v729, %v1876
      %v1880 = vsel %vm1792, 0, %v1878
      %v1881 = vcosq.f32.pop %v1879
      %v1882 = vsinq.f32.pop %v1879
      %vm1883 = vweird.f32 %v729
      %v1884 = vadd.s32 %v1880, 3
      %v1885 = vand.u32 %v1884, 3
      %vm1886 = vcmp.lt.s32.totalorder %v1885, 2
      %vm1887 = vcmp.eq.s32.totalorder %v1885, 0
      %v1888 = vxor.u32 %v1882, 2147483648
      %v1889 = vsel %vm1887, %v1881, %v1888
      %vm1890 = vcmp.eq.s32.totalorder %v1885, 2
      %v1891 = vxor.u32 %v1881, 2147483648
      %v1892 = vsel %vm1890, %v1891, %v1882
      %v1893 = vsel %vm1886, %v1889, %v1892
      %v1894 = vsel %vm1883, nan, %v1893
      %v1895 = vand.u32 2147483647, %v730
      %vm1896 = vcmp.le.f32.partialorder %v1895, 0.7853982
      %vm1897 = vcmp.lt.s32.totalorder %v730, 0
      %v1898 = vand.u32 %v730, 2139095040
      %v1899 = vshrl.u32 %v1898, 23
      %v1900 = vsub.s32 %v1899, 127
      %v1901 = vand.u32 2147483647, %v730
      %v1902 = vand.u32 %v1901, 8388607
      %v1903 = vor.u32 %v1902, 8388608
      %v1904 = vsub.s32 0, %v1903
      %v1905 = vadd.s32 %v1900, 1
      %vm1906 = vcmp.gt.s32.totalorder %v1905, 0
      %v1907 = vsel %vm1906, %v1905, 0
      %v1908 = vshrl.u32 %v1907, 5
      %v1909 = vand.u32 %v1907, 31
      %v1910 = vsub.s32 32, %v1909
      %v1911 = vshrl.u32 683565275, %v1910
      %v1912 = vshll.u32 683565275, %v1909
      %v1913 = vshrl.u32 2475754826, %v1910
      %v1914 = vor.u32 %v1912, %v1913
      %v1915 = vshll.u32 2475754826, %v1909
      %v1916 = vshrl.u32 2131351028, %v1910
      %v1917 = vor.u32 %v1915, %v1916
      %v1918 = vshll.u32 2131351028, %v1909
      %v1919 = vshrl.u32 2102212464, %v1910
      %v1920 = vor.u32 %v1918, %v1919
      %v1921 = vshll.u32 2102212464, %v1909
      %v1922 = vshrl.u32 920167782, %v1910
      %v1923 = vor.u32 %v1921, %v1922
      %v1924 = vshll.u32 920167782, %v1909
      %v1925 = vshrl.u32 1326507024, %v1910
      %v1926 = vor.u32 %v1924, %v1925
      %vm1927 = vcmp.lt.s32.totalorder %v1908, 1
      %vm1928 = vcmp.lt.s32.totalorder %v1908, 2
      %vm1929 = vcmp.lt.s32.totalorder %v1908, 3
      %vm1930 = vcmp.lt.s32.totalorder %v1908, 4
      %v1931 = vsel %vm1927, %v1911, %v1914
      %v1932 = vsel %vm1930, %v1920, 2102212464
      %v1933 = vsel %vm1929, %v1917, %v1932
      %v1934 = vsel %vm1928, %v1931, %v1933
      %v1935 = vsel %vm1927, %v1914, %v1917
      %v1936 = vsel %vm1930, %v1923, 920167782
      %v1937 = vsel %vm1929, %v1920, %v1936
      %v1938 = vsel %vm1928, %v1935, %v1937
      %v1939 = vsel %vm1927, %v1917, %v1920
      %v1940 = vsel %vm1930, %v1926, 1326507024
      %v1941 = vsel %vm1929, %v1923, %v1940
      %v1942 = vsel %vm1928, %v1939, %v1941
      %v1943 = vshll.u32 %v1903, 8
      %v1944 = vmul.u32.u64.compose %v1943, %v1942
      %v1945 = vextract.low.u32 %v1944
      %v1946 = vextract.high.u32 %v1944
      %v1947 = vmul.u32.u64.compose %v1943, %v1938
      %v1948 = vextract.low.u32 %v1947
      %v1949 = vextract.high.u32 %v1947
      %v1950 = vmul.u32 %v1943, %v1934
      %v1951 = vadd.s32 %v1946, %v1948
      %vm1952 = vc.u32 %v1946, %v1948
      %v1953 = vadd.s32 %v1949, 1
      %v1954 = vsel %vm1952, %v1953, %v1949
      %v1955 = vadd.s32 %v1950, %v1954
      %v1956 = vadd.s32 %v1955, 536870912
      %v1957 = vshrl.u32 %v1956, 30
      %v1958 = vshll.u32 %v1957, 30
      %v1959 = vsub.s32 %v1955, %v1958
      %vm1960 = vcmp.lt.s32.totalorder %v1959, 0
      %v1961 = vsub.s32 0, %v1959
      %v1962 = vsel %vm1960, %v1961, %v1959
      %v1963 = vclz %v1962
      %v1964 = vsub.s32 %v1963, 2
      %vm1965 = vcmp.gt.s32.totalorder 0, %v1964
      %v1966 = vsel %vm1965, 0, %v1964
      %v1967 = vsub.s32 32, %v1966
      %v1968 = vshll.u32 %v1959, %v1966
      %v1969 = vshrl.u32 %v1951, %v1967
      %v1970 = vor.u32 %v1968, %v1969
      %v1971 = vsub.s32 4294967266, %v1966
      %v1972 = vadd.s32 %v1971, 127
      %v1973 = vshll.u32 %v1972, 23
      %v1974 = vor.u32 4788187, %v1973
      %v1975 = vand.u32 2147483647, %v1974
      %v1977 = vcvt.s32.f32 %v1970
      %v1978 = vmul.f32 %v1977, %v1975
      %v1979 = vxor.u32 %v1978, 2147483648
      %v1980 = vsel %vm1897, %v1979, %v1978
      %v1981 = vsub.s32 4, %v1957
      %v1982 = vsel %vm1897, %v1981, %v1957
      %v1983 = vsel %vm1896, %v730, %v1980
      %v1984 = vsel %vm1896, 0, %v1982
      %v1985 = vcosq.f32.pop %v1983
      %v1986 = vsinq.f32.pop %v1983
      %vm1987 = vweird.f32 %v730
      %v1988 = vadd.s32 %v1984, 3
      %v1989 = vand.u32 %v1988, 3
      %vm1990 = vcmp.lt.s32.totalorder %v1989, 2
      %vm1991 = vcmp.eq.s32.totalorder %v1989, 0
      %v1992 = vxor.u32 %v1986, 2147483648
      %v1993 = vsel %vm1991, %v1985, %v1992
      %vm1994 = vcmp.eq.s32.totalorder %v1989, 2
      %v1995 = vxor.u32 %v1985, 2147483648
      %v1996 = vsel %vm1994, %v1995, %v1986
      %v1997 = vsel %vm1990, %v1993, %v1996
      %v1998 = vsel %vm1987, nan, %v1997
      %v1999 = vand.u32 2147483647, %v731
      %vm2000 = vcmp.le.f32.partialorder %v1999, 0.7853982
      %vm2001 = vcmp.lt.s32.totalorder %v731, 0
      %v2002 = vand.u32 %v731, 2139095040
      %v2003 = vshrl.u32 %v2002, 23
      %v2004 = vsub.s32 %v2003, 127
      %v2005 = vand.u32 2147483647, %v731
      %v2006 = vand.u32 %v2005, 8388607
      %v2007 = vor.u32 %v2006, 8388608
      %v2008 = vsub.s32 0, %v2007
      %v2009 = vadd.s32 %v2004, 1
      %vm2010 = vcmp.gt.s32.totalorder %v2009, 0
      %v2011 = vsel %vm2010, %v2009, 0
      %v2012 = vshrl.u32 %v2011, 5
      %v2013 = vand.u32 %v2011, 31
      %v2014 = vsub.s32 32, %v2013
      %v2015 = vshrl.u32 683565275, %v2014
      %v2016 = vshll.u32 683565275, %v2013
      %v2017 = vshrl.u32 2475754826, %v2014
      %v2018 = vor.u32 %v2016, %v2017
      %v2019 = vshll.u32 2475754826, %v2013
      %v2020 = vshrl.u32 2131351028, %v2014
      %v2021 = vor.u32 %v2019, %v2020
      %v2022 = vshll.u32 2131351028, %v2013
      %v2023 = vshrl.u32 2102212464, %v2014
      %v2024 = vor.u32 %v2022, %v2023
      %v2025 = vshll.u32 2102212464, %v2013
      %v2026 = vshrl.u32 920167782, %v2014
      %v2027 = vor.u32 %v2025, %v2026
      %v2028 = vshll.u32 920167782, %v2013
      %v2029 = vshrl.u32 1326507024, %v2014
      %v2030 = vor.u32 %v2028, %v2029
      %vm2031 = vcmp.lt.s32.totalorder %v2012, 1
      %vm2032 = vcmp.lt.s32.totalorder %v2012, 2
      %vm2033 = vcmp.lt.s32.totalorder %v2012, 3
      %vm2034 = vcmp.lt.s32.totalorder %v2012, 4
      %v2035 = vsel %vm2031, %v2015, %v2018
      %v2036 = vsel %vm2034, %v2024, 2102212464
      %v2037 = vsel %vm2033, %v2021, %v2036
      %v2038 = vsel %vm2032, %v2035, %v2037
      %v2039 = vsel %vm2031, %v2018, %v2021
      %v2040 = vsel %vm2034, %v2027, 920167782
      %v2041 = vsel %vm2033, %v2024, %v2040
      %v2042 = vsel %vm2032, %v2039, %v2041
      %v2043 = vsel %vm2031, %v2021, %v2024
      %v2044 = vsel %vm2034, %v2030, 1326507024
      %v2045 = vsel %vm2033, %v2027, %v2044
      %v2046 = vsel %vm2032, %v2043, %v2045
      %v2047 = vshll.u32 %v2007, 8
      %v2048 = vmul.u32.u64.compose %v2047, %v2046
      %v2049 = vextract.low.u32 %v2048
      %v2050 = vextract.high.u32 %v2048
      %v2051 = vmul.u32.u64.compose %v2047, %v2042
      %v2052 = vextract.low.u32 %v2051
      %v2053 = vextract.high.u32 %v2051
      %v2054 = vmul.u32 %v2047, %v2038
      %v2055 = vadd.s32 %v2050, %v2052
      %vm2056 = vc.u32 %v2050, %v2052
      %v2057 = vadd.s32 %v2053, 1
      %v2058 = vsel %vm2056, %v2057, %v2053
      %v2059 = vadd.s32 %v2054, %v2058
      %v2060 = vadd.s32 %v2059, 536870912
      %v2061 = vshrl.u32 %v2060, 30
      %v2062 = vshll.u32 %v2061, 30
      %v2063 = vsub.s32 %v2059, %v2062
      %vm2064 = vcmp.lt.s32.totalorder %v2063, 0
      %v2065 = vsub.s32 0, %v2063
      %v2066 = vsel %vm2064, %v2065, %v2063
      %v2067 = vclz %v2066
      %v2068 = vsub.s32 %v2067, 2
      %vm2069 = vcmp.gt.s32.totalorder 0, %v2068
      %v2070 = vsel %vm2069, 0, %v2068
      %v2071 = vsub.s32 32, %v2070
      %v2072 = vshll.u32 %v2063, %v2070
      %v2073 = vshrl.u32 %v2055, %v2071
      %v2074 = vor.u32 %v2072, %v2073
      %v2075 = vsub.s32 4294967266, %v2070
      %v2076 = vadd.s32 %v2075, 127
      %v2077 = vshll.u32 %v2076, 23
      %v2078 = vor.u32 4788187, %v2077
      %v2079 = vand.u32 2147483647, %v2078
      %v2081 = vcvt.s32.f32 %v2074
      %v2082 = vmul.f32 %v2081, %v2079
      %v2083 = vxor.u32 %v2082, 2147483648
      %v2084 = vsel %vm2001, %v2083, %v2082
      %v2085 = vsub.s32 4, %v2061
      %v2086 = vsel %vm2001, %v2085, %v2061
      %v2087 = vsel %vm2000, %v731, %v2084
      %v2088 = vsel %vm2000, 0, %v2086
      %v2089 = vcosq.f32.pop %v2087
      %v2090 = vsinq.f32.pop %v2087
      %vm2091 = vweird.f32 %v731
      %v2092 = vadd.s32 %v2088, 3
      %v2093 = vand.u32 %v2092, 3
      %vm2094 = vcmp.lt.s32.totalorder %v2093, 2
      %vm2095 = vcmp.eq.s32.totalorder %v2093, 0
      %v2096 = vxor.u32 %v2090, 2147483648
      %v2097 = vsel %vm2095, %v2089, %v2096
      %vm2098 = vcmp.eq.s32.totalorder %v2093, 2
      %v2099 = vxor.u32 %v2089, 2147483648
      %v2100 = vsel %vm2098, %v2099, %v2090
      %v2101 = vsel %vm2094, %v2097, %v2100
      %v2102 = vsel %vm2091, nan, %v2101
      %v2103 = vand.u32 2147483647, %v732
      %vm2104 = vcmp.le.f32.partialorder %v2103, 0.7853982
      %vm2105 = vcmp.lt.s32.totalorder %v732, 0
      %v2106 = vand.u32 %v732, 2139095040
      %v2107 = vshrl.u32 %v2106, 23
      %v2108 = vsub.s32 %v2107, 127
      %v2109 = vand.u32 2147483647, %v732
      %v2110 = vand.u32 %v2109, 8388607
      %v2111 = vor.u32 %v2110, 8388608
      %v2112 = vsub.s32 0, %v2111
      %v2113 = vadd.s32 %v2108, 1
      %vm2114 = vcmp.gt.s32.totalorder %v2113, 0
      %v2115 = vsel %vm2114, %v2113, 0
      %v2116 = vshrl.u32 %v2115, 5
      %v2117 = vand.u32 %v2115, 31
      %v2118 = vsub.s32 32, %v2117
      %v2119 = vshrl.u32 683565275, %v2118
      %v2120 = vshll.u32 683565275, %v2117
      %v2121 = vshrl.u32 2475754826, %v2118
      %v2122 = vor.u32 %v2120, %v2121
      %v2123 = vshll.u32 2475754826, %v2117
      %v2124 = vshrl.u32 2131351028, %v2118
      %v2125 = vor.u32 %v2123, %v2124
      %v2126 = vshll.u32 2131351028, %v2117
      %v2127 = vshrl.u32 2102212464, %v2118
      %v2128 = vor.u32 %v2126, %v2127
      %v2129 = vshll.u32 2102212464, %v2117
      %v2130 = vshrl.u32 920167782, %v2118
      %v2131 = vor.u32 %v2129, %v2130
      %v2132 = vshll.u32 920167782, %v2117
      %v2133 = vshrl.u32 1326507024, %v2118
      %v2134 = vor.u32 %v2132, %v2133
      %vm2135 = vcmp.lt.s32.totalorder %v2116, 1
      %vm2136 = vcmp.lt.s32.totalorder %v2116, 2
      %vm2137 = vcmp.lt.s32.totalorder %v2116, 3
      %vm2138 = vcmp.lt.s32.totalorder %v2116, 4
      %v2139 = vsel %vm2135, %v2119, %v2122
      %v2140 = vsel %vm2138, %v2128, 2102212464
      %v2141 = vsel %vm2137, %v2125, %v2140
      %v2142 = vsel %vm2136, %v2139, %v2141
      %v2143 = vsel %vm2135, %v2122, %v2125
      %v2144 = vsel %vm2138, %v2131, 920167782
      %v2145 = vsel %vm2137, %v2128, %v2144
      %v2146 = vsel %vm2136, %v2143, %v2145
      %v2147 = vsel %vm2135, %v2125, %v2128
      %v2148 = vsel %vm2138, %v2134, 1326507024
      %v2149 = vsel %vm2137, %v2131, %v2148
      %v2150 = vsel %vm2136, %v2147, %v2149
      %v2151 = vshll.u32 %v2111, 8
      %v2152 = vmul.u32.u64.compose %v2151, %v2150
      %v2153 = vextract.low.u32 %v2152
      %v2154 = vextract.high.u32 %v2152
      %v2155 = vmul.u32.u64.compose %v2151, %v2146
      %v2156 = vextract.low.u32 %v2155
      %v2157 = vextract.high.u32 %v2155
      %v2158 = vmul.u32 %v2151, %v2142
      %v2159 = vadd.s32 %v2154, %v2156
      %vm2160 = vc.u32 %v2154, %v2156
      %v2161 = vadd.s32 %v2157, 1
      %v2162 = vsel %vm2160, %v2161, %v2157
      %v2163 = vadd.s32 %v2158, %v2162
      %v2164 = vadd.s32 %v2163, 536870912
      %v2165 = vshrl.u32 %v2164, 30
      %v2166 = vshll.u32 %v2165, 30
      %v2167 = vsub.s32 %v2163, %v2166
      %vm2168 = vcmp.lt.s32.totalorder %v2167, 0
      %v2169 = vsub.s32 0, %v2167
      %v2170 = vsel %vm2168, %v2169, %v2167
      %v2171 = vclz %v2170
      %v2172 = vsub.s32 %v2171, 2
      %vm2173 = vcmp.gt.s32.totalorder 0, %v2172
      %v2174 = vsel %vm2173, 0, %v2172
      %v2175 = vsub.s32 32, %v2174
      %v2176 = vshll.u32 %v2167, %v2174
      %v2177 = vshrl.u32 %v2159, %v2175
      %v2178 = vor.u32 %v2176, %v2177
      %v2179 = vsub.s32 4294967266, %v2174
      %v2180 = vadd.s32 %v2179, 127
      %v2181 = vshll.u32 %v2180, 23
      %v2182 = vor.u32 4788187, %v2181
      %v2183 = vand.u32 2147483647, %v2182
      %v2185 = vcvt.s32.f32 %v2178
      %v2186 = vmul.f32 %v2185, %v2183
      %v2187 = vxor.u32 %v2186, 2147483648
      %v2188 = vsel %vm2105, %v2187, %v2186
      %v2189 = vsub.s32 4, %v2165
      %v2190 = vsel %vm2105, %v2189, %v2165
      %v2191 = vsel %vm2104, %v732, %v2188
      %v2192 = vsel %vm2104, 0, %v2190
      %v2193 = vcosq.f32.pop %v2191
      %v2194 = vsinq.f32.pop %v2191
      %vm2195 = vweird.f32 %v732
      %v2196 = vadd.s32 %v2192, 3
      %v2197 = vand.u32 %v2196, 3
      %vm2198 = vcmp.lt.s32.totalorder %v2197, 2
      %vm2199 = vcmp.eq.s32.totalorder %v2197, 0
      %v2200 = vxor.u32 %v2194, 2147483648
      %v2201 = vsel %vm2199, %v2193, %v2200
      %vm2202 = vcmp.eq.s32.totalorder %v2197, 2
      %v2203 = vxor.u32 %v2193, 2147483648
      %v2204 = vsel %vm2202, %v2203, %v2194
      %v2205 = vsel %vm2198, %v2201, %v2204
      %v2206 = vsel %vm2195, nan, %v2205
      %v2207 = vand.u32 2147483647, %v733
      %vm2208 = vcmp.le.f32.partialorder %v2207, 0.7853982
      %vm2209 = vcmp.lt.s32.totalorder %v733, 0
      %v2210 = vand.u32 %v733, 2139095040
      %v2211 = vshrl.u32 %v2210, 23
      %v2212 = vsub.s32 %v2211, 127
      %v2213 = vand.u32 2147483647, %v733
      %v2214 = vand.u32 %v2213, 8388607
      %v2215 = vor.u32 %v2214, 8388608
      %v2216 = vsub.s32 0, %v2215
      %v2217 = vadd.s32 %v2212, 1
      %vm2218 = vcmp.gt.s32.totalorder %v2217, 0
      %v2219 = vsel %vm2218, %v2217, 0
      %v2220 = vshrl.u32 %v2219, 5
      %v2221 = vand.u32 %v2219, 31
      %v2222 = vsub.s32 32, %v2221
      %v2223 = vshrl.u32 683565275, %v2222
      %v2224 = vshll.u32 683565275, %v2221
      %v2225 = vshrl.u32 2475754826, %v2222
      %v2226 = vor.u32 %v2224, %v2225
      %v2227 = vshll.u32 2475754826, %v2221
      %v2228 = vshrl.u32 2131351028, %v2222
      %v2229 = vor.u32 %v2227, %v2228
      %v2230 = vshll.u32 2131351028, %v2221
      %v2231 = vshrl.u32 2102212464, %v2222
      %v2232 = vor.u32 %v2230, %v2231
      %v2233 = vshll.u32 2102212464, %v2221
      %v2234 = vshrl.u32 920167782, %v2222
      %v2235 = vor.u32 %v2233, %v2234
      %v2236 = vshll.u32 920167782, %v2221
      %v2237 = vshrl.u32 1326507024, %v2222
      %v2238 = vor.u32 %v2236, %v2237
      %vm2239 = vcmp.lt.s32.totalorder %v2220, 1
      %vm2240 = vcmp.lt.s32.totalorder %v2220, 2
      %vm2241 = vcmp.lt.s32.totalorder %v2220, 3
      %vm2242 = vcmp.lt.s32.totalorder %v2220, 4
      %v2243 = vsel %vm2239, %v2223, %v2226
      %v2244 = vsel %vm2242, %v2232, 2102212464
      %v2245 = vsel %vm2241, %v2229, %v2244
      %v2246 = vsel %vm2240, %v2243, %v2245
      %v2247 = vsel %vm2239, %v2226, %v2229
      %v2248 = vsel %vm2242, %v2235, 920167782
      %v2249 = vsel %vm2241, %v2232, %v2248
      %v2250 = vsel %vm2240, %v2247, %v2249
      %v2251 = vsel %vm2239, %v2229, %v2232
      %v2252 = vsel %vm2242, %v2238, 1326507024
      %v2253 = vsel %vm2241, %v2235, %v2252
      %v2254 = vsel %vm2240, %v2251, %v2253
      %v2255 = vshll.u32 %v2215, 8
      %v2256 = vmul.u32.u64.compose %v2255, %v2254
      %v2257 = vextract.low.u32 %v2256
      %v2258 = vextract.high.u32 %v2256
      %v2259 = vmul.u32.u64.compose %v2255, %v2250
      %v2260 = vextract.low.u32 %v2259
      %v2261 = vextract.high.u32 %v2259
      %v2262 = vmul.u32 %v2255, %v2246
      %v2263 = vadd.s32 %v2258, %v2260
      %vm2264 = vc.u32 %v2258, %v2260
      %v2265 = vadd.s32 %v2261, 1
      %v2266 = vsel %vm2264, %v2265, %v2261
      %v2267 = vadd.s32 %v2262, %v2266
      %v2268 = vadd.s32 %v2267, 536870912
      %v2269 = vshrl.u32 %v2268, 30
      %v2270 = vshll.u32 %v2269, 30
      %v2271 = vsub.s32 %v2267, %v2270
      %vm2272 = vcmp.lt.s32.totalorder %v2271, 0
      %v2273 = vsub.s32 0, %v2271
      %v2274 = vsel %vm2272, %v2273, %v2271
      %v2275 = vclz %v2274
      %v2276 = vsub.s32 %v2275, 2
      %vm2277 = vcmp.gt.s32.totalorder 0, %v2276
      %v2278 = vsel %vm2277, 0, %v2276
      %v2279 = vsub.s32 32, %v2278
      %v2280 = vshll.u32 %v2271, %v2278
      %v2281 = vshrl.u32 %v2263, %v2279
      %v2282 = vor.u32 %v2280, %v2281
      %v2283 = vsub.s32 4294967266, %v2278
      %v2284 = vadd.s32 %v2283, 127
      %v2285 = vshll.u32 %v2284, 23
      %v2286 = vor.u32 4788187, %v2285
      %v2287 = vand.u32 2147483647, %v2286
      %v2289 = vcvt.s32.f32 %v2282
      %v2290 = vmul.f32 %v2289, %v2287
      %v2291 = vxor.u32 %v2290, 2147483648
      %v2292 = vsel %vm2209, %v2291, %v2290
      %v2293 = vsub.s32 4, %v2269
      %v2294 = vsel %vm2209, %v2293, %v2269
      %v2295 = vsel %vm2208, %v733, %v2292
      %v2296 = vsel %vm2208, 0, %v2294
      %v2297 = vcosq.f32.pop %v2295
      %v2298 = vsinq.f32.pop %v2295
      %vm2299 = vweird.f32 %v733
      %v2300 = vadd.s32 %v2296, 3
      %v2301 = vand.u32 %v2300, 3
      %vm2302 = vcmp.lt.s32.totalorder %v2301, 2
      %vm2303 = vcmp.eq.s32.totalorder %v2301, 0
      %v2304 = vxor.u32 %v2298, 2147483648
      %v2305 = vsel %vm2303, %v2297, %v2304
      %vm2306 = vcmp.eq.s32.totalorder %v2301, 2
      %v2307 = vxor.u32 %v2297, 2147483648
      %v2308 = vsel %vm2306, %v2307, %v2298
      %v2309 = vsel %vm2302, %v2305, %v2308
      %v2310 = vsel %vm2299, nan, %v2309
      %v2311 = vand.u32 2147483647, %v734
      %vm2312 = vcmp.le.f32.partialorder %v2311, 0.7853982
      %vm2313 = vcmp.lt.s32.totalorder %v734, 0
      %v2314 = vand.u32 %v734, 2139095040
      %v2315 = vshrl.u32 %v2314, 23
      %v2316 = vsub.s32 %v2315, 127
      %v2317 = vand.u32 2147483647, %v734
      %v2318 = vand.u32 %v2317, 8388607
      %v2319 = vor.u32 %v2318, 8388608
      %v2320 = vsub.s32 0, %v2319
      %v2321 = vadd.s32 %v2316, 1
      %vm2322 = vcmp.gt.s32.totalorder %v2321, 0
      %v2323 = vsel %vm2322, %v2321, 0
      %v2324 = vshrl.u32 %v2323, 5
      %v2325 = vand.u32 %v2323, 31
      %v2326 = vsub.s32 32, %v2325
      %v2327 = vshrl.u32 683565275, %v2326
      %v2328 = vshll.u32 683565275, %v2325
      %v2329 = vshrl.u32 2475754826, %v2326
      %v2330 = vor.u32 %v2328, %v2329
      %v2331 = vshll.u32 2475754826, %v2325
      %v2332 = vshrl.u32 2131351028, %v2326
      %v2333 = vor.u32 %v2331, %v2332
      %v2334 = vshll.u32 2131351028, %v2325
      %v2335 = vshrl.u32 2102212464, %v2326
      %v2336 = vor.u32 %v2334, %v2335
      %v2337 = vshll.u32 2102212464, %v2325
      %v2338 = vshrl.u32 920167782, %v2326
      %v2339 = vor.u32 %v2337, %v2338
      %v2340 = vshll.u32 920167782, %v2325
      %v2341 = vshrl.u32 1326507024, %v2326
      %v2342 = vor.u32 %v2340, %v2341
      %vm2343 = vcmp.lt.s32.totalorder %v2324, 1
      %vm2344 = vcmp.lt.s32.totalorder %v2324, 2
      %vm2345 = vcmp.lt.s32.totalorder %v2324, 3
      %vm2346 = vcmp.lt.s32.totalorder %v2324, 4
      %v2347 = vsel %vm2343, %v2327, %v2330
      %v2348 = vsel %vm2346, %v2336, 2102212464
      %v2349 = vsel %vm2345, %v2333, %v2348
      %v2350 = vsel %vm2344, %v2347, %v2349
      %v2351 = vsel %vm2343, %v2330, %v2333
      %v2352 = vsel %vm2346, %v2339, 920167782
      %v2353 = vsel %vm2345, %v2336, %v2352
      %v2354 = vsel %vm2344, %v2351, %v2353
      %v2355 = vsel %vm2343, %v2333, %v2336
      %v2356 = vsel %vm2346, %v2342, 1326507024
      %v2357 = vsel %vm2345, %v2339, %v2356
      %v2358 = vsel %vm2344, %v2355, %v2357
      %v2359 = vshll.u32 %v2319, 8
      %v2360 = vmul.u32.u64.compose %v2359, %v2358
      %v2361 = vextract.low.u32 %v2360
      %v2362 = vextract.high.u32 %v2360
      %v2363 = vmul.u32.u64.compose %v2359, %v2354
      %v2364 = vextract.low.u32 %v2363
      %v2365 = vextract.high.u32 %v2363
      %v2366 = vmul.u32 %v2359, %v2350
      %v2367 = vadd.s32 %v2362, %v2364
      %vm2368 = vc.u32 %v2362, %v2364
      %v2369 = vadd.s32 %v2365, 1
      %v2370 = vsel %vm2368, %v2369, %v2365
      %v2371 = vadd.s32 %v2366, %v2370
      %v2372 = vadd.s32 %v2371, 536870912
      %v2373 = vshrl.u32 %v2372, 30
      %v2374 = vshll.u32 %v2373, 30
      %v2375 = vsub.s32 %v2371, %v2374
      %vm2376 = vcmp.lt.s32.totalorder %v2375, 0
      %v2377 = vsub.s32 0, %v2375
      %v2378 = vsel %vm2376, %v2377, %v2375
      %v2379 = vclz %v2378
      %v2380 = vsub.s32 %v2379, 2
      %vm2381 = vcmp.gt.s32.totalorder 0, %v2380
      %v2382 = vsel %vm2381, 0, %v2380
      %v2383 = vsub.s32 32, %v2382
      %v2384 = vshll.u32 %v2375, %v2382
      %v2385 = vshrl.u32 %v2367, %v2383
      %v2386 = vor.u32 %v2384, %v2385
      %v2387 = vsub.s32 4294967266, %v2382
      %v2388 = vadd.s32 %v2387, 127
      %v2389 = vshll.u32 %v2388, 23
      %v2390 = vor.u32 4788187, %v2389
      %v2391 = vand.u32 2147483647, %v2390
      %v2393 = vcvt.s32.f32 %v2386
      %v2394 = vmul.f32 %v2393, %v2391
      %v2395 = vxor.u32 %v2394, 2147483648
      %v2396 = vsel %vm2313, %v2395, %v2394
      %v2397 = vsub.s32 4, %v2373
      %v2398 = vsel %vm2313, %v2397, %v2373
      %v2399 = vsel %vm2312, %v734, %v2396
      %v2400 = vsel %vm2312, 0, %v2398
      %v2401 = vcosq.f32.pop %v2399
      %v2402 = vsinq.f32.pop %v2399
      %vm2403 = vweird.f32 %v734
      %v2404 = vadd.s32 %v2400, 3
      %v2405 = vand.u32 %v2404, 3
      %vm2406 = vcmp.lt.s32.totalorder %v2405, 2
      %vm2407 = vcmp.eq.s32.totalorder %v2405, 0
      %v2408 = vxor.u32 %v2402, 2147483648
      %v2409 = vsel %vm2407, %v2401, %v2408
      %vm2410 = vcmp.eq.s32.totalorder %v2405, 2
      %v2411 = vxor.u32 %v2401, 2147483648
      %v2412 = vsel %vm2410, %v2411, %v2402
      %v2413 = vsel %vm2406, %v2409, %v2412
      %v2414 = vsel %vm2403, nan, %v2413
      %v2415 = vand.u32 2147483647, %v735
      %vm2416 = vcmp.le.f32.partialorder %v2415, 0.7853982
      %vm2417 = vcmp.lt.s32.totalorder %v735, 0
      %v2418 = vand.u32 %v735, 2139095040
      %v2419 = vshrl.u32 %v2418, 23
      %v2420 = vsub.s32 %v2419, 127
      %v2421 = vand.u32 2147483647, %v735
      %v2422 = vand.u32 %v2421, 8388607
      %v2423 = vor.u32 %v2422, 8388608
      %v2424 = vsub.s32 0, %v2423
      %v2425 = vadd.s32 %v2420, 1
      %vm2426 = vcmp.gt.s32.totalorder %v2425, 0
      %v2427 = vsel %vm2426, %v2425, 0
      %v2428 = vshrl.u32 %v2427, 5
      %v2429 = vand.u32 %v2427, 31
      %v2430 = vsub.s32 32, %v2429
      %v2431 = vshrl.u32 683565275, %v2430
      %v2432 = vshll.u32 683565275, %v2429
      %v2433 = vshrl.u32 2475754826, %v2430
      %v2434 = vor.u32 %v2432, %v2433
      %v2435 = vshll.u32 2475754826, %v2429
      %v2436 = vshrl.u32 2131351028, %v2430
      %v2437 = vor.u32 %v2435, %v2436
      %v2438 = vshll.u32 2131351028, %v2429
      %v2439 = vshrl.u32 2102212464, %v2430
      %v2440 = vor.u32 %v2438, %v2439
      %v2441 = vshll.u32 2102212464, %v2429
      %v2442 = vshrl.u32 920167782, %v2430
      %v2443 = vor.u32 %v2441, %v2442
      %v2444 = vshll.u32 920167782, %v2429
      %v2445 = vshrl.u32 1326507024, %v2430
      %v2446 = vor.u32 %v2444, %v2445
      %vm2447 = vcmp.lt.s32.totalorder %v2428, 1
      %vm2448 = vcmp.lt.s32.totalorder %v2428, 2
      %vm2449 = vcmp.lt.s32.totalorder %v2428, 3
      %vm2450 = vcmp.lt.s32.totalorder %v2428, 4
      %v2451 = vsel %vm2447, %v2431, %v2434
      %v2452 = vsel %vm2450, %v2440, 2102212464
      %v2453 = vsel %vm2449, %v2437, %v2452
      %v2454 = vsel %vm2448, %v2451, %v2453
      %v2455 = vsel %vm2447, %v2434, %v2437
      %v2456 = vsel %vm2450, %v2443, 920167782
      %v2457 = vsel %vm2449, %v2440, %v2456
      %v2458 = vsel %vm2448, %v2455, %v2457
      %v2459 = vsel %vm2447, %v2437, %v2440
      %v2460 = vsel %vm2450, %v2446, 1326507024
      %v2461 = vsel %vm2449, %v2443, %v2460
      %v2462 = vsel %vm2448, %v2459, %v2461
      %v2463 = vshll.u32 %v2423, 8
      %v2464 = vmul.u32.u64.compose %v2463, %v2462
      %v2465 = vextract.low.u32 %v2464
      %v2466 = vextract.high.u32 %v2464
      %v2467 = vmul.u32.u64.compose %v2463, %v2458
      %v2468 = vextract.low.u32 %v2467
      %v2469 = vextract.high.u32 %v2467
      %v2470 = vmul.u32 %v2463, %v2454
      %v2471 = vadd.s32 %v2466, %v2468
      %vm2472 = vc.u32 %v2466, %v2468
      %v2473 = vadd.s32 %v2469, 1
      %v2474 = vsel %vm2472, %v2473, %v2469
      %v2475 = vadd.s32 %v2470, %v2474
      %v2476 = vadd.s32 %v2475, 536870912
      %v2477 = vshrl.u32 %v2476, 30
      %v2478 = vshll.u32 %v2477, 30
      %v2479 = vsub.s32 %v2475, %v2478
      %vm2480 = vcmp.lt.s32.totalorder %v2479, 0
      %v2481 = vsub.s32 0, %v2479
      %v2482 = vsel %vm2480, %v2481, %v2479
      %v2483 = vclz %v2482
      %v2484 = vsub.s32 %v2483, 2
      %vm2485 = vcmp.gt.s32.totalorder 0, %v2484
      %v2486 = vsel %vm2485, 0, %v2484
      %v2487 = vsub.s32 32, %v2486
      %v2488 = vshll.u32 %v2479, %v2486
      %v2489 = vshrl.u32 %v2471, %v2487
      %v2490 = vor.u32 %v2488, %v2489
      %v2491 = vsub.s32 4294967266, %v2486
      %v2492 = vadd.s32 %v2491, 127
      %v2493 = vshll.u32 %v2492, 23
      %v2494 = vor.u32 4788187, %v2493
      %v2495 = vand.u32 2147483647, %v2494
      %v2497 = vcvt.s32.f32 %v2490
      %v2498 = vmul.f32 %v2497, %v2495
      %v2499 = vxor.u32 %v2498, 2147483648
      %v2500 = vsel %vm2417, %v2499, %v2498
      %v2501 = vsub.s32 4, %v2477
      %v2502 = vsel %vm2417, %v2501, %v2477
      %v2503 = vsel %vm2416, %v735, %v2500
      %v2504 = vsel %vm2416, 0, %v2502
      %v2505 = vcosq.f32.pop %v2503
      %v2506 = vsinq.f32.pop %v2503
      %vm2507 = vweird.f32 %v735
      %v2508 = vadd.s32 %v2504, 3
      %v2509 = vand.u32 %v2508, 3
      %vm2510 = vcmp.lt.s32.totalorder %v2509, 2
      %vm2511 = vcmp.eq.s32.totalorder %v2509, 0
      %v2512 = vxor.u32 %v2506, 2147483648
      %v2513 = vsel %vm2511, %v2505, %v2512
      %vm2514 = vcmp.eq.s32.totalorder %v2509, 2
      %v2515 = vxor.u32 %v2505, 2147483648
      %v2516 = vsel %vm2514, %v2515, %v2506
      %v2517 = vsel %vm2510, %v2513, %v2516
      %v2518 = vsel %vm2507, nan, %v2517
      %v2519 = vand.u32 2147483647, %v736
      %vm2520 = vcmp.le.f32.partialorder %v2519, 0.7853982
      %vm2521 = vcmp.lt.s32.totalorder %v736, 0
      %v2522 = vand.u32 %v736, 2139095040
      %v2523 = vshrl.u32 %v2522, 23
      %v2524 = vsub.s32 %v2523, 127
      %v2525 = vand.u32 2147483647, %v736
      %v2526 = vand.u32 %v2525, 8388607
      %v2527 = vor.u32 %v2526, 8388608
      %v2528 = vsub.s32 0, %v2527
      %v2529 = vadd.s32 %v2524, 1
      %vm2530 = vcmp.gt.s32.totalorder %v2529, 0
      %v2531 = vsel %vm2530, %v2529, 0
      %v2532 = vshrl.u32 %v2531, 5
      %v2533 = vand.u32 %v2531, 31
      %v2534 = vsub.s32 32, %v2533
      %v2535 = vshrl.u32 683565275, %v2534
      %v2536 = vshll.u32 683565275, %v2533
      %v2537 = vshrl.u32 2475754826, %v2534
      %v2538 = vor.u32 %v2536, %v2537
      %v2539 = vshll.u32 2475754826, %v2533
      %v2540 = vshrl.u32 2131351028, %v2534
      %v2541 = vor.u32 %v2539, %v2540
      %v2542 = vshll.u32 2131351028, %v2533
      %v2543 = vshrl.u32 2102212464, %v2534
      %v2544 = vor.u32 %v2542, %v2543
      %v2545 = vshll.u32 2102212464, %v2533
      %v2546 = vshrl.u32 920167782, %v2534
      %v2547 = vor.u32 %v2545, %v2546
      %v2548 = vshll.u32 920167782, %v2533
      %v2549 = vshrl.u32 1326507024, %v2534
      %v2550 = vor.u32 %v2548, %v2549
      %vm2551 = vcmp.lt.s32.totalorder %v2532, 1
      %vm2552 = vcmp.lt.s32.totalorder %v2532, 2
      %vm2553 = vcmp.lt.s32.totalorder %v2532, 3
      %vm2554 = vcmp.lt.s32.totalorder %v2532, 4
      %v2555 = vsel %vm2551, %v2535, %v2538
      %v2556 = vsel %vm2554, %v2544, 2102212464
      %v2557 = vsel %vm2553, %v2541, %v2556
      %v2558 = vsel %vm2552, %v2555, %v2557
      %v2559 = vsel %vm2551, %v2538, %v2541
      %v2560 = vsel %vm2554, %v2547, 920167782
      %v2561 = vsel %vm2553, %v2544, %v2560
      %v2562 = vsel %vm2552, %v2559, %v2561
      %v2563 = vsel %vm2551, %v2541, %v2544
      %v2564 = vsel %vm2554, %v2550, 1326507024
      %v2565 = vsel %vm2553, %v2547, %v2564
      %v2566 = vsel %vm2552, %v2563, %v2565
      %v2567 = vshll.u32 %v2527, 8
      %v2568 = vmul.u32.u64.compose %v2567, %v2566
      %v2569 = vextract.low.u32 %v2568
      %v2570 = vextract.high.u32 %v2568
      %v2571 = vmul.u32.u64.compose %v2567, %v2562
      %v2572 = vextract.low.u32 %v2571
      %v2573 = vextract.high.u32 %v2571
      %v2574 = vmul.u32 %v2567, %v2558
      %v2575 = vadd.s32 %v2570, %v2572
      %vm2576 = vc.u32 %v2570, %v2572
      %v2577 = vadd.s32 %v2573, 1
      %v2578 = vsel %vm2576, %v2577, %v2573
      %v2579 = vadd.s32 %v2574, %v2578
      %v2580 = vadd.s32 %v2579, 536870912
      %v2581 = vshrl.u32 %v2580, 30
      %v2582 = vshll.u32 %v2581, 30
      %v2583 = vsub.s32 %v2579, %v2582
      %vm2584 = vcmp.lt.s32.totalorder %v2583, 0
      %v2585 = vsub.s32 0, %v2583
      %v2586 = vsel %vm2584, %v2585, %v2583
      %v2587 = vclz %v2586
      %v2588 = vsub.s32 %v2587, 2
      %vm2589 = vcmp.gt.s32.totalorder 0, %v2588
      %v2590 = vsel %vm2589, 0, %v2588
      %v2591 = vsub.s32 32, %v2590
      %v2592 = vshll.u32 %v2583, %v2590
      %v2593 = vshrl.u32 %v2575, %v2591
      %v2594 = vor.u32 %v2592, %v2593
      %v2595 = vsub.s32 4294967266, %v2590
      %v2596 = vadd.s32 %v2595, 127
      %v2597 = vshll.u32 %v2596, 23
      %v2598 = vor.u32 4788187, %v2597
      %v2599 = vand.u32 2147483647, %v2598
      %v2601 = vcvt.s32.f32 %v2594
      %v2602 = vmul.f32 %v2601, %v2599
      %v2603 = vxor.u32 %v2602, 2147483648
      %v2604 = vsel %vm2521, %v2603, %v2602
      %v2605 = vsub.s32 4, %v2581
      %v2606 = vsel %vm2521, %v2605, %v2581
      %v2607 = vsel %vm2520, %v736, %v2604
      %v2608 = vsel %vm2520, 0, %v2606
      %v2609 = vcosq.f32.pop %v2607
      %v2610 = vsinq.f32.pop %v2607
      %vm2611 = vweird.f32 %v736
      %v2612 = vadd.s32 %v2608, 3
      %v2613 = vand.u32 %v2612, 3
      %vm2614 = vcmp.lt.s32.totalorder %v2613, 2
      %vm2615 = vcmp.eq.s32.totalorder %v2613, 0
      %v2616 = vxor.u32 %v2610, 2147483648
      %v2617 = vsel %vm2615, %v2609, %v2616
      %vm2618 = vcmp.eq.s32.totalorder %v2613, 2
      %v2619 = vxor.u32 %v2609, 2147483648
      %v2620 = vsel %vm2618, %v2619, %v2610
      %v2621 = vsel %vm2614, %v2617, %v2620
      %v2622 = vsel %vm2611, nan, %v2621
      %v2623 = vand.u32 2147483647, %v737
      %vm2624 = vcmp.le.f32.partialorder %v2623, 0.7853982
      %vm2625 = vcmp.lt.s32.totalorder %v737, 0
      %v2626 = vand.u32 %v737, 2139095040
      %v2627 = vshrl.u32 %v2626, 23
      %v2628 = vsub.s32 %v2627, 127
      %v2629 = vand.u32 2147483647, %v737
      %v2630 = vand.u32 %v2629, 8388607
      %v2631 = vor.u32 %v2630, 8388608
      %v2632 = vsub.s32 0, %v2631
      %v2633 = vadd.s32 %v2628, 1
      %vm2634 = vcmp.gt.s32.totalorder %v2633, 0
      %v2635 = vsel %vm2634, %v2633, 0
      %v2636 = vshrl.u32 %v2635, 5
      %v2637 = vand.u32 %v2635, 31
      %v2638 = vsub.s32 32, %v2637
      %v2639 = vshrl.u32 683565275, %v2638
      %v2640 = vshll.u32 683565275, %v2637
      %v2641 = vshrl.u32 2475754826, %v2638
      %v2642 = vor.u32 %v2640, %v2641
      %v2643 = vshll.u32 2475754826, %v2637
      %v2644 = vshrl.u32 2131351028, %v2638
      %v2645 = vor.u32 %v2643, %v2644
      %v2646 = vshll.u32 2131351028, %v2637
      %v2647 = vshrl.u32 2102212464, %v2638
      %v2648 = vor.u32 %v2646, %v2647
      %v2649 = vshll.u32 2102212464, %v2637
      %v2650 = vshrl.u32 920167782, %v2638
      %v2651 = vor.u32 %v2649, %v2650
      %v2652 = vshll.u32 920167782, %v2637
      %v2653 = vshrl.u32 1326507024, %v2638
      %v2654 = vor.u32 %v2652, %v2653
      %vm2655 = vcmp.lt.s32.totalorder %v2636, 1
      %vm2656 = vcmp.lt.s32.totalorder %v2636, 2
      %vm2657 = vcmp.lt.s32.totalorder %v2636, 3
      %vm2658 = vcmp.lt.s32.totalorder %v2636, 4
      %v2659 = vsel %vm2655, %v2639, %v2642
      %v2660 = vsel %vm2658, %v2648, 2102212464
      %v2661 = vsel %vm2657, %v2645, %v2660
      %v2662 = vsel %vm2656, %v2659, %v2661
      %v2663 = vsel %vm2655, %v2642, %v2645
      %v2664 = vsel %vm2658, %v2651, 920167782
      %v2665 = vsel %vm2657, %v2648, %v2664
      %v2666 = vsel %vm2656, %v2663, %v2665
      %v2667 = vsel %vm2655, %v2645, %v2648
      %v2668 = vsel %vm2658, %v2654, 1326507024
      %v2669 = vsel %vm2657, %v2651, %v2668
      %v2670 = vsel %vm2656, %v2667, %v2669
      %v2671 = vshll.u32 %v2631, 8
      %v2672 = vmul.u32.u64.compose %v2671, %v2670
      %v2673 = vextract.low.u32 %v2672
      %v2674 = vextract.high.u32 %v2672
      %v2675 = vmul.u32.u64.compose %v2671, %v2666
      %v2676 = vextract.low.u32 %v2675
      %v2677 = vextract.high.u32 %v2675
      %v2678 = vmul.u32 %v2671, %v2662
      %v2679 = vadd.s32 %v2674, %v2676
      %vm2680 = vc.u32 %v2674, %v2676
      %v2681 = vadd.s32 %v2677, 1
      %v2682 = vsel %vm2680, %v2681, %v2677
      %v2683 = vadd.s32 %v2678, %v2682
      %v2684 = vadd.s32 %v2683, 536870912
      %v2685 = vshrl.u32 %v2684, 30
      %v2686 = vshll.u32 %v2685, 30
      %v2687 = vsub.s32 %v2683, %v2686
      %vm2688 = vcmp.lt.s32.totalorder %v2687, 0
      %v2689 = vsub.s32 0, %v2687
      %v2690 = vsel %vm2688, %v2689, %v2687
      %v2691 = vclz %v2690
      %v2692 = vsub.s32 %v2691, 2
      %vm2693 = vcmp.gt.s32.totalorder 0, %v2692
      %v2694 = vsel %vm2693, 0, %v2692
      %v2695 = vsub.s32 32, %v2694
      %v2696 = vshll.u32 %v2687, %v2694
      %v2697 = vshrl.u32 %v2679, %v2695
      %v2698 = vor.u32 %v2696, %v2697
      %v2699 = vsub.s32 4294967266, %v2694
      %v2700 = vadd.s32 %v2699, 127
      %v2701 = vshll.u32 %v2700, 23
      %v2702 = vor.u32 4788187, %v2701
      %v2703 = vand.u32 2147483647, %v2702
      %v2705 = vcvt.s32.f32 %v2698
      %v2706 = vmul.f32 %v2705, %v2703
      %v2707 = vxor.u32 %v2706, 2147483648
      %v2708 = vsel %vm2625, %v2707, %v2706
      %v2709 = vsub.s32 4, %v2685
      %v2710 = vsel %vm2625, %v2709, %v2685
      %v2711 = vsel %vm2624, %v737, %v2708
      %v2712 = vsel %vm2624, 0, %v2710
      %v2713 = vcosq.f32.pop %v2711
      %v2714 = vsinq.f32.pop %v2711
      %vm2715 = vweird.f32 %v737
      %v2716 = vadd.s32 %v2712, 3
      %v2717 = vand.u32 %v2716, 3
      %vm2718 = vcmp.lt.s32.totalorder %v2717, 2
      %vm2719 = vcmp.eq.s32.totalorder %v2717, 0
      %v2720 = vxor.u32 %v2714, 2147483648
      %v2721 = vsel %vm2719, %v2713, %v2720
      %vm2722 = vcmp.eq.s32.totalorder %v2717, 2
      %v2723 = vxor.u32 %v2713, 2147483648
      %v2724 = vsel %vm2722, %v2723, %v2714
      %v2725 = vsel %vm2718, %v2721, %v2724
      %v2726 = vsel %vm2715, nan, %v2725
      %v2727 = vand.u32 2147483647, %v738
      %vm2728 = vcmp.le.f32.partialorder %v2727, 0.7853982
      %vm2729 = vcmp.lt.s32.totalorder %v738, 0
      %v2730 = vand.u32 %v738, 2139095040
      %v2731 = vshrl.u32 %v2730, 23
      %v2732 = vsub.s32 %v2731, 127
      %v2733 = vand.u32 2147483647, %v738
      %v2734 = vand.u32 %v2733, 8388607
      %v2735 = vor.u32 %v2734, 8388608
      %v2736 = vsub.s32 0, %v2735
      %v2737 = vadd.s32 %v2732, 1
      %vm2738 = vcmp.gt.s32.totalorder %v2737, 0
      %v2739 = vsel %vm2738, %v2737, 0
      %v2740 = vshrl.u32 %v2739, 5
      %v2741 = vand.u32 %v2739, 31
      %v2742 = vsub.s32 32, %v2741
      %v2743 = vshrl.u32 683565275, %v2742
      %v2744 = vshll.u32 683565275, %v2741
      %v2745 = vshrl.u32 2475754826, %v2742
      %v2746 = vor.u32 %v2744, %v2745
      %v2747 = vshll.u32 2475754826, %v2741
      %v2748 = vshrl.u32 2131351028, %v2742
      %v2749 = vor.u32 %v2747, %v2748
      %v2750 = vshll.u32 2131351028, %v2741
      %v2751 = vshrl.u32 2102212464, %v2742
      %v2752 = vor.u32 %v2750, %v2751
      %v2753 = vshll.u32 2102212464, %v2741
      %v2754 = vshrl.u32 920167782, %v2742
      %v2755 = vor.u32 %v2753, %v2754
      %v2756 = vshll.u32 920167782, %v2741
      %v2757 = vshrl.u32 1326507024, %v2742
      %v2758 = vor.u32 %v2756, %v2757
      %vm2759 = vcmp.lt.s32.totalorder %v2740, 1
      %vm2760 = vcmp.lt.s32.totalorder %v2740, 2
      %vm2761 = vcmp.lt.s32.totalorder %v2740, 3
      %vm2762 = vcmp.lt.s32.totalorder %v2740, 4
      %v2763 = vsel %vm2759, %v2743, %v2746
      %v2764 = vsel %vm2762, %v2752, 2102212464
      %v2765 = vsel %vm2761, %v2749, %v2764
      %v2766 = vsel %vm2760, %v2763, %v2765
      %v2767 = vsel %vm2759, %v2746, %v2749
      %v2768 = vsel %vm2762, %v2755, 920167782
      %v2769 = vsel %vm2761, %v2752, %v2768
      %v2770 = vsel %vm2760, %v2767, %v2769
      %v2771 = vsel %vm2759, %v2749, %v2752
      %v2772 = vsel %vm2762, %v2758, 1326507024
      %v2773 = vsel %vm2761, %v2755, %v2772
      %v2774 = vsel %vm2760, %v2771, %v2773
      %v2775 = vshll.u32 %v2735, 8
      %v2776 = vmul.u32.u64.compose %v2775, %v2774
      %v2777 = vextract.low.u32 %v2776
      %v2778 = vextract.high.u32 %v2776
      %v2779 = vmul.u32.u64.compose %v2775, %v2770
      %v2780 = vextract.low.u32 %v2779
      %v2781 = vextract.high.u32 %v2779
      %v2782 = vmul.u32 %v2775, %v2766
      %v2783 = vadd.s32 %v2778, %v2780
      %vm2784 = vc.u32 %v2778, %v2780
      %v2785 = vadd.s32 %v2781, 1
      %v2786 = vsel %vm2784, %v2785, %v2781
      %v2787 = vadd.s32 %v2782, %v2786
      %v2788 = vadd.s32 %v2787, 536870912
      %v2789 = vshrl.u32 %v2788, 30
      %v2790 = vshll.u32 %v2789, 30
      %v2791 = vsub.s32 %v2787, %v2790
      %vm2792 = vcmp.lt.s32.totalorder %v2791, 0
      %v2793 = vsub.s32 0, %v2791
      %v2794 = vsel %vm2792, %v2793, %v2791
      %v2795 = vclz %v2794
      %v2796 = vsub.s32 %v2795, 2
      %vm2797 = vcmp.gt.s32.totalorder 0, %v2796
      %v2798 = vsel %vm2797, 0, %v2796
      %v2799 = vsub.s32 32, %v2798
      %v2800 = vshll.u32 %v2791, %v2798
      %v2801 = vshrl.u32 %v2783, %v2799
      %v2802 = vor.u32 %v2800, %v2801
      %v2803 = vsub.s32 4294967266, %v2798
      %v2804 = vadd.s32 %v2803, 127
      %v2805 = vshll.u32 %v2804, 23
      %v2806 = vor.u32 4788187, %v2805
      %v2807 = vand.u32 2147483647, %v2806
      %v2809 = vcvt.s32.f32 %v2802
      %v2810 = vmul.f32 %v2809, %v2807
      %v2811 = vxor.u32 %v2810, 2147483648
      %v2812 = vsel %vm2729, %v2811, %v2810
      %v2813 = vsub.s32 4, %v2789
      %v2814 = vsel %vm2729, %v2813, %v2789
      %v2815 = vsel %vm2728, %v738, %v2812
      %v2816 = vsel %vm2728, 0, %v2814
      %v2817 = vcosq.f32.pop %v2815
      %v2818 = vsinq.f32.pop %v2815
      %vm2819 = vweird.f32 %v738
      %v2820 = vadd.s32 %v2816, 3
      %v2821 = vand.u32 %v2820, 3
      %vm2822 = vcmp.lt.s32.totalorder %v2821, 2
      %vm2823 = vcmp.eq.s32.totalorder %v2821, 0
      %v2824 = vxor.u32 %v2818, 2147483648
      %v2825 = vsel %vm2823, %v2817, %v2824
      %vm2826 = vcmp.eq.s32.totalorder %v2821, 2
      %v2827 = vxor.u32 %v2817, 2147483648
      %v2828 = vsel %vm2826, %v2827, %v2818
      %v2829 = vsel %vm2822, %v2825, %v2828
      %v2830 = vsel %vm2819, nan, %v2829
      %v2831 = vand.u32 2147483647, %v739
      %vm2832 = vcmp.le.f32.partialorder %v2831, 0.7853982
      %vm2833 = vcmp.lt.s32.totalorder %v739, 0
      %v2834 = vand.u32 %v739, 2139095040
      %v2835 = vshrl.u32 %v2834, 23
      %v2836 = vsub.s32 %v2835, 127
      %v2837 = vand.u32 2147483647, %v739
      %v2838 = vand.u32 %v2837, 8388607
      %v2839 = vor.u32 %v2838, 8388608
      %v2840 = vsub.s32 0, %v2839
      %v2841 = vadd.s32 %v2836, 1
      %vm2842 = vcmp.gt.s32.totalorder %v2841, 0
      %v2843 = vsel %vm2842, %v2841, 0
      %v2844 = vshrl.u32 %v2843, 5
      %v2845 = vand.u32 %v2843, 31
      %v2846 = vsub.s32 32, %v2845
      %v2847 = vshrl.u32 683565275, %v2846
      %v2848 = vshll.u32 683565275, %v2845
      %v2849 = vshrl.u32 2475754826, %v2846
      %v2850 = vor.u32 %v2848, %v2849
      %v2851 = vshll.u32 2475754826, %v2845
      %v2852 = vshrl.u32 2131351028, %v2846
      %v2853 = vor.u32 %v2851, %v2852
      %v2854 = vshll.u32 2131351028, %v2845
      %v2855 = vshrl.u32 2102212464, %v2846
      %v2856 = vor.u32 %v2854, %v2855
      %v2857 = vshll.u32 2102212464, %v2845
      %v2858 = vshrl.u32 920167782, %v2846
      %v2859 = vor.u32 %v2857, %v2858
      %v2860 = vshll.u32 920167782, %v2845
      %v2861 = vshrl.u32 1326507024, %v2846
      %v2862 = vor.u32 %v2860, %v2861
      %vm2863 = vcmp.lt.s32.totalorder %v2844, 1
      %vm2864 = vcmp.lt.s32.totalorder %v2844, 2
      %vm2865 = vcmp.lt.s32.totalorder %v2844, 3
      %vm2866 = vcmp.lt.s32.totalorder %v2844, 4
      %v2867 = vsel %vm2863, %v2847, %v2850
      %v2868 = vsel %vm2866, %v2856, 2102212464
      %v2869 = vsel %vm2865, %v2853, %v2868
      %v2870 = vsel %vm2864, %v2867, %v2869
      %v2871 = vsel %vm2863, %v2850, %v2853
      %v2872 = vsel %vm2866, %v2859, 920167782
      %v2873 = vsel %vm2865, %v2856, %v2872
      %v2874 = vsel %vm2864, %v2871, %v2873
      %v2875 = vsel %vm2863, %v2853, %v2856
      %v2876 = vsel %vm2866, %v2862, 1326507024
      %v2877 = vsel %vm2865, %v2859, %v2876
      %v2878 = vsel %vm2864, %v2875, %v2877
      %v2879 = vshll.u32 %v2839, 8
      %v2880 = vmul.u32.u64.compose %v2879, %v2878
      %v2881 = vextract.low.u32 %v2880
      %v2882 = vextract.high.u32 %v2880
      %v2883 = vmul.u32.u64.compose %v2879, %v2874
      %v2884 = vextract.low.u32 %v2883
      %v2885 = vextract.high.u32 %v2883
      %v2886 = vmul.u32 %v2879, %v2870
      %v2887 = vadd.s32 %v2882, %v2884
      %vm2888 = vc.u32 %v2882, %v2884
      %v2889 = vadd.s32 %v2885, 1
      %v2890 = vsel %vm2888, %v2889, %v2885
      %v2891 = vadd.s32 %v2886, %v2890
      %v2892 = vadd.s32 %v2891, 536870912
      %v2893 = vshrl.u32 %v2892, 30
      %v2894 = vshll.u32 %v2893, 30
      %v2895 = vsub.s32 %v2891, %v2894
      %vm2896 = vcmp.lt.s32.totalorder %v2895, 0
      %v2897 = vsub.s32 0, %v2895
      %v2898 = vsel %vm2896, %v2897, %v2895
      %v2899 = vclz %v2898
      %v2900 = vsub.s32 %v2899, 2
      %vm2901 = vcmp.gt.s32.totalorder 0, %v2900
      %v2902 = vsel %vm2901, 0, %v2900
      %v2903 = vsub.s32 32, %v2902
      %v2904 = vshll.u32 %v2895, %v2902
      %v2905 = vshrl.u32 %v2887, %v2903
      %v2906 = vor.u32 %v2904, %v2905
      %v2907 = vsub.s32 4294967266, %v2902
      %v2908 = vadd.s32 %v2907, 127
      %v2909 = vshll.u32 %v2908, 23
      %v2910 = vor.u32 4788187, %v2909
      %v2911 = vand.u32 2147483647, %v2910
      %v2913 = vcvt.s32.f32 %v2906
      %v2914 = vmul.f32 %v2913, %v2911
      %v2915 = vxor.u32 %v2914, 2147483648
      %v2916 = vsel %vm2833, %v2915, %v2914
      %v2917 = vsub.s32 4, %v2893
      %v2918 = vsel %vm2833, %v2917, %v2893
      %v2919 = vsel %vm2832, %v739, %v2916
      %v2920 = vsel %vm2832, 0, %v2918
      %v2921 = vcosq.f32.pop %v2919
      %v2922 = vsinq.f32.pop %v2919
      %vm2923 = vweird.f32 %v739
      %v2924 = vadd.s32 %v2920, 3
      %v2925 = vand.u32 %v2924, 3
      %vm2926 = vcmp.lt.s32.totalorder %v2925, 2
      %vm2927 = vcmp.eq.s32.totalorder %v2925, 0
      %v2928 = vxor.u32 %v2922, 2147483648
      %v2929 = vsel %vm2927, %v2921, %v2928
      %vm2930 = vcmp.eq.s32.totalorder %v2925, 2
      %v2931 = vxor.u32 %v2921, 2147483648
      %v2932 = vsel %vm2930, %v2931, %v2922
      %v2933 = vsel %vm2926, %v2929, %v2932
      %v2934 = vsel %vm2923, nan, %v2933
      %v2935 = vand.u32 2147483647, %v740
      %vm2936 = vcmp.le.f32.partialorder %v2935, 0.7853982
      %vm2937 = vcmp.lt.s32.totalorder %v740, 0
      %v2938 = vand.u32 %v740, 2139095040
      %v2939 = vshrl.u32 %v2938, 23
      %v2940 = vsub.s32 %v2939, 127
      %v2941 = vand.u32 2147483647, %v740
      %v2942 = vand.u32 %v2941, 8388607
      %v2943 = vor.u32 %v2942, 8388608
      %v2944 = vsub.s32 0, %v2943
      %v2945 = vadd.s32 %v2940, 1
      %vm2946 = vcmp.gt.s32.totalorder %v2945, 0
      %v2947 = vsel %vm2946, %v2945, 0
      %v2948 = vshrl.u32 %v2947, 5
      %v2949 = vand.u32 %v2947, 31
      %v2950 = vsub.s32 32, %v2949
      %v2951 = vshrl.u32 683565275, %v2950
      %v2952 = vshll.u32 683565275, %v2949
      %v2953 = vshrl.u32 2475754826, %v2950
      %v2954 = vor.u32 %v2952, %v2953
      %v2955 = vshll.u32 2475754826, %v2949
      %v2956 = vshrl.u32 2131351028, %v2950
      %v2957 = vor.u32 %v2955, %v2956
      %v2958 = vshll.u32 2131351028, %v2949
      %v2959 = vshrl.u32 2102212464, %v2950
      %v2960 = vor.u32 %v2958, %v2959
      %v2961 = vshll.u32 2102212464, %v2949
      %v2962 = vshrl.u32 920167782, %v2950
      %v2963 = vor.u32 %v2961, %v2962
      %v2964 = vshll.u32 920167782, %v2949
      %v2965 = vshrl.u32 1326507024, %v2950
      %v2966 = vor.u32 %v2964, %v2965
      %vm2967 = vcmp.lt.s32.totalorder %v2948, 1
      %vm2968 = vcmp.lt.s32.totalorder %v2948, 2
      %vm2969 = vcmp.lt.s32.totalorder %v2948, 3
      %vm2970 = vcmp.lt.s32.totalorder %v2948, 4
      %v2971 = vsel %vm2967, %v2951, %v2954
      %v2972 = vsel %vm2970, %v2960, 2102212464
      %v2973 = vsel %vm2969, %v2957, %v2972
      %v2974 = vsel %vm2968, %v2971, %v2973
      %v2975 = vsel %vm2967, %v2954, %v2957
      %v2976 = vsel %vm2970, %v2963, 920167782
      %v2977 = vsel %vm2969, %v2960, %v2976
      %v2978 = vsel %vm2968, %v2975, %v2977
      %v2979 = vsel %vm2967, %v2957, %v2960
      %v2980 = vsel %vm2970, %v2966, 1326507024
      %v2981 = vsel %vm2969, %v2963, %v2980
      %v2982 = vsel %vm2968, %v2979, %v2981
      %v2983 = vshll.u32 %v2943, 8
      %v2984 = vmul.u32.u64.compose %v2983, %v2982
      %v2985 = vextract.low.u32 %v2984
      %v2986 = vextract.high.u32 %v2984
      %v2987 = vmul.u32.u64.compose %v2983, %v2978
      %v2988 = vextract.low.u32 %v2987
      %v2989 = vextract.high.u32 %v2987
      %v2990 = vmul.u32 %v2983, %v2974
      %v2991 = vadd.s32 %v2986, %v2988
      %vm2992 = vc.u32 %v2986, %v2988
      %v2993 = vadd.s32 %v2989, 1
      %v2994 = vsel %vm2992, %v2993, %v2989
      %v2995 = vadd.s32 %v2990, %v2994
      %v2996 = vadd.s32 %v2995, 536870912
      %v2997 = vshrl.u32 %v2996, 30
      %v2998 = vshll.u32 %v2997, 30
      %v2999 = vsub.s32 %v2995, %v2998
      %vm3000 = vcmp.lt.s32.totalorder %v2999, 0
      %v3001 = vsub.s32 0, %v2999
      %v3002 = vsel %vm3000, %v3001, %v2999
      %v3003 = vclz %v3002
      %v3004 = vsub.s32 %v3003, 2
      %vm3005 = vcmp.gt.s32.totalorder 0, %v3004
      %v3006 = vsel %vm3005, 0, %v3004
      %v3007 = vsub.s32 32, %v3006
      %v3008 = vshll.u32 %v2999, %v3006
      %v3009 = vshrl.u32 %v2991, %v3007
      %v3010 = vor.u32 %v3008, %v3009
      %v3011 = vsub.s32 4294967266, %v3006
      %v3012 = vadd.s32 %v3011, 127
      %v3013 = vshll.u32 %v3012, 23
      %v3014 = vor.u32 4788187, %v3013
      %v3015 = vand.u32 2147483647, %v3014
      %v3017 = vcvt.s32.f32 %v3010
      %v3018 = vmul.f32 %v3017, %v3015
      %v3019 = vxor.u32 %v3018, 2147483648
      %v3020 = vsel %vm2937, %v3019, %v3018
      %v3021 = vsub.s32 4, %v2997
      %v3022 = vsel %vm2937, %v3021, %v2997
      %v3023 = vsel %vm2936, %v740, %v3020
      %v3024 = vsel %vm2936, 0, %v3022
      %v3025 = vcosq.f32.pop %v3023
      %v3026 = vsinq.f32.pop %v3023
      %vm3027 = vweird.f32 %v740
      %v3028 = vadd.s32 %v3024, 3
      %v3029 = vand.u32 %v3028, 3
      %vm3030 = vcmp.lt.s32.totalorder %v3029, 2
      %vm3031 = vcmp.eq.s32.totalorder %v3029, 0
      %v3032 = vxor.u32 %v3026, 2147483648
      %v3033 = vsel %vm3031, %v3025, %v3032
      %vm3034 = vcmp.eq.s32.totalorder %v3029, 2
      %v3035 = vxor.u32 %v3025, 2147483648
      %v3036 = vsel %vm3034, %v3035, %v3026
      %v3037 = vsel %vm3030, %v3033, %v3036
      %v3038 = vsel %vm3027, nan, %v3037
      %v3039 = vand.u32 2147483647, %v741
      %vm3040 = vcmp.le.f32.partialorder %v3039, 0.7853982
      %vm3041 = vcmp.lt.s32.totalorder %v741, 0
      %v3042 = vand.u32 %v741, 2139095040
      %v3043 = vshrl.u32 %v3042, 23
      %v3044 = vsub.s32 %v3043, 127
      %v3045 = vand.u32 2147483647, %v741
      %v3046 = vand.u32 %v3045, 8388607
      %v3047 = vor.u32 %v3046, 8388608
      %v3048 = vsub.s32 0, %v3047
      %v3049 = vadd.s32 %v3044, 1
      %vm3050 = vcmp.gt.s32.totalorder %v3049, 0
      %v3051 = vsel %vm3050, %v3049, 0
      %v3052 = vshrl.u32 %v3051, 5
      %v3053 = vand.u32 %v3051, 31
      %v3054 = vsub.s32 32, %v3053
      %v3055 = vshrl.u32 683565275, %v3054
      %v3056 = vshll.u32 683565275, %v3053
      %v3057 = vshrl.u32 2475754826, %v3054
      %v3058 = vor.u32 %v3056, %v3057
      %v3059 = vshll.u32 2475754826, %v3053
      %v3060 = vshrl.u32 2131351028, %v3054
      %v3061 = vor.u32 %v3059, %v3060
      %v3062 = vshll.u32 2131351028, %v3053
      %v3063 = vshrl.u32 2102212464, %v3054
      %v3064 = vor.u32 %v3062, %v3063
      %v3065 = vshll.u32 2102212464, %v3053
      %v3066 = vshrl.u32 920167782, %v3054
      %v3067 = vor.u32 %v3065, %v3066
      %v3068 = vshll.u32 920167782, %v3053
      %v3069 = vshrl.u32 1326507024, %v3054
      %v3070 = vor.u32 %v3068, %v3069
      %vm3071 = vcmp.lt.s32.totalorder %v3052, 1
      %vm3072 = vcmp.lt.s32.totalorder %v3052, 2
      %vm3073 = vcmp.lt.s32.totalorder %v3052, 3
      %vm3074 = vcmp.lt.s32.totalorder %v3052, 4
      %v3075 = vsel %vm3071, %v3055, %v3058
      %v3076 = vsel %vm3074, %v3064, 2102212464
      %v3077 = vsel %vm3073, %v3061, %v3076
      %v3078 = vsel %vm3072, %v3075, %v3077
      %v3079 = vsel %vm3071, %v3058, %v3061
      %v3080 = vsel %vm3074, %v3067, 920167782
      %v3081 = vsel %vm3073, %v3064, %v3080
      %v3082 = vsel %vm3072, %v3079, %v3081
      %v3083 = vsel %vm3071, %v3061, %v3064
      %v3084 = vsel %vm3074, %v3070, 1326507024
      %v3085 = vsel %vm3073, %v3067, %v3084
      %v3086 = vsel %vm3072, %v3083, %v3085
      %v3087 = vshll.u32 %v3047, 8
      %v3088 = vmul.u32.u64.compose %v3087, %v3086
      %v3089 = vextract.low.u32 %v3088
      %v3090 = vextract.high.u32 %v3088
      %v3091 = vmul.u32.u64.compose %v3087, %v3082
      %v3092 = vextract.low.u32 %v3091
      %v3093 = vextract.high.u32 %v3091
      %v3094 = vmul.u32 %v3087, %v3078
      %v3095 = vadd.s32 %v3090, %v3092
      %vm3096 = vc.u32 %v3090, %v3092
      %v3097 = vadd.s32 %v3093, 1
      %v3098 = vsel %vm3096, %v3097, %v3093
      %v3099 = vadd.s32 %v3094, %v3098
      %v3100 = vadd.s32 %v3099, 536870912
      %v3101 = vshrl.u32 %v3100, 30
      %v3102 = vshll.u32 %v3101, 30
      %v3103 = vsub.s32 %v3099, %v3102
      %vm3104 = vcmp.lt.s32.totalorder %v3103, 0
      %v3105 = vsub.s32 0, %v3103
      %v3106 = vsel %vm3104, %v3105, %v3103
      %v3107 = vclz %v3106
      %v3108 = vsub.s32 %v3107, 2
      %vm3109 = vcmp.gt.s32.totalorder 0, %v3108
      %v3110 = vsel %vm3109, 0, %v3108
      %v3111 = vsub.s32 32, %v3110
      %v3112 = vshll.u32 %v3103, %v3110
      %v3113 = vshrl.u32 %v3095, %v3111
      %v3114 = vor.u32 %v3112, %v3113
      %v3115 = vsub.s32 4294967266, %v3110
      %v3116 = vadd.s32 %v3115, 127
      %v3117 = vshll.u32 %v3116, 23
      %v3118 = vor.u32 4788187, %v3117
      %v3119 = vand.u32 2147483647, %v3118
      %v3121 = vcvt.s32.f32 %v3114
      %v3122 = vmul.f32 %v3121, %v3119
      %v3123 = vxor.u32 %v3122, 2147483648
      %v3124 = vsel %vm3041, %v3123, %v3122
      %v3125 = vsub.s32 4, %v3101
      %v3126 = vsel %vm3041, %v3125, %v3101
      %v3127 = vsel %vm3040, %v741, %v3124
      %v3128 = vsel %vm3040, 0, %v3126
      %v3129 = vcosq.f32.pop %v3127
      %v3130 = vsinq.f32.pop %v3127
      %vm3131 = vweird.f32 %v741
      %v3132 = vadd.s32 %v3128, 3
      %v3133 = vand.u32 %v3132, 3
      %vm3134 = vcmp.lt.s32.totalorder %v3133, 2
      %vm3135 = vcmp.eq.s32.totalorder %v3133, 0
      %v3136 = vxor.u32 %v3130, 2147483648
      %v3137 = vsel %vm3135, %v3129, %v3136
      %vm3138 = vcmp.eq.s32.totalorder %v3133, 2
      %v3139 = vxor.u32 %v3129, 2147483648
      %v3140 = vsel %vm3138, %v3139, %v3130
      %v3141 = vsel %vm3134, %v3137, %v3140
      %v3142 = vsel %vm3131, nan, %v3141
      %v3143 = vand.u32 2147483647, %v742
      %vm3144 = vcmp.le.f32.partialorder %v3143, 0.7853982
      %vm3145 = vcmp.lt.s32.totalorder %v742, 0
      %v3146 = vand.u32 %v742, 2139095040
      %v3147 = vshrl.u32 %v3146, 23
      %v3148 = vsub.s32 %v3147, 127
      %v3149 = vand.u32 2147483647, %v742
      %v3150 = vand.u32 %v3149, 8388607
      %v3151 = vor.u32 %v3150, 8388608
      %v3152 = vsub.s32 0, %v3151
      %v3153 = vadd.s32 %v3148, 1
      %vm3154 = vcmp.gt.s32.totalorder %v3153, 0
      %v3155 = vsel %vm3154, %v3153, 0
      %v3156 = vshrl.u32 %v3155, 5
      %v3157 = vand.u32 %v3155, 31
      %v3158 = vsub.s32 32, %v3157
      %v3159 = vshrl.u32 683565275, %v3158
      %v3160 = vshll.u32 683565275, %v3157
      %v3161 = vshrl.u32 2475754826, %v3158
      %v3162 = vor.u32 %v3160, %v3161
      %v3163 = vshll.u32 2475754826, %v3157
      %v3164 = vshrl.u32 2131351028, %v3158
      %v3165 = vor.u32 %v3163, %v3164
      %v3166 = vshll.u32 2131351028, %v3157
      %v3167 = vshrl.u32 2102212464, %v3158
      %v3168 = vor.u32 %v3166, %v3167
      %v3169 = vshll.u32 2102212464, %v3157
      %v3170 = vshrl.u32 920167782, %v3158
      %v3171 = vor.u32 %v3169, %v3170
      %v3172 = vshll.u32 920167782, %v3157
      %v3173 = vshrl.u32 1326507024, %v3158
      %v3174 = vor.u32 %v3172, %v3173
      %vm3175 = vcmp.lt.s32.totalorder %v3156, 1
      %vm3176 = vcmp.lt.s32.totalorder %v3156, 2
      %vm3177 = vcmp.lt.s32.totalorder %v3156, 3
      %vm3178 = vcmp.lt.s32.totalorder %v3156, 4
      %v3179 = vsel %vm3175, %v3159, %v3162
      %v3180 = vsel %vm3178, %v3168, 2102212464
      %v3181 = vsel %vm3177, %v3165, %v3180
      %v3182 = vsel %vm3176, %v3179, %v3181
      %v3183 = vsel %vm3175, %v3162, %v3165
      %v3184 = vsel %vm3178, %v3171, 920167782
      %v3185 = vsel %vm3177, %v3168, %v3184
      %v3186 = vsel %vm3176, %v3183, %v3185
      %v3187 = vsel %vm3175, %v3165, %v3168
      %v3188 = vsel %vm3178, %v3174, 1326507024
      %v3189 = vsel %vm3177, %v3171, %v3188
      %v3190 = vsel %vm3176, %v3187, %v3189
      %v3191 = vshll.u32 %v3151, 8
      %v3192 = vmul.u32.u64.compose %v3191, %v3190
      %v3193 = vextract.low.u32 %v3192
      %v3194 = vextract.high.u32 %v3192
      %v3195 = vmul.u32.u64.compose %v3191, %v3186
      %v3196 = vextract.low.u32 %v3195
      %v3197 = vextract.high.u32 %v3195
      %v3198 = vmul.u32 %v3191, %v3182
      %v3199 = vadd.s32 %v3194, %v3196
      %vm3200 = vc.u32 %v3194, %v3196
      %v3201 = vadd.s32 %v3197, 1
      %v3202 = vsel %vm3200, %v3201, %v3197
      %v3203 = vadd.s32 %v3198, %v3202
      %v3204 = vadd.s32 %v3203, 536870912
      %v3205 = vshrl.u32 %v3204, 30
      %v3206 = vshll.u32 %v3205, 30
      %v3207 = vsub.s32 %v3203, %v3206
      %vm3208 = vcmp.lt.s32.totalorder %v3207, 0
      %v3209 = vsub.s32 0, %v3207
      %v3210 = vsel %vm3208, %v3209, %v3207
      %v3211 = vclz %v3210
      %v3212 = vsub.s32 %v3211, 2
      %vm3213 = vcmp.gt.s32.totalorder 0, %v3212
      %v3214 = vsel %vm3213, 0, %v3212
      %v3215 = vsub.s32 32, %v3214
      %v3216 = vshll.u32 %v3207, %v3214
      %v3217 = vshrl.u32 %v3199, %v3215
      %v3218 = vor.u32 %v3216, %v3217
      %v3219 = vsub.s32 4294967266, %v3214
      %v3220 = vadd.s32 %v3219, 127
      %v3221 = vshll.u32 %v3220, 23
      %v3222 = vor.u32 4788187, %v3221
      %v3223 = vand.u32 2147483647, %v3222
      %v3225 = vcvt.s32.f32 %v3218
      %v3226 = vmul.f32 %v3225, %v3223
      %v3227 = vxor.u32 %v3226, 2147483648
      %v3228 = vsel %vm3145, %v3227, %v3226
      %v3229 = vsub.s32 4, %v3205
      %v3230 = vsel %vm3145, %v3229, %v3205
      %v3231 = vsel %vm3144, %v742, %v3228
      %v3232 = vsel %vm3144, 0, %v3230
      %v3233 = vcosq.f32.pop %v3231
      %v3234 = vsinq.f32.pop %v3231
      %vm3235 = vweird.f32 %v742
      %v3236 = vadd.s32 %v3232, 3
      %v3237 = vand.u32 %v3236, 3
      %vm3238 = vcmp.lt.s32.totalorder %v3237, 2
      %vm3239 = vcmp.eq.s32.totalorder %v3237, 0
      %v3240 = vxor.u32 %v3234, 2147483648
      %v3241 = vsel %vm3239, %v3233, %v3240
      %vm3242 = vcmp.eq.s32.totalorder %v3237, 2
      %v3243 = vxor.u32 %v3233, 2147483648
      %v3244 = vsel %vm3242, %v3243, %v3234
      %v3245 = vsel %vm3238, %v3241, %v3244
      %v3246 = vsel %vm3235, nan, %v3245
      %v3247 = vand.u32 2147483647, %v743
      %vm3248 = vcmp.le.f32.partialorder %v3247, 0.7853982
      %vm3249 = vcmp.lt.s32.totalorder %v743, 0
      %v3250 = vand.u32 %v743, 2139095040
      %v3251 = vshrl.u32 %v3250, 23
      %v3252 = vsub.s32 %v3251, 127
      %v3253 = vand.u32 2147483647, %v743
      %v3254 = vand.u32 %v3253, 8388607
      %v3255 = vor.u32 %v3254, 8388608
      %v3256 = vsub.s32 0, %v3255
      %v3257 = vadd.s32 %v3252, 1
      %vm3258 = vcmp.gt.s32.totalorder %v3257, 0
      %v3259 = vsel %vm3258, %v3257, 0
      %v3260 = vshrl.u32 %v3259, 5
      %v3261 = vand.u32 %v3259, 31
      %v3262 = vsub.s32 32, %v3261
      %v3263 = vshrl.u32 683565275, %v3262
      %v3264 = vshll.u32 683565275, %v3261
      %v3265 = vshrl.u32 2475754826, %v3262
      %v3266 = vor.u32 %v3264, %v3265
      %v3267 = vshll.u32 2475754826, %v3261
      %v3268 = vshrl.u32 2131351028, %v3262
      %v3269 = vor.u32 %v3267, %v3268
      %v3270 = vshll.u32 2131351028, %v3261
      %v3271 = vshrl.u32 2102212464, %v3262
      %v3272 = vor.u32 %v3270, %v3271
      %v3273 = vshll.u32 2102212464, %v3261
      %v3274 = vshrl.u32 920167782, %v3262
      %v3275 = vor.u32 %v3273, %v3274
      %v3276 = vshll.u32 920167782, %v3261
      %v3277 = vshrl.u32 1326507024, %v3262
      %v3278 = vor.u32 %v3276, %v3277
      %vm3279 = vcmp.lt.s32.totalorder %v3260, 1
      %vm3280 = vcmp.lt.s32.totalorder %v3260, 2
      %vm3281 = vcmp.lt.s32.totalorder %v3260, 3
      %vm3282 = vcmp.lt.s32.totalorder %v3260, 4
      %v3283 = vsel %vm3279, %v3263, %v3266
      %v3284 = vsel %vm3282, %v3272, 2102212464
      %v3285 = vsel %vm3281, %v3269, %v3284
      %v3286 = vsel %vm3280, %v3283, %v3285
      %v3287 = vsel %vm3279, %v3266, %v3269
      %v3288 = vsel %vm3282, %v3275, 920167782
      %v3289 = vsel %vm3281, %v3272, %v3288
      %v3290 = vsel %vm3280, %v3287, %v3289
      %v3291 = vsel %vm3279, %v3269, %v3272
      %v3292 = vsel %vm3282, %v3278, 1326507024
      %v3293 = vsel %vm3281, %v3275, %v3292
      %v3294 = vsel %vm3280, %v3291, %v3293
      %v3295 = vshll.u32 %v3255, 8
      %v3296 = vmul.u32.u64.compose %v3295, %v3294
      %v3297 = vextract.low.u32 %v3296
      %v3298 = vextract.high.u32 %v3296
      %v3299 = vmul.u32.u64.compose %v3295, %v3290
      %v3300 = vextract.low.u32 %v3299
      %v3301 = vextract.high.u32 %v3299
      %v3302 = vmul.u32 %v3295, %v3286
      %v3303 = vadd.s32 %v3298, %v3300
      %vm3304 = vc.u32 %v3298, %v3300
      %v3305 = vadd.s32 %v3301, 1
      %v3306 = vsel %vm3304, %v3305, %v3301
      %v3307 = vadd.s32 %v3302, %v3306
      %v3308 = vadd.s32 %v3307, 536870912
      %v3309 = vshrl.u32 %v3308, 30
      %v3310 = vshll.u32 %v3309, 30
      %v3311 = vsub.s32 %v3307, %v3310
      %vm3312 = vcmp.lt.s32.totalorder %v3311, 0
      %v3313 = vsub.s32 0, %v3311
      %v3314 = vsel %vm3312, %v3313, %v3311
      %v3315 = vclz %v3314
      %v3316 = vsub.s32 %v3315, 2
      %vm3317 = vcmp.gt.s32.totalorder 0, %v3316
      %v3318 = vsel %vm3317, 0, %v3316
      %v3319 = vsub.s32 32, %v3318
      %v3320 = vshll.u32 %v3311, %v3318
      %v3321 = vshrl.u32 %v3303, %v3319
      %v3322 = vor.u32 %v3320, %v3321
      %v3323 = vsub.s32 4294967266, %v3318
      %v3324 = vadd.s32 %v3323, 127
      %v3325 = vshll.u32 %v3324, 23
      %v3326 = vor.u32 4788187, %v3325
      %v3327 = vand.u32 2147483647, %v3326
      %v3329 = vcvt.s32.f32 %v3322
      %v3330 = vmul.f32 %v3329, %v3327
      %v3331 = vxor.u32 %v3330, 2147483648
      %v3332 = vsel %vm3249, %v3331, %v3330
      %v3333 = vsub.s32 4, %v3309
      %v3334 = vsel %vm3249, %v3333, %v3309
      %v3335 = vsel %vm3248, %v743, %v3332
      %v3336 = vsel %vm3248, 0, %v3334
      %v3337 = vcosq.f32.pop %v3335
      %v3338 = vsinq.f32.pop %v3335
      %vm3339 = vweird.f32 %v743
      %v3340 = vadd.s32 %v3336, 3
      %v3341 = vand.u32 %v3340, 3
      %vm3342 = vcmp.lt.s32.totalorder %v3341, 2
      %vm3343 = vcmp.eq.s32.totalorder %v3341, 0
      %v3344 = vxor.u32 %v3338, 2147483648
      %v3345 = vsel %vm3343, %v3337, %v3344
      %vm3346 = vcmp.eq.s32.totalorder %v3341, 2
      %v3347 = vxor.u32 %v3337, 2147483648
      %v3348 = vsel %vm3346, %v3347, %v3338
      %v3349 = vsel %vm3342, %v3345, %v3348
      %v3350 = vsel %vm3339, nan, %v3349
      %v3351 = vand.u32 2147483647, %v744
      %vm3352 = vcmp.le.f32.partialorder %v3351, 0.7853982
      %vm3353 = vcmp.lt.s32.totalorder %v744, 0
      %v3354 = vand.u32 %v744, 2139095040
      %v3355 = vshrl.u32 %v3354, 23
      %v3356 = vsub.s32 %v3355, 127
      %v3357 = vand.u32 2147483647, %v744
      %v3358 = vand.u32 %v3357, 8388607
      %v3359 = vor.u32 %v3358, 8388608
      %v3360 = vsub.s32 0, %v3359
      %v3361 = vadd.s32 %v3356, 1
      %vm3362 = vcmp.gt.s32.totalorder %v3361, 0
      %v3363 = vsel %vm3362, %v3361, 0
      %v3364 = vshrl.u32 %v3363, 5
      %v3365 = vand.u32 %v3363, 31
      %v3366 = vsub.s32 32, %v3365
      %v3367 = vshrl.u32 683565275, %v3366
      %v3368 = vshll.u32 683565275, %v3365
      %v3369 = vshrl.u32 2475754826, %v3366
      %v3370 = vor.u32 %v3368, %v3369
      %v3371 = vshll.u32 2475754826, %v3365
      %v3372 = vshrl.u32 2131351028, %v3366
      %v3373 = vor.u32 %v3371, %v3372
      %v3374 = vshll.u32 2131351028, %v3365
      %v3375 = vshrl.u32 2102212464, %v3366
      %v3376 = vor.u32 %v3374, %v3375
      %v3377 = vshll.u32 2102212464, %v3365
      %v3378 = vshrl.u32 920167782, %v3366
      %v3379 = vor.u32 %v3377, %v3378
      %v3380 = vshll.u32 920167782, %v3365
      %v3381 = vshrl.u32 1326507024, %v3366
      %v3382 = vor.u32 %v3380, %v3381
      %vm3383 = vcmp.lt.s32.totalorder %v3364, 1
      %vm3384 = vcmp.lt.s32.totalorder %v3364, 2
      %vm3385 = vcmp.lt.s32.totalorder %v3364, 3
      %vm3386 = vcmp.lt.s32.totalorder %v3364, 4
      %v3387 = vsel %vm3383, %v3367, %v3370
      %v3388 = vsel %vm3386, %v3376, 2102212464
      %v3389 = vsel %vm3385, %v3373, %v3388
      %v3390 = vsel %vm3384, %v3387, %v3389
      %v3391 = vsel %vm3383, %v3370, %v3373
      %v3392 = vsel %vm3386, %v3379, 920167782
      %v3393 = vsel %vm3385, %v3376, %v3392
      %v3394 = vsel %vm3384, %v3391, %v3393
      %v3395 = vsel %vm3383, %v3373, %v3376
      %v3396 = vsel %vm3386, %v3382, 1326507024
      %v3397 = vsel %vm3385, %v3379, %v3396
      %v3398 = vsel %vm3384, %v3395, %v3397
      %v3399 = vshll.u32 %v3359, 8
      %v3400 = vmul.u32.u64.compose %v3399, %v3398
      %v3401 = vextract.low.u32 %v3400
      %v3402 = vextract.high.u32 %v3400
      %v3403 = vmul.u32.u64.compose %v3399, %v3394
      %v3404 = vextract.low.u32 %v3403
      %v3405 = vextract.high.u32 %v3403
      %v3406 = vmul.u32 %v3399, %v3390
      %v3407 = vadd.s32 %v3402, %v3404
      %vm3408 = vc.u32 %v3402, %v3404
      %v3409 = vadd.s32 %v3405, 1
      %v3410 = vsel %vm3408, %v3409, %v3405
      %v3411 = vadd.s32 %v3406, %v3410
      %v3412 = vadd.s32 %v3411, 536870912
      %v3413 = vshrl.u32 %v3412, 30
      %v3414 = vshll.u32 %v3413, 30
      %v3415 = vsub.s32 %v3411, %v3414
      %vm3416 = vcmp.lt.s32.totalorder %v3415, 0
      %v3417 = vsub.s32 0, %v3415
      %v3418 = vsel %vm3416, %v3417, %v3415
      %v3419 = vclz %v3418
      %v3420 = vsub.s32 %v3419, 2
      %vm3421 = vcmp.gt.s32.totalorder 0, %v3420
      %v3422 = vsel %vm3421, 0, %v3420
      %v3423 = vsub.s32 32, %v3422
      %v3424 = vshll.u32 %v3415, %v3422
      %v3425 = vshrl.u32 %v3407, %v3423
      %v3426 = vor.u32 %v3424, %v3425
      %v3427 = vsub.s32 4294967266, %v3422
      %v3428 = vadd.s32 %v3427, 127
      %v3429 = vshll.u32 %v3428, 23
      %v3430 = vor.u32 4788187, %v3429
      %v3431 = vand.u32 2147483647, %v3430
      %v3433 = vcvt.s32.f32 %v3426
      %v3434 = vmul.f32 %v3433, %v3431
      %v3435 = vxor.u32 %v3434, 2147483648
      %v3436 = vsel %vm3353, %v3435, %v3434
      %v3437 = vsub.s32 4, %v3413
      %v3438 = vsel %vm3353, %v3437, %v3413
      %v3439 = vsel %vm3352, %v744, %v3436
      %v3440 = vsel %vm3352, 0, %v3438
      %v3441 = vcosq.f32.pop %v3439
      %v3442 = vsinq.f32.pop %v3439
      %vm3443 = vweird.f32 %v744
      %v3444 = vadd.s32 %v3440, 3
      %v3445 = vand.u32 %v3444, 3
      %vm3446 = vcmp.lt.s32.totalorder %v3445, 2
      %vm3447 = vcmp.eq.s32.totalorder %v3445, 0
      %v3448 = vxor.u32 %v3442, 2147483648
      %v3449 = vsel %vm3447, %v3441, %v3448
      %vm3450 = vcmp.eq.s32.totalorder %v3445, 2
      %v3451 = vxor.u32 %v3441, 2147483648
      %v3452 = vsel %vm3450, %v3451, %v3442
      %v3453 = vsel %vm3446, %v3449, %v3452
      %v3454 = vsel %vm3443, nan, %v3453
      %v3455 = vand.u32 2147483647, %v745
      %vm3456 = vcmp.le.f32.partialorder %v3455, 0.7853982
      %vm3457 = vcmp.lt.s32.totalorder %v745, 0
      %v3458 = vand.u32 %v745, 2139095040
      %v3459 = vshrl.u32 %v3458, 23
      %v3460 = vsub.s32 %v3459, 127
      %v3461 = vand.u32 2147483647, %v745
      %v3462 = vand.u32 %v3461, 8388607
      %v3463 = vor.u32 %v3462, 8388608
      %v3464 = vsub.s32 0, %v3463
      %v3465 = vadd.s32 %v3460, 1
      %vm3466 = vcmp.gt.s32.totalorder %v3465, 0
      %v3467 = vsel %vm3466, %v3465, 0
      %v3468 = vshrl.u32 %v3467, 5
      %v3469 = vand.u32 %v3467, 31
      %v3470 = vsub.s32 32, %v3469
      %v3471 = vshrl.u32 683565275, %v3470
      %v3472 = vshll.u32 683565275, %v3469
      %v3473 = vshrl.u32 2475754826, %v3470
      %v3474 = vor.u32 %v3472, %v3473
      %v3475 = vshll.u32 2475754826, %v3469
      %v3476 = vshrl.u32 2131351028, %v3470
      %v3477 = vor.u32 %v3475, %v3476
      %v3478 = vshll.u32 2131351028, %v3469
      %v3479 = vshrl.u32 2102212464, %v3470
      %v3480 = vor.u32 %v3478, %v3479
      %v3481 = vshll.u32 2102212464, %v3469
      %v3482 = vshrl.u32 920167782, %v3470
      %v3483 = vor.u32 %v3481, %v3482
      %v3484 = vshll.u32 920167782, %v3469
      %v3485 = vshrl.u32 1326507024, %v3470
      %v3486 = vor.u32 %v3484, %v3485
      %vm3487 = vcmp.lt.s32.totalorder %v3468, 1
      %vm3488 = vcmp.lt.s32.totalorder %v3468, 2
      %vm3489 = vcmp.lt.s32.totalorder %v3468, 3
      %vm3490 = vcmp.lt.s32.totalorder %v3468, 4
      %v3491 = vsel %vm3487, %v3471, %v3474
      %v3492 = vsel %vm3490, %v3480, 2102212464
      %v3493 = vsel %vm3489, %v3477, %v3492
      %v3494 = vsel %vm3488, %v3491, %v3493
      %v3495 = vsel %vm3487, %v3474, %v3477
      %v3496 = vsel %vm3490, %v3483, 920167782
      %v3497 = vsel %vm3489, %v3480, %v3496
      %v3498 = vsel %vm3488, %v3495, %v3497
      %v3499 = vsel %vm3487, %v3477, %v3480
      %v3500 = vsel %vm3490, %v3486, 1326507024
      %v3501 = vsel %vm3489, %v3483, %v3500
      %v3502 = vsel %vm3488, %v3499, %v3501
      %v3503 = vshll.u32 %v3463, 8
      %v3504 = vmul.u32.u64.compose %v3503, %v3502
      %v3505 = vextract.low.u32 %v3504
      %v3506 = vextract.high.u32 %v3504
      %v3507 = vmul.u32.u64.compose %v3503, %v3498
      %v3508 = vextract.low.u32 %v3507
      %v3509 = vextract.high.u32 %v3507
      %v3510 = vmul.u32 %v3503, %v3494
      %v3511 = vadd.s32 %v3506, %v3508
      %vm3512 = vc.u32 %v3506, %v3508
      %v3513 = vadd.s32 %v3509, 1
      %v3514 = vsel %vm3512, %v3513, %v3509
      %v3515 = vadd.s32 %v3510, %v3514
      %v3516 = vadd.s32 %v3515, 536870912
      %v3517 = vshrl.u32 %v3516, 30
      %v3518 = vshll.u32 %v3517, 30
      %v3519 = vsub.s32 %v3515, %v3518
      %vm3520 = vcmp.lt.s32.totalorder %v3519, 0
      %v3521 = vsub.s32 0, %v3519
      %v3522 = vsel %vm3520, %v3521, %v3519
      %v3523 = vclz %v3522
      %v3524 = vsub.s32 %v3523, 2
      %vm3525 = vcmp.gt.s32.totalorder 0, %v3524
      %v3526 = vsel %vm3525, 0, %v3524
      %v3527 = vsub.s32 32, %v3526
      %v3528 = vshll.u32 %v3519, %v3526
      %v3529 = vshrl.u32 %v3511, %v3527
      %v3530 = vor.u32 %v3528, %v3529
      %v3531 = vsub.s32 4294967266, %v3526
      %v3532 = vadd.s32 %v3531, 127
      %v3533 = vshll.u32 %v3532, 23
      %v3534 = vor.u32 4788187, %v3533
      %v3535 = vand.u32 2147483647, %v3534
      %v3537 = vcvt.s32.f32 %v3530
      %v3538 = vmul.f32 %v3537, %v3535
      %v3539 = vxor.u32 %v3538, 2147483648
      %v3540 = vsel %vm3457, %v3539, %v3538
      %v3541 = vsub.s32 4, %v3517
      %v3542 = vsel %vm3457, %v3541, %v3517
      %v3543 = vsel %vm3456, %v745, %v3540
      %v3544 = vsel %vm3456, 0, %v3542
      %v3545 = vcosq.f32.pop %v3543
      %v3546 = vsinq.f32.pop %v3543
      %vm3547 = vweird.f32 %v745
      %v3548 = vadd.s32 %v3544, 3
      %v3549 = vand.u32 %v3548, 3
      %vm3550 = vcmp.lt.s32.totalorder %v3549, 2
      %vm3551 = vcmp.eq.s32.totalorder %v3549, 0
      %v3552 = vxor.u32 %v3546, 2147483648
      %v3553 = vsel %vm3551, %v3545, %v3552
      %vm3554 = vcmp.eq.s32.totalorder %v3549, 2
      %v3555 = vxor.u32 %v3545, 2147483648
      %v3556 = vsel %vm3554, %v3555, %v3546
      %v3557 = vsel %vm3550, %v3553, %v3556
      %v3558 = vsel %vm3547, nan, %v3557
      %v3559 = vand.u32 2147483647, %v746
      %vm3560 = vcmp.le.f32.partialorder %v3559, 0.7853982
      %vm3561 = vcmp.lt.s32.totalorder %v746, 0
      %v3562 = vand.u32 %v746, 2139095040
      %v3563 = vshrl.u32 %v3562, 23
      %v3564 = vsub.s32 %v3563, 127
      %v3565 = vand.u32 2147483647, %v746
      %v3566 = vand.u32 %v3565, 8388607
      %v3567 = vor.u32 %v3566, 8388608
      %v3568 = vsub.s32 0, %v3567
      %v3569 = vadd.s32 %v3564, 1
      %vm3570 = vcmp.gt.s32.totalorder %v3569, 0
      %v3571 = vsel %vm3570, %v3569, 0
      %v3572 = vshrl.u32 %v3571, 5
      %v3573 = vand.u32 %v3571, 31
      %v3574 = vsub.s32 32, %v3573
      %v3575 = vshrl.u32 683565275, %v3574
      %v3576 = vshll.u32 683565275, %v3573
      %v3577 = vshrl.u32 2475754826, %v3574
      %v3578 = vor.u32 %v3576, %v3577
      %v3579 = vshll.u32 2475754826, %v3573
      %v3580 = vshrl.u32 2131351028, %v3574
      %v3581 = vor.u32 %v3579, %v3580
      %v3582 = vshll.u32 2131351028, %v3573
      %v3583 = vshrl.u32 2102212464, %v3574
      %v3584 = vor.u32 %v3582, %v3583
      %v3585 = vshll.u32 2102212464, %v3573
      %v3586 = vshrl.u32 920167782, %v3574
      %v3587 = vor.u32 %v3585, %v3586
      %v3588 = vshll.u32 920167782, %v3573
      %v3589 = vshrl.u32 1326507024, %v3574
      %v3590 = vor.u32 %v3588, %v3589
      %vm3591 = vcmp.lt.s32.totalorder %v3572, 1
      %vm3592 = vcmp.lt.s32.totalorder %v3572, 2
      %vm3593 = vcmp.lt.s32.totalorder %v3572, 3
      %vm3594 = vcmp.lt.s32.totalorder %v3572, 4
      %v3595 = vsel %vm3591, %v3575, %v3578
      %v3596 = vsel %vm3594, %v3584, 2102212464
      %v3597 = vsel %vm3593, %v3581, %v3596
      %v3598 = vsel %vm3592, %v3595, %v3597
      %v3599 = vsel %vm3591, %v3578, %v3581
      %v3600 = vsel %vm3594, %v3587, 920167782
      %v3601 = vsel %vm3593, %v3584, %v3600
      %v3602 = vsel %vm3592, %v3599, %v3601
      %v3603 = vsel %vm3591, %v3581, %v3584
      %v3604 = vsel %vm3594, %v3590, 1326507024
      %v3605 = vsel %vm3593, %v3587, %v3604
      %v3606 = vsel %vm3592, %v3603, %v3605
      %v3607 = vshll.u32 %v3567, 8
      %v3608 = vmul.u32.u64.compose %v3607, %v3606
      %v3609 = vextract.low.u32 %v3608
      %v3610 = vextract.high.u32 %v3608
      %v3611 = vmul.u32.u64.compose %v3607, %v3602
      %v3612 = vextract.low.u32 %v3611
      %v3613 = vextract.high.u32 %v3611
      %v3614 = vmul.u32 %v3607, %v3598
      %v3615 = vadd.s32 %v3610, %v3612
      %vm3616 = vc.u32 %v3610, %v3612
      %v3617 = vadd.s32 %v3613, 1
      %v3618 = vsel %vm3616, %v3617, %v3613
      %v3619 = vadd.s32 %v3614, %v3618
      %v3620 = vadd.s32 %v3619, 536870912
      %v3621 = vshrl.u32 %v3620, 30
      %v3622 = vshll.u32 %v3621, 30
      %v3623 = vsub.s32 %v3619, %v3622
      %vm3624 = vcmp.lt.s32.totalorder %v3623, 0
      %v3625 = vsub.s32 0, %v3623
      %v3626 = vsel %vm3624, %v3625, %v3623
      %v3627 = vclz %v3626
      %v3628 = vsub.s32 %v3627, 2
      %vm3629 = vcmp.gt.s32.totalorder 0, %v3628
      %v3630 = vsel %vm3629, 0, %v3628
      %v3631 = vsub.s32 32, %v3630
      %v3632 = vshll.u32 %v3623, %v3630
      %v3633 = vshrl.u32 %v3615, %v3631
      %v3634 = vor.u32 %v3632, %v3633
      %v3635 = vsub.s32 4294967266, %v3630
      %v3636 = vadd.s32 %v3635, 127
      %v3637 = vshll.u32 %v3636, 23
      %v3638 = vor.u32 4788187, %v3637
      %v3639 = vand.u32 2147483647, %v3638
      %v3641 = vcvt.s32.f32 %v3634
      %v3642 = vmul.f32 %v3641, %v3639
      %v3643 = vxor.u32 %v3642, 2147483648
      %v3644 = vsel %vm3561, %v3643, %v3642
      %v3645 = vsub.s32 4, %v3621
      %v3646 = vsel %vm3561, %v3645, %v3621
      %v3647 = vsel %vm3560, %v746, %v3644
      %v3648 = vsel %vm3560, 0, %v3646
      %v3649 = vcosq.f32.pop %v3647
      %v3650 = vsinq.f32.pop %v3647
      %vm3651 = vweird.f32 %v746
      %v3652 = vadd.s32 %v3648, 3
      %v3653 = vand.u32 %v3652, 3
      %vm3654 = vcmp.lt.s32.totalorder %v3653, 2
      %vm3655 = vcmp.eq.s32.totalorder %v3653, 0
      %v3656 = vxor.u32 %v3650, 2147483648
      %v3657 = vsel %vm3655, %v3649, %v3656
      %vm3658 = vcmp.eq.s32.totalorder %v3653, 2
      %v3659 = vxor.u32 %v3649, 2147483648
      %v3660 = vsel %vm3658, %v3659, %v3650
      %v3661 = vsel %vm3654, %v3657, %v3660
      %v3662 = vsel %vm3651, nan, %v3661
      %v3663 = vand.u32 2147483647, %v747
      %vm3664 = vcmp.le.f32.partialorder %v3663, 0.7853982
      %vm3665 = vcmp.lt.s32.totalorder %v747, 0
      %v3666 = vand.u32 %v747, 2139095040
      %v3667 = vshrl.u32 %v3666, 23
      %v3668 = vsub.s32 %v3667, 127
      %v3669 = vand.u32 2147483647, %v747
      %v3670 = vand.u32 %v3669, 8388607
      %v3671 = vor.u32 %v3670, 8388608
      %v3672 = vsub.s32 0, %v3671
      %v3673 = vadd.s32 %v3668, 1
      %vm3674 = vcmp.gt.s32.totalorder %v3673, 0
      %v3675 = vsel %vm3674, %v3673, 0
      %v3676 = vshrl.u32 %v3675, 5
      %v3677 = vand.u32 %v3675, 31
      %v3678 = vsub.s32 32, %v3677
      %v3679 = vshrl.u32 683565275, %v3678
      %v3680 = vshll.u32 683565275, %v3677
      %v3681 = vshrl.u32 2475754826, %v3678
      %v3682 = vor.u32 %v3680, %v3681
      %v3683 = vshll.u32 2475754826, %v3677
      %v3684 = vshrl.u32 2131351028, %v3678
      %v3685 = vor.u32 %v3683, %v3684
      %v3686 = vshll.u32 2131351028, %v3677
      %v3687 = vshrl.u32 2102212464, %v3678
      %v3688 = vor.u32 %v3686, %v3687
      %v3689 = vshll.u32 2102212464, %v3677
      %v3690 = vshrl.u32 920167782, %v3678
      %v3691 = vor.u32 %v3689, %v3690
      %v3692 = vshll.u32 920167782, %v3677
      %v3693 = vshrl.u32 1326507024, %v3678
      %v3694 = vor.u32 %v3692, %v3693
      %vm3695 = vcmp.lt.s32.totalorder %v3676, 1
      %vm3696 = vcmp.lt.s32.totalorder %v3676, 2
      %vm3697 = vcmp.lt.s32.totalorder %v3676, 3
      %vm3698 = vcmp.lt.s32.totalorder %v3676, 4
      %v3699 = vsel %vm3695, %v3679, %v3682
      %v3700 = vsel %vm3698, %v3688, 2102212464
      %v3701 = vsel %vm3697, %v3685, %v3700
      %v3702 = vsel %vm3696, %v3699, %v3701
      %v3703 = vsel %vm3695, %v3682, %v3685
      %v3704 = vsel %vm3698, %v3691, 920167782
      %v3705 = vsel %vm3697, %v3688, %v3704
      %v3706 = vsel %vm3696, %v3703, %v3705
      %v3707 = vsel %vm3695, %v3685, %v3688
      %v3708 = vsel %vm3698, %v3694, 1326507024
      %v3709 = vsel %vm3697, %v3691, %v3708
      %v3710 = vsel %vm3696, %v3707, %v3709
      %v3711 = vshll.u32 %v3671, 8
      %v3712 = vmul.u32.u64.compose %v3711, %v3710
      %v3713 = vextract.low.u32 %v3712
      %v3714 = vextract.high.u32 %v3712
      %v3715 = vmul.u32.u64.compose %v3711, %v3706
      %v3716 = vextract.low.u32 %v3715
      %v3717 = vextract.high.u32 %v3715
      %v3718 = vmul.u32 %v3711, %v3702
      %v3719 = vadd.s32 %v3714, %v3716
      %vm3720 = vc.u32 %v3714, %v3716
      %v3721 = vadd.s32 %v3717, 1
      %v3722 = vsel %vm3720, %v3721, %v3717
      %v3723 = vadd.s32 %v3718, %v3722
      %v3724 = vadd.s32 %v3723, 536870912
      %v3725 = vshrl.u32 %v3724, 30
      %v3726 = vshll.u32 %v3725, 30
      %v3727 = vsub.s32 %v3723, %v3726
      %vm3728 = vcmp.lt.s32.totalorder %v3727, 0
      %v3729 = vsub.s32 0, %v3727
      %v3730 = vsel %vm3728, %v3729, %v3727
      %v3731 = vclz %v3730
      %v3732 = vsub.s32 %v3731, 2
      %vm3733 = vcmp.gt.s32.totalorder 0, %v3732
      %v3734 = vsel %vm3733, 0, %v3732
      %v3735 = vsub.s32 32, %v3734
      %v3736 = vshll.u32 %v3727, %v3734
      %v3737 = vshrl.u32 %v3719, %v3735
      %v3738 = vor.u32 %v3736, %v3737
      %v3739 = vsub.s32 4294967266, %v3734
      %v3740 = vadd.s32 %v3739, 127
      %v3741 = vshll.u32 %v3740, 23
      %v3742 = vor.u32 4788187, %v3741
      %v3743 = vand.u32 2147483647, %v3742
      %v3745 = vcvt.s32.f32 %v3738
      %v3746 = vmul.f32 %v3745, %v3743
      %v3747 = vxor.u32 %v3746, 2147483648
      %v3748 = vsel %vm3665, %v3747, %v3746
      %v3749 = vsub.s32 4, %v3725
      %v3750 = vsel %vm3665, %v3749, %v3725
      %v3751 = vsel %vm3664, %v747, %v3748
      %v3752 = vsel %vm3664, 0, %v3750
      %v3753 = vcosq.f32.pop %v3751
      %v3754 = vsinq.f32.pop %v3751
      %vm3755 = vweird.f32 %v747
      %v3756 = vadd.s32 %v3752, 3
      %v3757 = vand.u32 %v3756, 3
      %vm3758 = vcmp.lt.s32.totalorder %v3757, 2
      %vm3759 = vcmp.eq.s32.totalorder %v3757, 0
      %v3760 = vxor.u32 %v3754, 2147483648
      %v3761 = vsel %vm3759, %v3753, %v3760
      %vm3762 = vcmp.eq.s32.totalorder %v3757, 2
      %v3763 = vxor.u32 %v3753, 2147483648
      %v3764 = vsel %vm3762, %v3763, %v3754
      %v3765 = vsel %vm3758, %v3761, %v3764
      %v3766 = vsel %vm3755, nan, %v3765
      %v3767 = vand.u32 2147483647, %v748
      %vm3768 = vcmp.le.f32.partialorder %v3767, 0.7853982
      %vm3769 = vcmp.lt.s32.totalorder %v748, 0
      %v3770 = vand.u32 %v748, 2139095040
      %v3771 = vshrl.u32 %v3770, 23
      %v3772 = vsub.s32 %v3771, 127
      %v3773 = vand.u32 2147483647, %v748
      %v3774 = vand.u32 %v3773, 8388607
      %v3775 = vor.u32 %v3774, 8388608
      %v3776 = vsub.s32 0, %v3775
      %v3777 = vadd.s32 %v3772, 1
      %vm3778 = vcmp.gt.s32.totalorder %v3777, 0
      %v3779 = vsel %vm3778, %v3777, 0
      %v3780 = vshrl.u32 %v3779, 5
      %v3781 = vand.u32 %v3779, 31
      %v3782 = vsub.s32 32, %v3781
      %v3783 = vshrl.u32 683565275, %v3782
      %v3784 = vshll.u32 683565275, %v3781
      %v3785 = vshrl.u32 2475754826, %v3782
      %v3786 = vor.u32 %v3784, %v3785
      %v3787 = vshll.u32 2475754826, %v3781
      %v3788 = vshrl.u32 2131351028, %v3782
      %v3789 = vor.u32 %v3787, %v3788
      %v3790 = vshll.u32 2131351028, %v3781
      %v3791 = vshrl.u32 2102212464, %v3782
      %v3792 = vor.u32 %v3790, %v3791
      %v3793 = vshll.u32 2102212464, %v3781
      %v3794 = vshrl.u32 920167782, %v3782
      %v3795 = vor.u32 %v3793, %v3794
      %v3796 = vshll.u32 920167782, %v3781
      %v3797 = vshrl.u32 1326507024, %v3782
      %v3798 = vor.u32 %v3796, %v3797
      %vm3799 = vcmp.lt.s32.totalorder %v3780, 1
      %vm3800 = vcmp.lt.s32.totalorder %v3780, 2
      %vm3801 = vcmp.lt.s32.totalorder %v3780, 3
      %vm3802 = vcmp.lt.s32.totalorder %v3780, 4
      %v3803 = vsel %vm3799, %v3783, %v3786
      %v3804 = vsel %vm3802, %v3792, 2102212464
      %v3805 = vsel %vm3801, %v3789, %v3804
      %v3806 = vsel %vm3800, %v3803, %v3805
      %v3807 = vsel %vm3799, %v3786, %v3789
      %v3808 = vsel %vm3802, %v3795, 920167782
      %v3809 = vsel %vm3801, %v3792, %v3808
      %v3810 = vsel %vm3800, %v3807, %v3809
      %v3811 = vsel %vm3799, %v3789, %v3792
      %v3812 = vsel %vm3802, %v3798, 1326507024
      %v3813 = vsel %vm3801, %v3795, %v3812
      %v3814 = vsel %vm3800, %v3811, %v3813
      %v3815 = vshll.u32 %v3775, 8
      %v3816 = vmul.u32.u64.compose %v3815, %v3814
      %v3817 = vextract.low.u32 %v3816
      %v3818 = vextract.high.u32 %v3816
      %v3819 = vmul.u32.u64.compose %v3815, %v3810
      %v3820 = vextract.low.u32 %v3819
      %v3821 = vextract.high.u32 %v3819
      %v3822 = vmul.u32 %v3815, %v3806
      %v3823 = vadd.s32 %v3818, %v3820
      %vm3824 = vc.u32 %v3818, %v3820
      %v3825 = vadd.s32 %v3821, 1
      %v3826 = vsel %vm3824, %v3825, %v3821
      %v3827 = vadd.s32 %v3822, %v3826
      %v3828 = vadd.s32 %v3827, 536870912
      %v3829 = vshrl.u32 %v3828, 30
      %v3830 = vshll.u32 %v3829, 30
      %v3831 = vsub.s32 %v3827, %v3830
      %vm3832 = vcmp.lt.s32.totalorder %v3831, 0
      %v3833 = vsub.s32 0, %v3831
      %v3834 = vsel %vm3832, %v3833, %v3831
      %v3835 = vclz %v3834
      %v3836 = vsub.s32 %v3835, 2
      %vm3837 = vcmp.gt.s32.totalorder 0, %v3836
      %v3838 = vsel %vm3837, 0, %v3836
      %v3839 = vsub.s32 32, %v3838
      %v3840 = vshll.u32 %v3831, %v3838
      %v3841 = vshrl.u32 %v3823, %v3839
      %v3842 = vor.u32 %v3840, %v3841
      %v3843 = vsub.s32 4294967266, %v3838
      %v3844 = vadd.s32 %v3843, 127
      %v3845 = vshll.u32 %v3844, 23
      %v3846 = vor.u32 4788187, %v3845
      %v3847 = vand.u32 2147483647, %v3846
      %v3849 = vcvt.s32.f32 %v3842
      %v3850 = vmul.f32 %v3849, %v3847
      %v3851 = vxor.u32 %v3850, 2147483648
      %v3852 = vsel %vm3769, %v3851, %v3850
      %v3853 = vsub.s32 4, %v3829
      %v3854 = vsel %vm3769, %v3853, %v3829
      %v3855 = vsel %vm3768, %v748, %v3852
      %v3856 = vsel %vm3768, 0, %v3854
      %v3857 = vcosq.f32.pop %v3855
      %v3858 = vsinq.f32.pop %v3855
      %vm3859 = vweird.f32 %v748
      %v3860 = vadd.s32 %v3856, 3
      %v3861 = vand.u32 %v3860, 3
      %vm3862 = vcmp.lt.s32.totalorder %v3861, 2
      %vm3863 = vcmp.eq.s32.totalorder %v3861, 0
      %v3864 = vxor.u32 %v3858, 2147483648
      %v3865 = vsel %vm3863, %v3857, %v3864
      %vm3866 = vcmp.eq.s32.totalorder %v3861, 2
      %v3867 = vxor.u32 %v3857, 2147483648
      %v3868 = vsel %vm3866, %v3867, %v3858
      %v3869 = vsel %vm3862, %v3865, %v3868
      %v3870 = vsel %vm3859, nan, %v3869
      %v3871 = vand.u32 2147483647, %v749
      %vm3872 = vcmp.le.f32.partialorder %v3871, 0.7853982
      %vm3873 = vcmp.lt.s32.totalorder %v749, 0
      %v3874 = vand.u32 %v749, 2139095040
      %v3875 = vshrl.u32 %v3874, 23
      %v3876 = vsub.s32 %v3875, 127
      %v3877 = vand.u32 2147483647, %v749
      %v3878 = vand.u32 %v3877, 8388607
      %v3879 = vor.u32 %v3878, 8388608
      %v3880 = vsub.s32 0, %v3879
      %v3881 = vadd.s32 %v3876, 1
      %vm3882 = vcmp.gt.s32.totalorder %v3881, 0
      %v3883 = vsel %vm3882, %v3881, 0
      %v3884 = vshrl.u32 %v3883, 5
      %v3885 = vand.u32 %v3883, 31
      %v3886 = vsub.s32 32, %v3885
      %v3887 = vshrl.u32 683565275, %v3886
      %v3888 = vshll.u32 683565275, %v3885
      %v3889 = vshrl.u32 2475754826, %v3886
      %v3890 = vor.u32 %v3888, %v3889
      %v3891 = vshll.u32 2475754826, %v3885
      %v3892 = vshrl.u32 2131351028, %v3886
      %v3893 = vor.u32 %v3891, %v3892
      %v3894 = vshll.u32 2131351028, %v3885
      %v3895 = vshrl.u32 2102212464, %v3886
      %v3896 = vor.u32 %v3894, %v3895
      %v3897 = vshll.u32 2102212464, %v3885
      %v3898 = vshrl.u32 920167782, %v3886
      %v3899 = vor.u32 %v3897, %v3898
      %v3900 = vshll.u32 920167782, %v3885
      %v3901 = vshrl.u32 1326507024, %v3886
      %v3902 = vor.u32 %v3900, %v3901
      %vm3903 = vcmp.lt.s32.totalorder %v3884, 1
      %vm3904 = vcmp.lt.s32.totalorder %v3884, 2
      %vm3905 = vcmp.lt.s32.totalorder %v3884, 3
      %vm3906 = vcmp.lt.s32.totalorder %v3884, 4
      %v3907 = vsel %vm3903, %v3887, %v3890
      %v3908 = vsel %vm3906, %v3896, 2102212464
      %v3909 = vsel %vm3905, %v3893, %v3908
      %v3910 = vsel %vm3904, %v3907, %v3909
      %v3911 = vsel %vm3903, %v3890, %v3893
      %v3912 = vsel %vm3906, %v3899, 920167782
      %v3913 = vsel %vm3905, %v3896, %v3912
      %v3914 = vsel %vm3904, %v3911, %v3913
      %v3915 = vsel %vm3903, %v3893, %v3896
      %v3916 = vsel %vm3906, %v3902, 1326507024
      %v3917 = vsel %vm3905, %v3899, %v3916
      %v3918 = vsel %vm3904, %v3915, %v3917
      %v3919 = vshll.u32 %v3879, 8
      %v3920 = vmul.u32.u64.compose %v3919, %v3918
      %v3921 = vextract.low.u32 %v3920
      %v3922 = vextract.high.u32 %v3920
      %v3923 = vmul.u32.u64.compose %v3919, %v3914
      %v3924 = vextract.low.u32 %v3923
      %v3925 = vextract.high.u32 %v3923
      %v3926 = vmul.u32 %v3919, %v3910
      %v3927 = vadd.s32 %v3922, %v3924
      %vm3928 = vc.u32 %v3922, %v3924
      %v3929 = vadd.s32 %v3925, 1
      %v3930 = vsel %vm3928, %v3929, %v3925
      %v3931 = vadd.s32 %v3926, %v3930
      %v3932 = vadd.s32 %v3931, 536870912
      %v3933 = vshrl.u32 %v3932, 30
      %v3934 = vshll.u32 %v3933, 30
      %v3935 = vsub.s32 %v3931, %v3934
      %vm3936 = vcmp.lt.s32.totalorder %v3935, 0
      %v3937 = vsub.s32 0, %v3935
      %v3938 = vsel %vm3936, %v3937, %v3935
      %v3939 = vclz %v3938
      %v3940 = vsub.s32 %v3939, 2
      %vm3941 = vcmp.gt.s32.totalorder 0, %v3940
      %v3942 = vsel %vm3941, 0, %v3940
      %v3943 = vsub.s32 32, %v3942
      %v3944 = vshll.u32 %v3935, %v3942
      %v3945 = vshrl.u32 %v3927, %v3943
      %v3946 = vor.u32 %v3944, %v3945
      %v3947 = vsub.s32 4294967266, %v3942
      %v3948 = vadd.s32 %v3947, 127
      %v3949 = vshll.u32 %v3948, 23
      %v3950 = vor.u32 4788187, %v3949
      %v3951 = vand.u32 2147483647, %v3950
      %v3953 = vcvt.s32.f32 %v3946
      %v3954 = vmul.f32 %v3953, %v3951
      %v3955 = vxor.u32 %v3954, 2147483648
      %v3956 = vsel %vm3873, %v3955, %v3954
      %v3957 = vsub.s32 4, %v3933
      %v3958 = vsel %vm3873, %v3957, %v3933
      %v3959 = vsel %vm3872, %v749, %v3956
      %v3960 = vsel %vm3872, 0, %v3958
      %v3961 = vcosq.f32.pop %v3959
      %v3962 = vsinq.f32.pop %v3959
      %vm3963 = vweird.f32 %v749
      %v3964 = vadd.s32 %v3960, 3
      %v3965 = vand.u32 %v3964, 3
      %vm3966 = vcmp.lt.s32.totalorder %v3965, 2
      %vm3967 = vcmp.eq.s32.totalorder %v3965, 0
      %v3968 = vxor.u32 %v3962, 2147483648
      %v3969 = vsel %vm3967, %v3961, %v3968
      %vm3970 = vcmp.eq.s32.totalorder %v3965, 2
      %v3971 = vxor.u32 %v3961, 2147483648
      %v3972 = vsel %vm3970, %v3971, %v3962
      %v3973 = vsel %vm3966, %v3969, %v3972
      %v3974 = vsel %vm3963, nan, %v3973
      %v3975 = vand.u32 2147483647, %v750
      %vm3976 = vcmp.le.f32.partialorder %v3975, 0.7853982
      %vm3977 = vcmp.lt.s32.totalorder %v750, 0
      %v3978 = vand.u32 %v750, 2139095040
      %v3979 = vshrl.u32 %v3978, 23
      %v3980 = vsub.s32 %v3979, 127
      %v3981 = vand.u32 2147483647, %v750
      %v3982 = vand.u32 %v3981, 8388607
      %v3983 = vor.u32 %v3982, 8388608
      %v3984 = vsub.s32 0, %v3983
      %v3985 = vadd.s32 %v3980, 1
      %vm3986 = vcmp.gt.s32.totalorder %v3985, 0
      %v3987 = vsel %vm3986, %v3985, 0
      %v3988 = vshrl.u32 %v3987, 5
      %v3989 = vand.u32 %v3987, 31
      %v3990 = vsub.s32 32, %v3989
      %v3991 = vshrl.u32 683565275, %v3990
      %v3992 = vshll.u32 683565275, %v3989
      %v3993 = vshrl.u32 2475754826, %v3990
      %v3994 = vor.u32 %v3992, %v3993
      %v3995 = vshll.u32 2475754826, %v3989
      %v3996 = vshrl.u32 2131351028, %v3990
      %v3997 = vor.u32 %v3995, %v3996
      %v3998 = vshll.u32 2131351028, %v3989
      %v3999 = vshrl.u32 2102212464, %v3990
      %v4000 = vor.u32 %v3998, %v3999
      %v4001 = vshll.u32 2102212464, %v3989
      %v4002 = vshrl.u32 920167782, %v3990
      %v4003 = vor.u32 %v4001, %v4002
      %v4004 = vshll.u32 920167782, %v3989
      %v4005 = vshrl.u32 1326507024, %v3990
      %v4006 = vor.u32 %v4004, %v4005
      %vm4007 = vcmp.lt.s32.totalorder %v3988, 1
      %vm4008 = vcmp.lt.s32.totalorder %v3988, 2
      %vm4009 = vcmp.lt.s32.totalorder %v3988, 3
      %vm4010 = vcmp.lt.s32.totalorder %v3988, 4
      %v4011 = vsel %vm4007, %v3991, %v3994
      %v4012 = vsel %vm4010, %v4000, 2102212464
      %v4013 = vsel %vm4009, %v3997, %v4012
      %v4014 = vsel %vm4008, %v4011, %v4013
      %v4015 = vsel %vm4007, %v3994, %v3997
      %v4016 = vsel %vm4010, %v4003, 920167782
      %v4017 = vsel %vm4009, %v4000, %v4016
      %v4018 = vsel %vm4008, %v4015, %v4017
      %v4019 = vsel %vm4007, %v3997, %v4000
      %v4020 = vsel %vm4010, %v4006, 1326507024
      %v4021 = vsel %vm4009, %v4003, %v4020
      %v4022 = vsel %vm4008, %v4019, %v4021
      %v4023 = vshll.u32 %v3983, 8
      %v4024 = vmul.u32.u64.compose %v4023, %v4022
      %v4025 = vextract.low.u32 %v4024
      %v4026 = vextract.high.u32 %v4024
      %v4027 = vmul.u32.u64.compose %v4023, %v4018
      %v4028 = vextract.low.u32 %v4027
      %v4029 = vextract.high.u32 %v4027
      %v4030 = vmul.u32 %v4023, %v4014
      %v4031 = vadd.s32 %v4026, %v4028
      %vm4032 = vc.u32 %v4026, %v4028
      %v4033 = vadd.s32 %v4029, 1
      %v4034 = vsel %vm4032, %v4033, %v4029
      %v4035 = vadd.s32 %v4030, %v4034
      %v4036 = vadd.s32 %v4035, 536870912
      %v4037 = vshrl.u32 %v4036, 30
      %v4038 = vshll.u32 %v4037, 30
      %v4039 = vsub.s32 %v4035, %v4038
      %vm4040 = vcmp.lt.s32.totalorder %v4039, 0
      %v4041 = vsub.s32 0, %v4039
      %v4042 = vsel %vm4040, %v4041, %v4039
      %v4043 = vclz %v4042
      %v4044 = vsub.s32 %v4043, 2
      %vm4045 = vcmp.gt.s32.totalorder 0, %v4044
      %v4046 = vsel %vm4045, 0, %v4044
      %v4047 = vsub.s32 32, %v4046
      %v4048 = vshll.u32 %v4039, %v4046
      %v4049 = vshrl.u32 %v4031, %v4047
      %v4050 = vor.u32 %v4048, %v4049
      %v4051 = vsub.s32 4294967266, %v4046
      %v4052 = vadd.s32 %v4051, 127
      %v4053 = vshll.u32 %v4052, 23
      %v4054 = vor.u32 4788187, %v4053
      %v4055 = vand.u32 2147483647, %v4054
      %v4057 = vcvt.s32.f32 %v4050
      %v4058 = vmul.f32 %v4057, %v4055
      %v4059 = vxor.u32 %v4058, 2147483648
      %v4060 = vsel %vm3977, %v4059, %v4058
      %v4061 = vsub.s32 4, %v4037
      %v4062 = vsel %vm3977, %v4061, %v4037
      %v4063 = vsel %vm3976, %v750, %v4060
      %v4064 = vsel %vm3976, 0, %v4062
      %v4065 = vcosq.f32.pop %v4063
      %v4066 = vsinq.f32.pop %v4063
      %vm4067 = vweird.f32 %v750
      %v4068 = vadd.s32 %v4064, 3
      %v4069 = vand.u32 %v4068, 3
      %vm4070 = vcmp.lt.s32.totalorder %v4069, 2
      %vm4071 = vcmp.eq.s32.totalorder %v4069, 0
      %v4072 = vxor.u32 %v4066, 2147483648
      %v4073 = vsel %vm4071, %v4065, %v4072
      %vm4074 = vcmp.eq.s32.totalorder %v4069, 2
      %v4075 = vxor.u32 %v4065, 2147483648
      %v4076 = vsel %vm4074, %v4075, %v4066
      %v4077 = vsel %vm4070, %v4073, %v4076
      %v4078 = vsel %vm4067, nan, %v4077
      %4079 = vst [vmem:[%s174] sm:$0xff] %v854
      %4080 = vst.msk [vmem:[%s174 + $0x8] sm:$0xff] %vm595, %v958
      %4081 = vst [vmem:[%s174 + $0x10] sm:$0xff] %v1062
      %4082 = vst.msk [vmem:[%s174 + $0x18] sm:$0xff] %vm595, %v1166
      %4083 = vst [vmem:[%s174 + $0x20] sm:$0xff] %v1270
      %4084 = vst.msk [vmem:[%s174 + $0x28] sm:$0xff] %vm595, %v1374
      %4085 = vst [vmem:[%s174 + $0x30] sm:$0xff] %v1478
      %4086 = vst.msk [vmem:[%s174 + $0x38] sm:$0xff] %vm595, %v1582
      %4087 = vst [vmem:[%s174 + $0x40] sm:$0xff] %v1686
      %4088 = vst.msk [vmem:[%s174 + $0x48] sm:$0xff] %vm595, %v1790
      %4089 = vst [vmem:[%s174 + $0x50] sm:$0xff] %v1894
      %4090 = vst.msk [vmem:[%s174 + $0x58] sm:$0xff] %vm595, %v1998
      %4091 = vst [vmem:[%s174 + $0x60] sm:$0xff] %v2102
      %4092 = vst.msk [vmem:[%s174 + $0x68] sm:$0xff] %vm595, %v2206
      %4093 = vst [vmem:[%s174 + $0x70] sm:$0xff] %v2310
      %4094 = vst.msk [vmem:[%s174 + $0x78] sm:$0xff] %vm595, %v2414
      %4095 = vst [vmem:[%s174 + $0x80] sm:$0xff] %v2518
      %4096 = vst.msk [vmem:[%s174 + $0x88] sm:$0xff] %vm595, %v2622
      %4097 = vst [vmem:[%s174 + $0x90] sm:$0xff] %v2726
      %4098 = vst.msk [vmem:[%s174 + $0x98] sm:$0xff] %vm595, %v2830
      %4099 = vst [vmem:[%s174 + $0xa0] sm:$0xff] %v2934
      %4100 = vst.msk [vmem:[%s174 + $0xa8] sm:$0xff] %vm595, %v3038
      %4101 = vst [vmem:[%s174 + $0xb0] sm:$0xff] %v3142
      %4102 = vst.msk [vmem:[%s174 + $0xb8] sm:$0xff] %vm595, %v3246
      %4103 = vst [vmem:[%s174 + $0xc0] sm:$0xff] %v3350
      %4104 = vst.msk [vmem:[%s174 + $0xc8] sm:$0xff] %vm595, %v3454
      %4105 = vst [vmem:[%s174 + $0xd0] sm:$0xff] %v3558
      %4106 = vst.msk [vmem:[%s174 + $0xd8] sm:$0xff] %vm595, %v3662
      %4107 = vst [vmem:[%s174 + $0xe0] sm:$0xff] %v3766
      %4108 = vst.msk [vmem:[%s174 + $0xe8] sm:$0xff] %vm595, %v3870
      %4109 = vst [vmem:[%s174 + $0xf0] sm:$0xff] %v3974
      %4110 = vst.msk [vmem:[%s174 + $0xf8] sm:$0xff] %vm595, %v4078
      %s4111 = smul.u32 16, %s14
      %p4112 = scmp.lt.s32.totalorder %s4111, 63
      %s4113 = scalar_select %p4112, %s4111, 63
      %s4114 = smul.addr %s4113, 2
      %s4115 = smul.addr %s4114, 8
      %s4116 = scalar_lea.vmem %s3, %s4115
      // Predicated region
      $region33: #{tpu_custom_call.1} parent=31 // pred_check
        %p4117 = pneg %p100
      $region34: #{tpu_custom_call.1} parent=31 // pred_check_branch
        %4119 = sbr.rel (%p4117) target = $region36
      $region35: #{tpu_custom_call.1} parent=31 // pred_region
        %s4120 = smul.u32 16, %s14
      $region36: #{tpu_custom_call.1} parent=31 // pred_fallthru
        _
    $region32: #{tpu_custom_call.1} parent=5 // pred_fallthru
      _
    %p4121 = scmp.le.s32.totalorder 2, %s9
    // Predicated region
    $region37: #{tpu_custom_call.1} parent=5 // pred_check
      %p4122 = pneg %p4121
    $region38: #{tpu_custom_call.1} parent=5 // pred_check_branch
      %4124 = sbr.rel (%p4122) target = $region40
    $region39: #{tpu_custom_call.1} parent=5 // pred_region
      %s4125 = ssub.s32 %s9, 2
      // Predicated region
      $region41: #{tpu_custom_call.1} parent=39 // pred_check
        %p4126 = pneg %p106
      $region42: #{tpu_custom_call.1} parent=39 // pred_check_branch
        %4128 = sbr.rel (%p4126) target = $region44
      $region43: #{tpu_custom_call.1} parent=39 // pred_region
        %s4129 = smul.u32 16, %s15
        %p4130 = scmp.lt.s32.totalorder %s4129, 63
        %s4131 = scalar_select %p4130, %s4129, 63
        %s4132 = smul.addr %s4131, 2
        %s4133 = smul.addr %s4132, 8
        %s4134 = scalar_lea.vmem %s3, %s4133
      $region44: #{tpu_custom_call.1} parent=39 // pred_fallthru
        _
    $region40: #{tpu_custom_call.1} parent=5 // pred_fallthru
      _
  $region6: #{tpu_custom_call.1} parent=0 // loop_footer
    %s13 = sadd.s32 1, %s9
  $region7: #{tpu_custom_call.1} parent=0 // loop_footer_branch
    %8 = sbr.rel target = $region3
  $region8: #{tpu_custom_call.1} parent=0 // loop_exit
    _

</llo_original>
